<compile_context>
chip_gen: v5e
topology: v5e:2x2
jax: 0.10.0
libtpu: 0.0.40
codegen_flags: <defaults>
</compile_context>

<pallas_src>
import functools

import jax
import jax.numpy as jnp
from jax.experimental import pallas as pl
from jax.experimental.pallas import tpu as pltpu

C_IN = 448        # RegressionMap c_in
FEAT_CLS = 1792   # ClsHead in_features
NUM_CLS = 2
BN_EPS = 1e-5


# ------------------------------ fused kernel ------------------------------- #

def _regression_map_kernel(x_ref, dw1_ref, pw1_ref, b1_ref, dw2_ref, pw2_ref,
                           bn2_ref, out_ref, acc_ref, *, Nb, H, W, C, tap_dtype):
    """Fused RegressionMap forward for one batch block (Nb images)."""
    f32 = jnp.float32

    # Hoisted W-axis (sublane) halo masks from a tiny (1,1,W,1) iota; shared by
    # both depthwise convs (JAX does not CSE broadcast/iota).
    w_pos = jax.lax.broadcasted_iota(jnp.int32, (1, 1, W, 1), 2)
    mask_l = (w_pos >= 1).astype(tap_dtype)        # tap coming from w-1 is valid
    mask_r = (w_pos < (W - 1)).astype(tap_dtype)   # tap coming from w+1 is valid

    def dw3x3_into(v, wk):
        """acc_ref <- depthwise 3x3 (stride 1, zero pad) of v [Nb,H,W,C] (f32)."""
        w = wk.astype(tap_dtype)                   # [3, 3, C] taps
        vc = v.astype(tap_dtype)
        # W (sublane) shifts: XLU roll in f32, then one cast + one mask each,
        # hoisted out of the dy loop and reused by all three kernel rows.
        vl = pltpu.roll(v, shift=1, axis=2).astype(tap_dtype) * mask_l      # x[.., w-1, :]
        vr = pltpu.roll(v, shift=W - 1, axis=2).astype(tap_dtype) * mask_r  # x[.., w+1, :]
        # dy == 0 taps: full write (no zero-row concatenate copies).
        acc_ref[...] = vl * w[1, 0] + vc * w[1, 1] + vr * w[1, 2]
        if H > 1:
            # dy == -1: output rows 1..H-1 read input rows 0..H-2 (x[h-1]*k[0,:]).
            acc_ref[:, 1:] += (vl[:, :H - 1] * w[0, 0] + vc[:, :H - 1] * w[0, 1]
                               + vr[:, :H - 1] * w[0, 2])
            # dy == +1: output rows 0..H-2 read input rows 1..H-1 (x[h+1]*k[2,:]).
            acc_ref[:, :H - 1] += (vl[:, 1:] * w[2, 0] + vc[:, 1:] * w[2, 1]
                                   + vr[:, 1:] * w[2, 2])

    # ---- sep_conv1: depthwise 3x3 ------------------------------------------
    dw3x3_into(x_ref[...].astype(f32), dw1_ref[...])

    # ---- sep_conv1: pointwise 1x1 on the MXU (BN1 scale pre-folded) + shift + ReLU
    x1 = acc_ref[...].reshape(Nb * H * W, C).astype(jnp.bfloat16)
    y = jnp.dot(x1, pw1_ref[...], preferred_element_type=f32)    # [Nb*H*W, C] f32
    y = jnp.maximum(y + b1_ref[...], 0.0).reshape(Nb, H, W, C)

    # ---- sep_conv2: depthwise 3x3 ------------------------------------------
    dw3x3_into(y, dw2_ref[...])

    # ---- sep_conv2: pointwise C->1 as VPU multiply + lane reduce (BN2 scale folded)
    x2 = acc_ref[...].reshape(Nb, H * W, C)
    m = jnp.sum(x2 * pw2_ref[...].astype(tap_dtype), axis=-1, dtype=f32)   # [Nb, H*W]
    out_ref[:, 0, :] = m + bn2_ref[0]              # lane-dense (H*W-wide) store


def _tap_dtype():
    """bf16 tap math on chips with a bf16 VPU (v6e/v7x); f32 on v5e/v4."""
    try:
        kind = jax.devices()[0].device_kind.lower()
    except Exception:
        return jnp.float32
    return jnp.bfloat16 if ("v6" in kind or "v7" in kind) else jnp.float32


def _choose_batch_block(N, H, W, C):
    """Largest divisor of N whose per-step working set fits a safe VMEM budget."""
    def est(nb):   # rough bound: 2x double-buffered bf16 input block + ~5 f32 slabs
        return nb * H * W * C * (2 * 2 + 5 * 4)
    budget = 24 * 1024 * 1024   # headroom under v7x's 64 MiB physical VMEM
    nb = 1
    for cand in range(1, N + 1):
        if N % cand == 0 and est(cand) <= budget:
            nb = cand
    # Prefer >= 2 grid steps (keeps both v7x TensorCores fed) once each step's
    # matmul already has >= 256 rows.
    if N // nb == 1 and nb % 2 == 0 and (nb // 2) * H * W >= 256:
        nb //= 2
    return nb


def regression_map(feature_map_nchw, p):
    # NCHW -> NHWC so the 448 channels sit on the 128-lane axis; cast to bf16 to
    # halve the activation DMA bytes.  allow_input_fusion lets XLA fuse this
    # relayout into the pallas_call operand instead of an HBM round-trip.
    # TODO(synk): ideally the backbone emits NHWC bf16 feature maps directly.
    x = jnp.transpose(feature_map_nchw, (0, 2, 3, 1)).astype(jnp.bfloat16)
    N, H, W, C = x.shape
    nb = _choose_batch_block(N, H, W, C)
    tap_dtype = _tap_dtype()
    kern = functools.partial(_regression_map_kernel, Nb=nb, H=H, W=W, C=C,
                             tap_dtype=tap_dtype)
    out = pl.pallas_call(
        kern,
        out_shape=jax.ShapeDtypeStruct((N, 1, H * W), jnp.float32),
        grid=(N // nb,),
        in_specs=[
            pl.BlockSpec((nb, H, W, C), lambda n: (n, 0, 0, 0)),   # activations (bf16)
            pl.BlockSpec((3, 3, C), lambda n: (0, 0, 0)),          # dw1 (resident)
            pl.BlockSpec((C, C), lambda n: (0, 0)),                # pw1*bn1_scale (bf16)
            pl.BlockSpec((1, C), lambda n: (0, 0)),                # bn1 shift
            pl.BlockSpec((3, 3, C), lambda n: (0, 0, 0)),          # dw2 (resident)
            pl.BlockSpec((1, C), lambda n: (0, 0)),                # pw2*bn2_scale row
            pl.BlockSpec(memory_space=pltpu.MemorySpace.SMEM),     # bn2 shift scalar
        ],
        out_specs=pl.BlockSpec((nb, 1, H * W), lambda n: (n, 0, 0)),
        scratch_shapes=[pltpu.VMEM((nb, H, W, C), tap_dtype)],     # dw accumulator
        compiler_params=pltpu.CompilerParams(
            dimension_semantics=("parallel",),        # shard batch blocks over TCs
            vmem_limit_bytes=48 * 1024 * 1024,        # leave headroom on v7x (64 MiB)
            allow_input_fusion=[True, False, False, False, False, False, False]),
    )(x, p["dw1"], p["pw1"], p["bn1_shift"], p["dw2"], p["pw2"], p["bn2_shift"])
    return out.reshape(N, 1, H, W)


def cls_head(feature_cls, p):
    # flatten(start_dim=1); Dropout(p=0.4) is identity in eval/inference mode.
    # TODO(synk): train-mode dropout (scaled Bernoulli mask) not applied here.
    # The [N,1792]@[1792,2] GEMM is ~7K FLOPs with a 2-lane output; a Pallas
    # dispatch costs more than the op, so it is left to XLA.
    x = feature_cls.reshape(feature_cls.shape[0], -1).astype(jnp.float32)
    return jnp.dot(x, p["fc_w"], preferred_element_type=jnp.float32) + p["fc_b"]


# --------------------------- parameter construction ------------------------ #

def _fold_bn(gamma, beta, mean, var):
    scale = gamma / jnp.sqrt(var + BN_EPS)
    shift = beta - mean * scale
    return scale, shift


def init_params(key):
    ks = jax.random.split(key, 10)
    p = {}
    # TODO(synk): real PyTorch checkpoint weights need permuting when loaded:
    #   depthwise [C,1,3,3] -> [3,3,C]; pointwise [C_out,C_in,1,1] -> [C_in,C_out];
    #   and the real bn2 running stats must be folded (identity BN2 used here).
    dw1 = 0.05 * jax.random.normal(ks[0], (3, 3, C_IN), jnp.float32)
    pw1 = 0.05 * jax.random.normal(ks[1], (C_IN, C_IN), jnp.float32)
    # bn1 (eval-mode): scale folded into pw1 columns (f32 fold, then bf16 for MXU),
    # shift kept as a per-channel bias added after the matmul.
    g1 = 1.0 + 0.01 * jax.random.normal(ks[2], (C_IN,), jnp.float32)
    b1 = 0.01 * jax.random.normal(ks[3], (C_IN,), jnp.float32)
    m1 = 0.01 * jax.random.normal(ks[4], (C_IN,), jnp.float32)
    v1 = 1.0 + 0.01 * jax.random.uniform(ks[5], (C_IN,), jnp.float32)
    s1, sh1 = _fold_bn(g1, b1, m1, v1)
    p["dw1"] = dw1
    p["pw1"] = (pw1 * s1[None, :]).astype(jnp.bfloat16)
    p["bn1_shift"] = sh1.reshape(1, C_IN)
    # sep_conv2: depthwise 3x3 [3,3,C]; pointwise C->1 as a [1,C] row with the
    # (eval-mode) bn2 scale folded in; bn2 shift is a single SMEM scalar.
    dw2 = 0.05 * jax.random.normal(ks[6], (3, 3, C_IN), jnp.float32)
    pw2 = 0.05 * jax.random.normal(ks[7], (1, C_IN), jnp.float32)
    s2, sh2 = _fold_bn(jnp.ones((1,), jnp.float32), jnp.zeros((1,), jnp.float32),
                       jnp.zeros((1,), jnp.float32), jnp.ones((1,), jnp.float32))
    p["dw2"] = dw2
    p["pw2"] = pw2 * s2
    p["bn2_shift"] = sh2.astype(jnp.float32)            # shape (1,), lives in SMEM
    # ClsHead fc: Linear(1792 -> 2) with bias (stored transposed: [1792, 2]).
    p["fc_w"] = 0.02 * jax.random.normal(ks[8], (FEAT_CLS, NUM_CLS), jnp.float32)
    p["fc_b"] = 0.02 * jax.random.normal(ks[9], (NUM_CLS,), jnp.float32)
    return p


# ------------------------------ forward pass ------------------------------- #

@jax.jit
def detector_forward(feature_map, feature_cls, params):
    """Equivalent of Detector.forward after the EfficientNet backbone."""
    predict_map = regression_map(feature_map, params)
    predict = cls_head(feature_cls, params)
    return predict, predict_map, feature_cls


# ---------------------------------- main ----------------------------------- #

if __name__ == "__main__":
    key = jax.random.PRNGKey(0)
    k_fm, k_fc, k_p = jax.random.split(key, 3)

    N, H, W = 2, 8, 8  # small spatial size; channel dims fixed by the module
    feature_map = jax.random.normal(k_fm, (N, C_IN, H, W), jnp.float32)   # NCHW
    feature_cls = jax.random.normal(k_fc, (N, FEAT_CLS), jnp.float32)

    params = init_params(k_p)

    predict, predict_map, feat_out = detector_forward(
        feature_map, feature_cls, params)
    jax.block_until_ready((predict, predict_map, feat_out))

    assert predict.shape == (N, NUM_CLS)
    assert predict_map.shape == (N, 1, H, W)
    assert feat_out.shape == (N, FEAT_CLS)
    print("KERNEL_OK")
</pallas_src>

<mosaic_0001>
module attributes {stable_mosaic.version = 11 : i64} {
  func.func @_regression_map_kernel(%arg0: i32, %arg1: memref<2x8x8x448xbf16, #tpu.memory_space<vmem>>, %arg2: memref<3x3x448xf32, #tpu.memory_space<vmem>>, %arg3: memref<448x448xbf16, #tpu.memory_space<vmem>>, %arg4: memref<1x448xf32, #tpu.memory_space<vmem>>, %arg5: memref<3x3x448xf32, #tpu.memory_space<vmem>>, %arg6: memref<1x448xf32, #tpu.memory_space<vmem>>, %arg7: memref<1xf32, #tpu.memory_space<smem>>, %arg8: memref<2x1x64xf32, #tpu.memory_space<vmem>>, %arg9: memref<2x8x8x448xf32, #tpu.memory_space<vmem>>) attributes {dimension_semantics = [#tpu.dimension_semantics<parallel>], iteration_bounds = array<i64: 1>, scalar_prefetch = 0 : i64, scratch_operands = 1 : i64, tpu.core_type = #tpu.core_type<tc>, window_params = [{transform_indices = @transform_0, window_bounds = array<i64: 2, 8, 8, 448>}, {pipeline_mode = #tpu.pipeline_mode<synchronous>, transform_indices = @transform_1, window_bounds = array<i64: 3, 3, 448>}, {pipeline_mode = #tpu.pipeline_mode<synchronous>, transform_indices = @transform_2, window_bounds = array<i64: 448, 448>}, {pipeline_mode = #tpu.pipeline_mode<synchronous>, transform_indices = @transform_3, window_bounds = array<i64: 1, 448>}, {pipeline_mode = #tpu.pipeline_mode<synchronous>, transform_indices = @transform_4, window_bounds = array<i64: 3, 3, 448>}, {pipeline_mode = #tpu.pipeline_mode<synchronous>, transform_indices = @transform_5, window_bounds = array<i64: 1, 448>}, {transform_indices = @transform_6, window_bounds = array<i64: 1>}, {transform_indices = @transform_7, window_bounds = array<i64: 2, 1, 64>}]} {
    %0 = tpu.iota {dimensions = array<i32: 2>} : vector<1x1x8x1xi32>
    %c1_i32 = arith.constant 1 : i32
    %1 = vector.broadcast %c1_i32 : i32 to vector<1x1x8x1xi32>
    %2 = arith.cmpi sge, %0, %1 : vector<1x1x8x1xi32>
    %3 = arith.extui %2 : vector<1x1x8x1xi1> to vector<1x1x8x1xi32>
    %4 = arith.sitofp %3 : vector<1x1x8x1xi32> to vector<1x1x8x1xf32>
    %c7_i32 = arith.constant 7 : i32
    %5 = vector.broadcast %c7_i32 : i32 to vector<1x1x8x1xi32>
    %6 = arith.cmpi slt, %0, %5 : vector<1x1x8x1xi32>
    %7 = arith.extui %6 : vector<1x1x8x1xi1> to vector<1x1x8x1xi32>
    %8 = arith.sitofp %7 : vector<1x1x8x1xi32> to vector<1x1x8x1xf32>
    %c0 = arith.constant 0 : index
    %c0_0 = arith.constant 0 : index
    %c0_1 = arith.constant 0 : index
    %c0_2 = arith.constant 0 : index
    %9 = vector.load %arg1[%c0, %c0_0, %c0_1, %c0_2] : memref<2x8x8x448xbf16, #tpu.memory_space<vmem>>, vector<2x8x8x448xbf16>
    %10 = arith.extf %9 : vector<2x8x8x448xbf16> to vector<2x8x8x448xf32>
    %c0_3 = arith.constant 0 : index
    %c0_4 = arith.constant 0 : index
    %c0_5 = arith.constant 0 : index
    %11 = vector.load %arg2[%c0_3, %c0_4, %c0_5] : memref<3x3x448xf32, #tpu.memory_space<vmem>>, vector<3x3x448xf32>
    %c1_i32_6 = arith.constant 1 : i32
    %12 = tpu.dynamic_rotate %10 by %c1_i32_6 dim 2 : vector<2x8x8x448xf32>, i32 -> vector<2x8x8x448xf32>
    %13 = vector.broadcast %4 : vector<1x1x8x1xf32> to vector<2x8x8x448xf32>
    %14 = arith.mulf %12, %13 : vector<2x8x8x448xf32>
    %c7_i32_7 = arith.constant 7 : i32
    %15 = tpu.dynamic_rotate %10 by %c7_i32_7 dim 2 : vector<2x8x8x448xf32>, i32 -> vector<2x8x8x448xf32>
    %16 = vector.broadcast %8 : vector<1x1x8x1xf32> to vector<2x8x8x448xf32>
    %17 = arith.mulf %15, %16 : vector<2x8x8x448xf32>
    %18 = vector.extract_strided_slice %11 {offsets = [1, 0, 0], sizes = [1, 1, 448], strides = [1, 1, 1]} : vector<3x3x448xf32> to vector<1x1x448xf32>
    %19 = vector.shape_cast %18 : vector<1x1x448xf32> to vector<448xf32>
    %20 = vector.shape_cast %19 : vector<448xf32> to vector<1x1x1x448xf32>
    %21 = vector.broadcast %20 : vector<1x1x1x448xf32> to vector<2x8x8x448xf32>
    %22 = arith.mulf %14, %21 : vector<2x8x8x448xf32>
    %23 = vector.extract_strided_slice %11 {offsets = [1, 1, 0], sizes = [1, 1, 448], strides = [1, 1, 1]} : vector<3x3x448xf32> to vector<1x1x448xf32>
    %24 = vector.shape_cast %23 : vector<1x1x448xf32> to vector<448xf32>
    %25 = vector.shape_cast %24 : vector<448xf32> to vector<1x1x1x448xf32>
    %26 = vector.broadcast %25 : vector<1x1x1x448xf32> to vector<2x8x8x448xf32>
    %27 = arith.mulf %10, %26 : vector<2x8x8x448xf32>
    %28 = arith.addf %22, %27 : vector<2x8x8x448xf32>
    %29 = vector.extract_strided_slice %11 {offsets = [1, 2, 0], sizes = [1, 1, 448], strides = [1, 1, 1]} : vector<3x3x448xf32> to vector<1x1x448xf32>
    %30 = vector.shape_cast %29 : vector<1x1x448xf32> to vector<448xf32>
    %31 = vector.shape_cast %30 : vector<448xf32> to vector<1x1x1x448xf32>
    %32 = vector.broadcast %31 : vector<1x1x1x448xf32> to vector<2x8x8x448xf32>
    %33 = arith.mulf %17, %32 : vector<2x8x8x448xf32>
    %34 = arith.addf %28, %33 : vector<2x8x8x448xf32>
    %c0_8 = arith.constant 0 : index
    %c0_9 = arith.constant 0 : index
    %c0_10 = arith.constant 0 : index
    %c0_11 = arith.constant 0 : index
    %35 = vector.load %arg9[%c0_8, %c0_9, %c0_10, %c0_11] : memref<2x8x8x448xf32, #tpu.memory_space<vmem>>, vector<2x8x8x448xf32>
    tpu.vector_store %arg9[%c0_8, %c0_9, %c0_10, %c0_11], %34 {strides = array<i32>} : memref<2x8x8x448xf32, #tpu.memory_space<vmem>>, vector<2x8x8x448xf32>,
    %c0_12 = arith.constant 0 : index
    %c1 = arith.constant 1 : index
    %c0_13 = arith.constant 0 : index
    %c0_14 = arith.constant 0 : index
    %36 = vector.load %arg9[%c0_12, %c1, %c0_13, %c0_14] : memref<2x8x8x448xf32, #tpu.memory_space<vmem>>, vector<2x7x8x448xf32>
    %37 = vector.extract_strided_slice %14 {offsets = [0, 0, 0, 0], sizes = [2, 7, 8, 448], strides = [1, 1, 1, 1]} : vector<2x8x8x448xf32> to vector<2x7x8x448xf32>
    %38 = vector.extract_strided_slice %11 {offsets = [0, 0, 0], sizes = [1, 1, 448], strides = [1, 1, 1]} : vector<3x3x448xf32> to vector<1x1x448xf32>
    %39 = vector.shape_cast %38 : vector<1x1x448xf32> to vector<448xf32>
    %40 = vector.shape_cast %39 : vector<448xf32> to vector<1x1x1x448xf32>
    %41 = vector.broadcast %40 : vector<1x1x1x448xf32> to vector<2x7x8x448xf32>
    %42 = arith.mulf %37, %41 : vector<2x7x8x448xf32>
    %43 = vector.extract_strided_slice %10 {offsets = [0, 0, 0, 0], sizes = [2, 7, 8, 448], strides = [1, 1, 1, 1]} : vector<2x8x8x448xf32> to vector<2x7x8x448xf32>
    %44 = vector.extract_strided_slice %11 {offsets = [0, 1, 0], sizes = [1, 1, 448], strides = [1, 1, 1]} : vector<3x3x448xf32> to vector<1x1x448xf32>
    %45 = vector.shape_cast %44 : vector<1x1x448xf32> to vector<448xf32>
    %46 = vector.shape_cast %45 : vector<448xf32> to vector<1x1x1x448xf32>
    %47 = vector.broadcast %46 : vector<1x1x1x448xf32> to vector<2x7x8x448xf32>
    %48 = arith.mulf %43, %47 : vector<2x7x8x448xf32>
    %49 = arith.addf %42, %48 : vector<2x7x8x448xf32>
    %50 = vector.extract_strided_slice %17 {offsets = [0, 0, 0, 0], sizes = [2, 7, 8, 448], strides = [1, 1, 1, 1]} : vector<2x8x8x448xf32> to vector<2x7x8x448xf32>
    %51 = vector.extract_strided_slice %11 {offsets = [0, 2, 0], sizes = [1, 1, 448], strides = [1, 1, 1]} : vector<3x3x448xf32> to vector<1x1x448xf32>
    %52 = vector.shape_cast %51 : vector<1x1x448xf32> to vector<448xf32>
    %53 = vector.shape_cast %52 : vector<448xf32> to vector<1x1x1x448xf32>
    %54 = vector.broadcast %53 : vector<1x1x1x448xf32> to vector<2x7x8x448xf32>
    %55 = arith.mulf %50, %54 : vector<2x7x8x448xf32>
    %56 = arith.addf %49, %55 : vector<2x7x8x448xf32>
    %57 = arith.addf %36, %56 : vector<2x7x8x448xf32>
    %c0_15 = arith.constant 0 : index
    %c1_16 = arith.constant 1 : index
    %c0_17 = arith.constant 0 : index
    %c0_18 = arith.constant 0 : index
    %58 = vector.load %arg9[%c0_15, %c1_16, %c0_17, %c0_18] : memref<2x8x8x448xf32, #tpu.memory_space<vmem>>, vector<2x7x8x448xf32>
    tpu.vector_store %arg9[%c0_15, %c1_16, %c0_17, %c0_18], %57 {strides = array<i32>} : memref<2x8x8x448xf32, #tpu.memory_space<vmem>>, vector<2x7x8x448xf32>,
    %c0_19 = arith.constant 0 : index
    %c0_20 = arith.constant 0 : index
    %c0_21 = arith.constant 0 : index
    %c0_22 = arith.constant 0 : index
    %59 = vector.load %arg9[%c0_19, %c0_20, %c0_21, %c0_22] : memref<2x8x8x448xf32, #tpu.memory_space<vmem>>, vector<2x7x8x448xf32>
    %60 = vector.extract_strided_slice %14 {offsets = [0, 1, 0, 0], sizes = [2, 7, 8, 448], strides = [1, 1, 1, 1]} : vector<2x8x8x448xf32> to vector<2x7x8x448xf32>
    %61 = vector.extract_strided_slice %11 {offsets = [2, 0, 0], sizes = [1, 1, 448], strides = [1, 1, 1]} : vector<3x3x448xf32> to vector<1x1x448xf32>
    %62 = vector.shape_cast %61 : vector<1x1x448xf32> to vector<448xf32>
    %63 = vector.shape_cast %62 : vector<448xf32> to vector<1x1x1x448xf32>
    %64 = vector.broadcast %63 : vector<1x1x1x448xf32> to vector<2x7x8x448xf32>
    %65 = arith.mulf %60, %64 : vector<2x7x8x448xf32>
    %66 = vector.extract_strided_slice %10 {offsets = [0, 1, 0, 0], sizes = [2, 7, 8, 448], strides = [1, 1, 1, 1]} : vector<2x8x8x448xf32> to vector<2x7x8x448xf32>
    %67 = vector.extract_strided_slice %11 {offsets = [2, 1, 0], sizes = [1, 1, 448], strides = [1, 1, 1]} : vector<3x3x448xf32> to vector<1x1x448xf32>
    %68 = vector.shape_cast %67 : vector<1x1x448xf32> to vector<448xf32>
    %69 = vector.shape_cast %68 : vector<448xf32> to vector<1x1x1x448xf32>
    %70 = vector.broadcast %69 : vector<1x1x1x448xf32> to vector<2x7x8x448xf32>
    %71 = arith.mulf %66, %70 : vector<2x7x8x448xf32>
    %72 = arith.addf %65, %71 : vector<2x7x8x448xf32>
    %73 = vector.extract_strided_slice %17 {offsets = [0, 1, 0, 0], sizes = [2, 7, 8, 448], strides = [1, 1, 1, 1]} : vector<2x8x8x448xf32> to vector<2x7x8x448xf32>
    %74 = vector.extract_strided_slice %11 {offsets = [2, 2, 0], sizes = [1, 1, 448], strides = [1, 1, 1]} : vector<3x3x448xf32> to vector<1x1x448xf32>
    %75 = vector.shape_cast %74 : vector<1x1x448xf32> to vector<448xf32>
    %76 = vector.shape_cast %75 : vector<448xf32> to vector<1x1x1x448xf32>
    %77 = vector.broadcast %76 : vector<1x1x1x448xf32> to vector<2x7x8x448xf32>
    %78 = arith.mulf %73, %77 : vector<2x7x8x448xf32>
    %79 = arith.addf %72, %78 : vector<2x7x8x448xf32>
    %80 = arith.addf %59, %79 : vector<2x7x8x448xf32>
    %c0_23 = arith.constant 0 : index
    %c0_24 = arith.constant 0 : index
    %c0_25 = arith.constant 0 : index
    %c0_26 = arith.constant 0 : index
    %81 = vector.load %arg9[%c0_23, %c0_24, %c0_25, %c0_26] : memref<2x8x8x448xf32, #tpu.memory_space<vmem>>, vector<2x7x8x448xf32>
    tpu.vector_store %arg9[%c0_23, %c0_24, %c0_25, %c0_26], %80 {strides = array<i32>} : memref<2x8x8x448xf32, #tpu.memory_space<vmem>>, vector<2x7x8x448xf32>,
    %c0_27 = arith.constant 0 : index
    %c0_28 = arith.constant 0 : index
    %c0_29 = arith.constant 0 : index
    %c0_30 = arith.constant 0 : index
    %82 = vector.load %arg9[%c0_27, %c0_28, %c0_29, %c0_30] : memref<2x8x8x448xf32, #tpu.memory_space<vmem>>, vector<2x8x8x448xf32>
    %83 = vector.shape_cast %82 : vector<2x8x8x448xf32> to vector<128x448xf32>
    %84 = arith.truncf %83 : vector<128x448xf32> to vector<128x448xbf16>
    %c0_31 = arith.constant 0 : index
    %c0_32 = arith.constant 0 : index
    %85 = vector.load %arg3[%c0_31, %c0_32] : memref<448x448xbf16, #tpu.memory_space<vmem>>, vector<448x448xbf16>
    %cst = arith.constant dense<0.000000e+00> : vector<128x448xf32>
    %86 = tpu.matmul %84, %85, %cst {dimension_numbers = #tpu.dot_dimension_numbers<[1], [0], [0], [1], [0, 0, 1, 1], [], []>} : vector<128x448xbf16>, vector<448x448xbf16>, vector<128x448xf32> -> vector<128x448xf32>
    %c0_33 = arith.constant 0 : index
    %c0_34 = arith.constant 0 : index
    %87 = vector.load %arg4[%c0_33, %c0_34] : memref<1x448xf32, #tpu.memory_space<vmem>>, vector<1x448xf32>
    %88 = vector.broadcast %87 : vector<1x448xf32> to vector<128x448xf32>
    %89 = arith.addf %86, %88 : vector<128x448xf32>
    %cst_35 = arith.constant 0.000000e+00 : f32
    %90 = vector.broadcast %cst_35 : f32 to vector<128x448xf32>
    %91 = arith.maximumf %89, %90 : vector<128x448xf32>
    %92 = vector.shape_cast %91 : vector<128x448xf32> to vector<2x8x8x448xf32>
    %c0_36 = arith.constant 0 : index
    %c0_37 = arith.constant 0 : index
    %c0_38 = arith.constant 0 : index
    %93 = vector.load %arg5[%c0_36, %c0_37, %c0_38] : memref<3x3x448xf32, #tpu.memory_space<vmem>>, vector<3x3x448xf32>
    %c1_i32_39 = arith.constant 1 : i32
    %94 = tpu.dynamic_rotate %92 by %c1_i32_39 dim 2 : vector<2x8x8x448xf32>, i32 -> vector<2x8x8x448xf32>
    %95 = vector.broadcast %4 : vector<1x1x8x1xf32> to vector<2x8x8x448xf32>
    %96 = arith.mulf %94, %95 : vector<2x8x8x448xf32>
    %c7_i32_40 = arith.constant 7 : i32
    %97 = tpu.dynamic_rotate %92 by %c7_i32_40 dim 2 : vector<2x8x8x448xf32>, i32 -> vector<2x8x8x448xf32>
    %98 = vector.broadcast %8 : vector<1x1x8x1xf32> to vector<2x8x8x448xf32>
    %99 = arith.mulf %97, %98 : vector<2x8x8x448xf32>
    %100 = vector.extract_strided_slice %93 {offsets = [1, 0, 0], sizes = [1, 1, 448], strides = [1, 1, 1]} : vector<3x3x448xf32> to vector<1x1x448xf32>
    %101 = vector.shape_cast %100 : vector<1x1x448xf32> to vector<448xf32>
    %102 = vector.shape_cast %101 : vector<448xf32> to vector<1x1x1x448xf32>
    %103 = vector.broadcast %102 : vector<1x1x1x448xf32> to vector<2x8x8x448xf32>
    %104 = arith.mulf %96, %103 : vector<2x8x8x448xf32>
    %105 = vector.extract_strided_slice %93 {offsets = [1, 1, 0], sizes = [1, 1, 448], strides = [1, 1, 1]} : vector<3x3x448xf32> to vector<1x1x448xf32>
    %106 = vector.shape_cast %105 : vector<1x1x448xf32> to vector<448xf32>
    %107 = vector.shape_cast %106 : vector<448xf32> to vector<1x1x1x448xf32>
    %108 = vector.broadcast %107 : vector<1x1x1x448xf32> to vector<2x8x8x448xf32>
    %109 = arith.mulf %92, %108 : vector<2x8x8x448xf32>
    %110 = arith.addf %104, %109 : vector<2x8x8x448xf32>
    %111 = vector.extract_strided_slice %93 {offsets = [1, 2, 0], sizes = [1, 1, 448], strides = [1, 1, 1]} : vector<3x3x448xf32> to vector<1x1x448xf32>
    %112 = vector.shape_cast %111 : vector<1x1x448xf32> to vector<448xf32>
    %113 = vector.shape_cast %112 : vector<448xf32> to vector<1x1x1x448xf32>
    %114 = vector.broadcast %113 : vector<1x1x1x448xf32> to vector<2x8x8x448xf32>
    %115 = arith.mulf %99, %114 : vector<2x8x8x448xf32>
    %116 = arith.addf %110, %115 : vector<2x8x8x448xf32>
    %c0_41 = arith.constant 0 : index
    %c0_42 = arith.constant 0 : index
    %c0_43 = arith.constant 0 : index
    %c0_44 = arith.constant 0 : index
    %117 = vector.load %arg9[%c0_41, %c0_42, %c0_43, %c0_44] : memref<2x8x8x448xf32, #tpu.memory_space<vmem>>, vector<2x8x8x448xf32>
    tpu.vector_store %arg9[%c0_41, %c0_42, %c0_43, %c0_44], %116 {strides = array<i32>} : memref<2x8x8x448xf32, #tpu.memory_space<vmem>>, vector<2x8x8x448xf32>,
    %c0_45 = arith.constant 0 : index
    %c1_46 = arith.constant 1 : index
    %c0_47 = arith.constant 0 : index
    %c0_48 = arith.constant 0 : index
    %118 = vector.load %arg9[%c0_45, %c1_46, %c0_47, %c0_48] : memref<2x8x8x448xf32, #tpu.memory_space<vmem>>, vector<2x7x8x448xf32>
    %119 = vector.extract_strided_slice %96 {offsets = [0, 0, 0, 0], sizes = [2, 7, 8, 448], strides = [1, 1, 1, 1]} : vector<2x8x8x448xf32> to vector<2x7x8x448xf32>
    %120 = vector.extract_strided_slice %93 {offsets = [0, 0, 0], sizes = [1, 1, 448], strides = [1, 1, 1]} : vector<3x3x448xf32> to vector<1x1x448xf32>
    %121 = vector.shape_cast %120 : vector<1x1x448xf32> to vector<448xf32>
    %122 = vector.shape_cast %121 : vector<448xf32> to vector<1x1x1x448xf32>
    %123 = vector.broadcast %122 : vector<1x1x1x448xf32> to vector<2x7x8x448xf32>
    %124 = arith.mulf %119, %123 : vector<2x7x8x448xf32>
    %125 = vector.extract_strided_slice %92 {offsets = [0, 0, 0, 0], sizes = [2, 7, 8, 448], strides = [1, 1, 1, 1]} : vector<2x8x8x448xf32> to vector<2x7x8x448xf32>
    %126 = vector.extract_strided_slice %93 {offsets = [0, 1, 0], sizes = [1, 1, 448], strides = [1, 1, 1]} : vector<3x3x448xf32> to vector<1x1x448xf32>
    %127 = vector.shape_cast %126 : vector<1x1x448xf32> to vector<448xf32>
    %128 = vector.shape_cast %127 : vector<448xf32> to vector<1x1x1x448xf32>
    %129 = vector.broadcast %128 : vector<1x1x1x448xf32> to vector<2x7x8x448xf32>
    %130 = arith.mulf %125, %129 : vector<2x7x8x448xf32>
    %131 = arith.addf %124, %130 : vector<2x7x8x448xf32>
    %132 = vector.extract_strided_slice %99 {offsets = [0, 0, 0, 0], sizes = [2, 7, 8, 448], strides = [1, 1, 1, 1]} : vector<2x8x8x448xf32> to vector<2x7x8x448xf32>
    %133 = vector.extract_strided_slice %93 {offsets = [0, 2, 0], sizes = [1, 1, 448], strides = [1, 1, 1]} : vector<3x3x448xf32> to vector<1x1x448xf32>
    %134 = vector.shape_cast %133 : vector<1x1x448xf32> to vector<448xf32>
    %135 = vector.shape_cast %134 : vector<448xf32> to vector<1x1x1x448xf32>
    %136 = vector.broadcast %135 : vector<1x1x1x448xf32> to vector<2x7x8x448xf32>
    %137 = arith.mulf %132, %136 : vector<2x7x8x448xf32>
    %138 = arith.addf %131, %137 : vector<2x7x8x448xf32>
    %139 = arith.addf %118, %138 : vector<2x7x8x448xf32>
    %c0_49 = arith.constant 0 : index
    %c1_50 = arith.constant 1 : index
    %c0_51 = arith.constant 0 : index
    %c0_52 = arith.constant 0 : index
    %140 = vector.load %arg9[%c0_49, %c1_50, %c0_51, %c0_52] : memref<2x8x8x448xf32, #tpu.memory_space<vmem>>, vector<2x7x8x448xf32>
    tpu.vector_store %arg9[%c0_49, %c1_50, %c0_51, %c0_52], %139 {strides = array<i32>} : memref<2x8x8x448xf32, #tpu.memory_space<vmem>>, vector<2x7x8x448xf32>,
    %c0_53 = arith.constant 0 : index
    %c0_54 = arith.constant 0 : index
    %c0_55 = arith.constant 0 : index
    %c0_56 = arith.constant 0 : index
    %141 = vector.load %arg9[%c0_53, %c0_54, %c0_55, %c0_56] : memref<2x8x8x448xf32, #tpu.memory_space<vmem>>, vector<2x7x8x448xf32>
    %142 = vector.extract_strided_slice %96 {offsets = [0, 1, 0, 0], sizes = [2, 7, 8, 448], strides = [1, 1, 1, 1]} : vector<2x8x8x448xf32> to vector<2x7x8x448xf32>
    %143 = vector.extract_strided_slice %93 {offsets = [2, 0, 0], sizes = [1, 1, 448], strides = [1, 1, 1]} : vector<3x3x448xf32> to vector<1x1x448xf32>
    %144 = vector.shape_cast %143 : vector<1x1x448xf32> to vector<448xf32>
    %145 = vector.shape_cast %144 : vector<448xf32> to vector<1x1x1x448xf32>
    %146 = vector.broadcast %145 : vector<1x1x1x448xf32> to vector<2x7x8x448xf32>
    %147 = arith.mulf %142, %146 : vector<2x7x8x448xf32>
    %148 = vector.extract_strided_slice %92 {offsets = [0, 1, 0, 0], sizes = [2, 7, 8, 448], strides = [1, 1, 1, 1]} : vector<2x8x8x448xf32> to vector<2x7x8x448xf32>
    %149 = vector.extract_strided_slice %93 {offsets = [2, 1, 0], sizes = [1, 1, 448], strides = [1, 1, 1]} : vector<3x3x448xf32> to vector<1x1x448xf32>
    %150 = vector.shape_cast %149 : vector<1x1x448xf32> to vector<448xf32>
    %151 = vector.shape_cast %150 : vector<448xf32> to vector<1x1x1x448xf32>
    %152 = vector.broadcast %151 : vector<1x1x1x448xf32> to vector<2x7x8x448xf32>
    %153 = arith.mulf %148, %152 : vector<2x7x8x448xf32>
    %154 = arith.addf %147, %153 : vector<2x7x8x448xf32>
    %155 = vector.extract_strided_slice %99 {offsets = [0, 1, 0, 0], sizes = [2, 7, 8, 448], strides = [1, 1, 1, 1]} : vector<2x8x8x448xf32> to vector<2x7x8x448xf32>
    %156 = vector.extract_strided_slice %93 {offsets = [2, 2, 0], sizes = [1, 1, 448], strides = [1, 1, 1]} : vector<3x3x448xf32> to vector<1x1x448xf32>
    %157 = vector.shape_cast %156 : vector<1x1x448xf32> to vector<448xf32>
    %158 = vector.shape_cast %157 : vector<448xf32> to vector<1x1x1x448xf32>
    %159 = vector.broadcast %158 : vector<1x1x1x448xf32> to vector<2x7x8x448xf32>
    %160 = arith.mulf %155, %159 : vector<2x7x8x448xf32>
    %161 = arith.addf %154, %160 : vector<2x7x8x448xf32>
    %162 = arith.addf %141, %161 : vector<2x7x8x448xf32>
    %c0_57 = arith.constant 0 : index
    %c0_58 = arith.constant 0 : index
    %c0_59 = arith.constant 0 : index
    %c0_60 = arith.constant 0 : index
    %163 = vector.load %arg9[%c0_57, %c0_58, %c0_59, %c0_60] : memref<2x8x8x448xf32, #tpu.memory_space<vmem>>, vector<2x7x8x448xf32>
    tpu.vector_store %arg9[%c0_57, %c0_58, %c0_59, %c0_60], %162 {strides = array<i32>} : memref<2x8x8x448xf32, #tpu.memory_space<vmem>>, vector<2x7x8x448xf32>,
    %c0_61 = arith.constant 0 : index
    %c0_62 = arith.constant 0 : index
    %c0_63 = arith.constant 0 : index
    %c0_64 = arith.constant 0 : index
    %164 = vector.load %arg9[%c0_61, %c0_62, %c0_63, %c0_64] : memref<2x8x8x448xf32, #tpu.memory_space<vmem>>, vector<2x8x8x448xf32>
    %165 = vector.shape_cast %164 : vector<2x8x8x448xf32> to vector<2x64x448xf32>
    %c0_65 = arith.constant 0 : index
    %c0_66 = arith.constant 0 : index
    %166 = vector.load %arg6[%c0_65, %c0_66] : memref<1x448xf32, #tpu.memory_space<vmem>>, vector<1x448xf32>
    %167 = vector.shape_cast %166 : vector<1x448xf32> to vector<1x1x448xf32>
    %168 = vector.broadcast %167 : vector<1x1x448xf32> to vector<2x64x448xf32>
    %169 = arith.mulf %165, %168 : vector<2x64x448xf32>
    %cst_67 = arith.constant dense<0.000000e+00> : vector<2x64xf32>
    %170 = vector.multi_reduction <add>, %169, %cst_67 [2] : vector<2x64x448xf32> to vector<2x64xf32>
    %c0_68 = arith.constant 0 : index
    %171 = memref.load %arg7[%c0_68] : memref<1xf32, #tpu.memory_space<smem>>
    %172 = vector.broadcast %171 : f32 to vector<2x64xf32>
    %173 = arith.addf %170, %172 : vector<2x64xf32>
    %c0_69 = arith.constant 0 : index
    %c0_70 = arith.constant 0 : index
    %c0_71 = arith.constant 0 : index
    %174 = vector.load %arg8[%c0_69, %c0_70, %c0_71] : memref<2x1x64xf32, #tpu.memory_space<vmem>>, vector<2x1x64xf32>
    %175 = vector.shape_cast %174 : vector<2x1x64xf32> to vector<2x64xf32>
    %176 = vector.shape_cast %173 : vector<2x64xf32> to vector<2x1x64xf32>
    tpu.vector_store %arg8[%c0_69, %c0_70, %c0_71], %176 {strides = array<i32>} : memref<2x1x64xf32, #tpu.memory_space<vmem>>, vector<2x1x64xf32>,
    return
  }
  func.func @transform_0(%arg0: i32) -> (i32, i32, i32, i32) {
    %c0_i32 = arith.constant 0 : i32
    %c0_i32_0 = arith.constant 0 : i32
    %c0_i32_1 = arith.constant 0 : i32
    %c0_i32_2 = arith.constant 0 : i32
    return %arg0, %c0_i32, %c0_i32_0, %c0_i32_1 : i32, i32, i32, i32
  }
  func.func @transform_1(%arg0: i32) -> (i32, i32, i32) {
    %c0_i32 = arith.constant 0 : i32
    %c0_i32_0 = arith.constant 0 : i32
    %c0_i32_1 = arith.constant 0 : i32
    %c0_i32_2 = arith.constant 0 : i32
    return %c0_i32, %c0_i32_0, %c0_i32_1 : i32, i32, i32
  }
  func.func @transform_2(%arg0: i32) -> (i32, i32) {
    %c0_i32 = arith.constant 0 : i32
    %c0_i32_0 = arith.constant 0 : i32
    %c0_i32_1 = arith.constant 0 : i32
    return %c0_i32, %c0_i32_0 : i32, i32
  }
  func.func @transform_3(%arg0: i32) -> (i32, i32) {
    %c0_i32 = arith.constant 0 : i32
    %c0_i32_0 = arith.constant 0 : i32
    %c0_i32_1 = arith.constant 0 : i32
    return %c0_i32, %c0_i32_0 : i32, i32
  }
  func.func @transform_4(%arg0: i32) -> (i32, i32, i32) {
    %c0_i32 = arith.constant 0 : i32
    %c0_i32_0 = arith.constant 0 : i32
    %c0_i32_1 = arith.constant 0 : i32
    %c0_i32_2 = arith.constant 0 : i32
    return %c0_i32, %c0_i32_0, %c0_i32_1 : i32, i32, i32
  }
  func.func @transform_5(%arg0: i32) -> (i32, i32) {
    %c0_i32 = arith.constant 0 : i32
    %c0_i32_0 = arith.constant 0 : i32
    %c0_i32_1 = arith.constant 0 : i32
    return %c0_i32, %c0_i32_0 : i32, i32
  }
  func.func @transform_6(%arg0: i32) -> i32 {
    %c0_i32 = arith.constant 0 : i32
    %c0_i32_0 = arith.constant 0 : i32
    return %c0_i32 : i32
  }
  func.func @transform_7(%arg0: i32) -> (i32, i32, i32) {
    %c0_i32 = arith.constant 0 : i32
    %c0_i32_0 = arith.constant 0 : i32
    %c0_i32_1 = arith.constant 0 : i32
    return %arg0, %c0_i32, %c0_i32_0 : i32, i32, i32
  }
}

</mosaic_0001>

<llo_original>
// kernel: detector_forward.2
$region0: #{detector_forward.2}
  #allocation0 [shape = 'u32[]', space=smem, size = 0x4, offset = 0x4, fixed_abs, tag = 'smem constant byte address 0x4 - core index']
  #allocation1 [shape = 'u32[72,128]{1,0:T(1,128)}', space=vmem, size = 0x9000, scoped, tag = 'internal scratch']
  #allocation2 [shape = 'f32[2,8,8,448]{3,2,1,0:T(8,128)}', space=vmem, size = 0x40000, scoped, tag = 'scratch operand']
  #allocation3 [shape = 'f32[1]{0:T(128)S(6)}', space=smem, size = 0x200, scoped, tag = 'scoped memory for detector_forward.2']
  %s0 = inlined_call_operand.hbm [shape: f32[3,3,448], index: 0, kind: input, shape index: {}]
  %s1 = inlined_call_operand.hbm [shape: bf16[448,448], index: 1, kind: input, shape index: {}]
  %s2 = inlined_call_operand.hbm [shape: f32[1,448], index: 2, kind: input, shape index: {}]
  %s3 = inlined_call_operand.hbm [shape: f32[3,3,448], index: 3, kind: input, shape index: {}]
  %s4 = inlined_call_operand.vmem [shape: f32[1,448], index: 4, kind: input, shape index: {}]
  %s5 = inlined_call_operand.<no memory space> [shape: f32[1], index: 5, kind: input, shape index: {}]
  %s6 = inlined_call_operand.hbm [shape: f32[2,448,8,8], index: 6, kind: input, shape index: {}]
  %s7 = inlined_call_operand.vmem [shape: f32[2,1,64], index: 7, kind: output, shape index: {}]
  %s8 = sld [smem:[#allocation0]]
  $region58: #{detector_forward.2} parent=0
    _
  %s10 = ssub.s32 1, %s8
  %s11 = scalar_select 0, %s10, %s8
  %12 = sst [smem:[#allocation3]] %s5
  $region1: #{detector_forward.2} parent=0
    #allocation4 [shape = 'u8[262144]{0}', space=vmem, size = 0x40000, scoped, tag = 'operand span for operand 6']
    #allocation5 [shape = 's32[1]{0}', space=sflag, size = 0x4, scoped, tag = 'scoped memory for detector_forward.2']
    #allocation6 [shape = 'u8[24576]{0}', space=vmem, size = 0x6000, scoped, tag = 'input window, operand 1, single buffered']
    #allocation7 [shape = 's32[1]{0}', space=sflag, size = 0x4, scoped, tag = 'scoped memory for detector_forward.2']
    #allocation8 [shape = 'u8[458752]{0}', space=vmem, size = 0x70000, scoped, tag = 'input window, operand 2, single buffered']
    #allocation9 [shape = 'u8[2048]{0}', space=vmem, size = 0x800, scoped, tag = 'input window, operand 3, single buffered']
    #allocation10 [shape = 's32[1]{0}', space=sflag, size = 0x4, scoped, tag = 'scoped memory for detector_forward.2']
    #allocation11 [shape = 'u8[24576]{0}', space=vmem, size = 0x6000, scoped, tag = 'input window, operand 4, single buffered']
    #allocation12 [shape = 'u8[131072]{0}', space=vmem, size = 0x20000, dematerialized = true, scoped, tag = 'FusionAdapter Buffer %fusion.1 = bf16[2,8,8,448]{3,2,1,0:T(8,128)(2,1)} fusion(%param_6.2), kind=kLoop, calls=%fused_computation.1.clone, metadata={op_name="jit(detector_forward)/convert_element_type" stack_frame_id=8}']
    %13 = vsyncpa [#allocation5], 0
    %14 = vsyncpa [#allocation7], 0
    %15 = vsyncpa [#allocation10], 0
    // Predicated region
    $region2: #{detector_forward.2} parent=1 // pred_check
      _
    $region3: #{detector_forward.2} parent=1 // pred_check_branch
      %17 = sbr.rel (0) target = $region5
    $region4: #{detector_forward.2} parent=1 // pred_region
      %19 = vsyncadd [#allocation5], 0
      %s20 = sshll.u32 %s6, 4
      %s21 = int_to_ptr.hbm [resolvable:$true] %s20
      %s22 = sshll.u32 [#allocation4], 4
      %s23 = int_to_ptr.vmem [resolvable:$true] %s22
      %28 = dma.hbm_to_vmem [thread:$0]  %s21, 8192, %s23, [#allocation5], 512, 512, 32
    $region5: #{detector_forward.2} parent=1 // pred_fallthru
      _
    // Predicated region
    $region6: #{detector_forward.2} parent=1 // pred_check
      _
    $region7: #{detector_forward.2} parent=1 // pred_check_branch
      %30 = sbr.rel (0) target = $region9
    $region8: #{detector_forward.2} parent=1 // pred_region
      %32 = vsyncadd [#allocation7], 0
      %s33 = sshll.u32 %s0, 4
      %s34 = int_to_ptr.hbm [resolvable:$true] %s33
      %s35 = sshll.u32 [#allocation6], 4
      %s36 = int_to_ptr.vmem [resolvable:$true] %s35
      %41 = dma.hbm_to_vmem [thread:$0]  %s34, 768, %s36, [#allocation7], 256, 256, 16
    $region9: #{detector_forward.2} parent=1 // pred_fallthru
      _
    // Predicated region
    $region10: #{detector_forward.2} parent=1 // pred_check
      _
    $region11: #{detector_forward.2} parent=1 // pred_check_branch
      %43 = sbr.rel (0) target = $region13
    $region12: #{detector_forward.2} parent=1 // pred_region
      %45 = vsyncadd [#allocation7], 0
      %s46 = sshll.u32 %s1, 4
      %s47 = int_to_ptr.hbm [resolvable:$true] %s46
      %s48 = sshll.u32 [#allocation8], 4
      %s49 = int_to_ptr.vmem [resolvable:$true] %s48
      %54 = dma.hbm_to_vmem [thread:$0]  %s47, 14336, %s49, [#allocation7], 256, 256, 16
    $region13: #{detector_forward.2} parent=1 // pred_fallthru
      _
    // Predicated region
    $region14: #{detector_forward.2} parent=1 // pred_check
      _
    $region15: #{detector_forward.2} parent=1 // pred_check_branch
      %56 = sbr.rel (0) target = $region17
    $region16: #{detector_forward.2} parent=1 // pred_region
      %58 = vsyncadd [#allocation10], 0
      %s60 = sshll.u32 %s2, 4
      %s61 = int_to_ptr.hbm [resolvable:$true] %s60
      %s62 = sshll.u32 [#allocation9], 4
      %s63 = int_to_ptr.vmem [resolvable:$true] %s62
      %65 = dma.hbm_to_vmem [thread:$0]  %s61, 64, %s63, [#allocation10]
    $region17: #{detector_forward.2} parent=1 // pred_fallthru
      _
    // Predicated region
    $region18: #{detector_forward.2} parent=1 // pred_check
      _
    $region19: #{detector_forward.2} parent=1 // pred_check_branch
      %67 = sbr.rel (0) target = $region21
    $region20: #{detector_forward.2} parent=1 // pred_region
      %69 = vsyncadd [#allocation10], 0
      %s70 = sshll.u32 %s3, 4
      %s71 = int_to_ptr.hbm [resolvable:$true] %s70
      %s72 = sshll.u32 [#allocation11], 4
      %s73 = int_to_ptr.vmem [resolvable:$true] %s72
      %78 = dma.hbm_to_vmem [thread:$0]  %s71, 768, %s73, [#allocation10], 256, 256, 16
    $region21: #{detector_forward.2} parent=1 // pred_fallthru
      _
    // Predicated region
    $region22: #{detector_forward.2} parent=1 // pred_check
      _
    $region23: #{detector_forward.2} parent=1 // pred_check_branch
      %80 = sbr.rel (0) target = $region25
    $region24: #{detector_forward.2} parent=1 // pred_region
      _
    $region25: #{detector_forward.2} parent=1 // pred_fallthru
      _
    // Predicated region
    $region26: #{detector_forward.2} parent=1 // pred_check
      _
    $region27: #{detector_forward.2} parent=1 // pred_check_branch
      %82 = sbr.rel (0) target = $region29
    $region28: #{detector_forward.2} parent=1 // pred_region
      _
    $region29: #{detector_forward.2} parent=1 // pred_fallthru
      _
    // Predicated region
    $region30: #{detector_forward.2} parent=1 // pred_check
      _
    $region31: #{detector_forward.2} parent=1 // pred_check_branch
      %84 = sbr.rel (0) target = $region33
    $region32: #{detector_forward.2} parent=1 // pred_region
      %86 = dma.done [#allocation5], 8192
    $region33: #{detector_forward.2} parent=1 // pred_fallthru
      _
    // Predicated region
    $region34: #{detector_forward.2} parent=1 // pred_check
      _
    $region35: #{detector_forward.2} parent=1 // pred_check_branch
      %88 = sbr.rel (0) target = $region37
    $region36: #{detector_forward.2} parent=1 // pred_region
      %90 = dma.done [#allocation7], 768
    $region37: #{detector_forward.2} parent=1 // pred_fallthru
      _
    // Predicated region
    $region38: #{detector_forward.2} parent=1 // pred_check
      _
    $region39: #{detector_forward.2} parent=1 // pred_check_branch
      %92 = sbr.rel (0) target = $region41
    $region40: #{detector_forward.2} parent=1 // pred_region
      %94 = dma.done [#allocation7], 14336
    $region41: #{detector_forward.2} parent=1 // pred_fallthru
      _
    // Predicated region
    $region42: #{detector_forward.2} parent=1 // pred_check
      _
    $region43: #{detector_forward.2} parent=1 // pred_check_branch
      %96 = sbr.rel (0) target = $region45
    $region44: #{detector_forward.2} parent=1 // pred_region
      %98 = dma.done [#allocation10], 64
    $region45: #{detector_forward.2} parent=1 // pred_fallthru
      _
    // Predicated region
    $region46: #{detector_forward.2} parent=1 // pred_check
      _
    $region47: #{detector_forward.2} parent=1 // pred_check_branch
      %100 = sbr.rel (0) target = $region49
    $region48: #{detector_forward.2} parent=1 // pred_region
      %102 = dma.done [#allocation10], 768
    $region49: #{detector_forward.2} parent=1 // pred_fallthru
      _
    %v103 = vld [vmem:[#allocation4] sm:$0xff]
    %104 = xla_tuple %v103
    %105 = xla_tuple %104
    %106 = xla_tuple %v103
    %v107 = vpack.c.bf16 0.0, %v103
    %s109 = ssub.s32 16, 1
    %110 = vst [vmem:[#allocation12] sm:%s109] %v107
    %s111 = scalar_lea.vmem [#allocation4], 8
    %v112 = vld [vmem:[%s111] sm:$0xff]
    %113 = xla_tuple %v112
    %114 = xla_tuple %113
    %115 = xla_tuple %v112
    %s116 = scalar_lea.vmem [#allocation12], 4
    %v117 = vpack.c.bf16 0.0, %v112
    %s119 = ssub.s32 16, 1
    %120 = vst [vmem:[%s116] sm:%s119] %v117
    %s121 = scalar_lea.vmem [#allocation4], 16
    %v122 = vld [vmem:[%s121] sm:$0xff]
    %123 = xla_tuple %v122
    %124 = xla_tuple %123
    %125 = xla_tuple %v122
    %s126 = scalar_lea.vmem [#allocation12], 8
    %v127 = vpack.c.bf16 0.0, %v122
    %s129 = ssub.s32 16, 1
    %130 = vst [vmem:[%s126] sm:%s129] %v127
    %s131 = scalar_lea.vmem [#allocation4], 24
    %v132 = vld [vmem:[%s131] sm:$0xff]
    %133 = xla_tuple %v132
    %134 = xla_tuple %133
    %135 = xla_tuple %v132
    %s136 = scalar_lea.vmem [#allocation12], 12
    %v137 = vpack.c.bf16 0.0, %v132
    %s139 = ssub.s32 16, 1
    %140 = vst [vmem:[%s136] sm:%s139] %v137
    %s141 = scalar_lea.vmem [#allocation4], 32
    %v142 = vld [vmem:[%s141] sm:$0xff]
    %143 = xla_tuple %v142
    %144 = xla_tuple %143
    %145 = xla_tuple %v142
    %s146 = scalar_lea.vmem [#allocation12], 16
    %v147 = vpack.c.bf16 0.0, %v142
    %s149 = ssub.s32 16, 1
    %150 = vst [vmem:[%s146] sm:%s149] %v147
    %s151 = scalar_lea.vmem [#allocation4], 40
    %v152 = vld [vmem:[%s151] sm:$0xff]
    %153 = xla_tuple %v152
    %154 = xla_tuple %153
    %155 = xla_tuple %v152
    %s156 = scalar_lea.vmem [#allocation12], 20
    %v157 = vpack.c.bf16 0.0, %v152
    %s159 = ssub.s32 16, 1
    %160 = vst [vmem:[%s156] sm:%s159] %v157
    %s161 = scalar_lea.vmem [#allocation4], 48
    %v162 = vld [vmem:[%s161] sm:$0xff]
    %163 = xla_tuple %v162
    %164 = xla_tuple %163
    %165 = xla_tuple %v162
    %s166 = scalar_lea.vmem [#allocation12], 24
    %v167 = vpack.c.bf16 0.0, %v162
    %s169 = ssub.s32 16, 1
    %170 = vst [vmem:[%s166] sm:%s169] %v167
    %s171 = scalar_lea.vmem [#allocation4], 56
    %v172 = vld [vmem:[%s171] sm:$0xff]
    %173 = xla_tuple %v172
    %174 = xla_tuple %173
    %175 = xla_tuple %v172
    %s176 = scalar_lea.vmem [#allocation12], 28
    %v177 = vpack.c.bf16 0.0, %v172
    %s179 = ssub.s32 16, 1
    %180 = vst [vmem:[%s176] sm:%s179] %v177
    %s181 = scalar_lea.vmem [#allocation4], 64
    %v182 = vld [vmem:[%s181] sm:$0xff]
    %183 = xla_tuple %v182
    %184 = xla_tuple %183
    %185 = xla_tuple %v182
    %s186 = scalar_lea.vmem [#allocation12], 32
    %v187 = vpack.c.bf16 0.0, %v182
    %s189 = ssub.s32 16, 1
    %190 = vst [vmem:[%s186] sm:%s189] %v187
    %s191 = scalar_lea.vmem [#allocation4], 72
    %v192 = vld [vmem:[%s191] sm:$0xff]
    %193 = xla_tuple %v192
    %194 = xla_tuple %193
    %195 = xla_tuple %v192
    %s196 = scalar_lea.vmem [#allocation12], 36
    %v197 = vpack.c.bf16 0.0, %v192
    %s199 = ssub.s32 16, 1
    %200 = vst [vmem:[%s196] sm:%s199] %v197
    %s201 = scalar_lea.vmem [#allocation4], 80
    %v202 = vld [vmem:[%s201] sm:$0xff]
    %203 = xla_tuple %v202
    %204 = xla_tuple %203
    %205 = xla_tuple %v202
    %s206 = scalar_lea.vmem [#allocation12], 40
    %v207 = vpack.c.bf16 0.0, %v202
    %s209 = ssub.s32 16, 1
    %210 = vst [vmem:[%s206] sm:%s209] %v207
    %s211 = scalar_lea.vmem [#allocation4], 88
    %v212 = vld [vmem:[%s211] sm:$0xff]
    %213 = xla_tuple %v212
    %214 = xla_tuple %213
    %215 = xla_tuple %v212
    %s216 = scalar_lea.vmem [#allocation12], 44
    %v217 = vpack.c.bf16 0.0, %v212
    %s219 = ssub.s32 16, 1
    %220 = vst [vmem:[%s216] sm:%s219] %v217
    %s221 = scalar_lea.vmem [#allocation4], 96
    %v222 = vld [vmem:[%s221] sm:$0xff]
    %223 = xla_tuple %v222
    %224 = xla_tuple %223
    %225 = xla_tuple %v222
    %s226 = scalar_lea.vmem [#allocation12], 48
    %v227 = vpack.c.bf16 0.0, %v222
    %s229 = ssub.s32 16, 1
    %230 = vst [vmem:[%s226] sm:%s229] %v227
    %s231 = scalar_lea.vmem [#allocation4], 104
    %v232 = vld [vmem:[%s231] sm:$0xff]
    %233 = xla_tuple %v232
    %234 = xla_tuple %233
    %235 = xla_tuple %v232
    %s236 = scalar_lea.vmem [#allocation12], 52
    %v237 = vpack.c.bf16 0.0, %v232
    %s239 = ssub.s32 16, 1
    %240 = vst [vmem:[%s236] sm:%s239] %v237
    %s241 = scalar_lea.vmem [#allocation4], 112
    %v242 = vld [vmem:[%s241] sm:$0xff]
    %243 = xla_tuple %v242
    %244 = xla_tuple %243
    %245 = xla_tuple %v242
    %s246 = scalar_lea.vmem [#allocation12], 56
    %v247 = vpack.c.bf16 0.0, %v242
    %s249 = ssub.s32 16, 1
    %250 = vst [vmem:[%s246] sm:%s249] %v247
    %s251 = scalar_lea.vmem [#allocation4], 120
    %v252 = vld [vmem:[%s251] sm:$0xff]
    %253 = xla_tuple %v252
    %254 = xla_tuple %253
    %255 = xla_tuple %v252
    %s256 = scalar_lea.vmem [#allocation12], 60
    %v257 = vpack.c.bf16 0.0, %v252
    %s259 = ssub.s32 16, 1
    %260 = vst [vmem:[%s256] sm:%s259] %v257
    %s261 = scalar_lea.vmem [#allocation4], 128
    %v262 = vld [vmem:[%s261] sm:$0xff]
    %263 = xla_tuple %v262
    %264 = xla_tuple %263
    %265 = xla_tuple %v262
    %s266 = scalar_lea.vmem [#allocation12], 64
    %v267 = vpack.c.bf16 0.0, %v262
    %s269 = ssub.s32 16, 1
    %270 = vst [vmem:[%s266] sm:%s269] %v267
    %s271 = scalar_lea.vmem [#allocation4], 136
    %v272 = vld [vmem:[%s271] sm:$0xff]
    %273 = xla_tuple %v272
    %274 = xla_tuple %273
    %275 = xla_tuple %v272
    %s276 = scalar_lea.vmem [#allocation12], 68
    %v277 = vpack.c.bf16 0.0, %v272
    %s279 = ssub.s32 16, 1
    %280 = vst [vmem:[%s276] sm:%s279] %v277
    %s281 = scalar_lea.vmem [#allocation4], 144
    %v282 = vld [vmem:[%s281] sm:$0xff]
    %283 = xla_tuple %v282
    %284 = xla_tuple %283
    %285 = xla_tuple %v282
    %s286 = scalar_lea.vmem [#allocation12], 72
    %v287 = vpack.c.bf16 0.0, %v282
    %s289 = ssub.s32 16, 1
    %290 = vst [vmem:[%s286] sm:%s289] %v287
    %s291 = scalar_lea.vmem [#allocation4], 152
    %v292 = vld [vmem:[%s291] sm:$0xff]
    %293 = xla_tuple %v292
    %294 = xla_tuple %293
    %295 = xla_tuple %v292
    %s296 = scalar_lea.vmem [#allocation12], 76
    %v297 = vpack.c.bf16 0.0, %v292
    %s299 = ssub.s32 16, 1
    %300 = vst [vmem:[%s296] sm:%s299] %v297
    %s301 = scalar_lea.vmem [#allocation4], 160
    %v302 = vld [vmem:[%s301] sm:$0xff]
    %303 = xla_tuple %v302
    %304 = xla_tuple %303
    %305 = xla_tuple %v302
    %s306 = scalar_lea.vmem [#allocation12], 80
    %v307 = vpack.c.bf16 0.0, %v302
    %s309 = ssub.s32 16, 1
    %310 = vst [vmem:[%s306] sm:%s309] %v307
    %s311 = scalar_lea.vmem [#allocation4], 168
    %v312 = vld [vmem:[%s311] sm:$0xff]
    %313 = xla_tuple %v312
    %314 = xla_tuple %313
    %315 = xla_tuple %v312
    %s316 = scalar_lea.vmem [#allocation12], 84
    %v317 = vpack.c.bf16 0.0, %v312
    %s319 = ssub.s32 16, 1
    %320 = vst [vmem:[%s316] sm:%s319] %v317
    %s321 = scalar_lea.vmem [#allocation4], 176
    %v322 = vld [vmem:[%s321] sm:$0xff]
    %323 = xla_tuple %v322
    %324 = xla_tuple %323
    %325 = xla_tuple %v322
    %s326 = scalar_lea.vmem [#allocation12], 88
    %v327 = vpack.c.bf16 0.0, %v322
    %s329 = ssub.s32 16, 1
    %330 = vst [vmem:[%s326] sm:%s329] %v327
    %s331 = scalar_lea.vmem [#allocation4], 184
    %v332 = vld [vmem:[%s331] sm:$0xff]
    %333 = xla_tuple %v332
    %334 = xla_tuple %333
    %335 = xla_tuple %v332
    %s336 = scalar_lea.vmem [#allocation12], 92
    %v337 = vpack.c.bf16 0.0, %v332
    %s339 = ssub.s32 16, 1
    %340 = vst [vmem:[%s336] sm:%s339] %v337
    %s341 = scalar_lea.vmem [#allocation4], 192
    %v342 = vld [vmem:[%s341] sm:$0xff]
    %343 = xla_tuple %v342
    %344 = xla_tuple %343
    %345 = xla_tuple %v342
    %s346 = scalar_lea.vmem [#allocation12], 96
    %v347 = vpack.c.bf16 0.0, %v342
    %s349 = ssub.s32 16, 1
    %350 = vst [vmem:[%s346] sm:%s349] %v347
    %s351 = scalar_lea.vmem [#allocation4], 200
    %v352 = vld [vmem:[%s351] sm:$0xff]
    %353 = xla_tuple %v352
    %354 = xla_tuple %353
    %355 = xla_tuple %v352
    %s356 = scalar_lea.vmem [#allocation12], 100
    %v357 = vpack.c.bf16 0.0, %v352
    %s359 = ssub.s32 16, 1
    %360 = vst [vmem:[%s356] sm:%s359] %v357
    %s361 = scalar_lea.vmem [#allocation4], 208
    %v362 = vld [vmem:[%s361] sm:$0xff]
    %363 = xla_tuple %v362
    %364 = xla_tuple %363
    %365 = xla_tuple %v362
    %s366 = scalar_lea.vmem [#allocation12], 104
    %v367 = vpack.c.bf16 0.0, %v362
    %s369 = ssub.s32 16, 1
    %370 = vst [vmem:[%s366] sm:%s369] %v367
    %s371 = scalar_lea.vmem [#allocation4], 216
    %v372 = vld [vmem:[%s371] sm:$0xff]
    %373 = xla_tuple %v372
    %374 = xla_tuple %373
    %375 = xla_tuple %v372
    %s376 = scalar_lea.vmem [#allocation12], 108
    %v377 = vpack.c.bf16 0.0, %v372
    %s379 = ssub.s32 16, 1
    %380 = vst [vmem:[%s376] sm:%s379] %v377
    %s381 = scalar_lea.vmem [#allocation4], 224
    %v382 = vld [vmem:[%s381] sm:$0xff]
    %383 = xla_tuple %v382
    %384 = xla_tuple %383
    %385 = xla_tuple %v382
    %s386 = scalar_lea.vmem [#allocation12], 112
    %v387 = vpack.c.bf16 0.0, %v382
    %s389 = ssub.s32 16, 1
    %390 = vst [vmem:[%s386] sm:%s389] %v387
    %s391 = scalar_lea.vmem [#allocation4], 232
    %v392 = vld [vmem:[%s391] sm:$0xff]
    %393 = xla_tuple %v392
    %394 = xla_tuple %393
    %395 = xla_tuple %v392
    %s396 = scalar_lea.vmem [#allocation12], 116
    %v397 = vpack.c.bf16 0.0, %v392
    %s399 = ssub.s32 16, 1
    %400 = vst [vmem:[%s396] sm:%s399] %v397
    %s401 = scalar_lea.vmem [#allocation4], 240
    %v402 = vld [vmem:[%s401] sm:$0xff]
    %403 = xla_tuple %v402
    %404 = xla_tuple %403
    %405 = xla_tuple %v402
    %s406 = scalar_lea.vmem [#allocation12], 120
    %v407 = vpack.c.bf16 0.0, %v402
    %s409 = ssub.s32 16, 1
    %410 = vst [vmem:[%s406] sm:%s409] %v407
    %s411 = scalar_lea.vmem [#allocation4], 248
    %v412 = vld [vmem:[%s411] sm:$0xff]
    %413 = xla_tuple %v412
    %414 = xla_tuple %413
    %415 = xla_tuple %v412
    %s416 = scalar_lea.vmem [#allocation12], 124
    %v417 = vpack.c.bf16 0.0, %v412
    %s419 = ssub.s32 16, 1
    %420 = vst [vmem:[%s416] sm:%s419] %v417
    %s421 = scalar_lea.vmem [#allocation4], 256
    %v422 = vld [vmem:[%s421] sm:$0xff]
    %423 = xla_tuple %v422
    %424 = xla_tuple %423
    %425 = xla_tuple %v422
    %s426 = scalar_lea.vmem [#allocation12], 128
    %v427 = vpack.c.bf16 0.0, %v422
    %s429 = ssub.s32 16, 1
    %430 = vst [vmem:[%s426] sm:%s429] %v427
    %s431 = scalar_lea.vmem [#allocation4], 264
    %v432 = vld [vmem:[%s431] sm:$0xff]
    %433 = xla_tuple %v432
    %434 = xla_tuple %433
    %435 = xla_tuple %v432
    %s436 = scalar_lea.vmem [#allocation12], 132
    %v437 = vpack.c.bf16 0.0, %v432
    %s439 = ssub.s32 16, 1
    %440 = vst [vmem:[%s436] sm:%s439] %v437
    %s441 = scalar_lea.vmem [#allocation4], 272
    %v442 = vld [vmem:[%s441] sm:$0xff]
    %443 = xla_tuple %v442
    %444 = xla_tuple %443
    %445 = xla_tuple %v442
    %s446 = scalar_lea.vmem [#allocation12], 136
    %v447 = vpack.c.bf16 0.0, %v442
    %s449 = ssub.s32 16, 1
    %450 = vst [vmem:[%s446] sm:%s449] %v447
    %s451 = scalar_lea.vmem [#allocation4], 280
    %v452 = vld [vmem:[%s451] sm:$0xff]
    %453 = xla_tuple %v452
    %454 = xla_tuple %453
    %455 = xla_tuple %v452
    %s456 = scalar_lea.vmem [#allocation12], 140
    %v457 = vpack.c.bf16 0.0, %v452
    %s459 = ssub.s32 16, 1
    %460 = vst [vmem:[%s456] sm:%s459] %v457
    %s461 = scalar_lea.vmem [#allocation4], 288
    %v462 = vld [vmem:[%s461] sm:$0xff]
    %463 = xla_tuple %v462
    %464 = xla_tuple %463
    %465 = xla_tuple %v462
    %s466 = scalar_lea.vmem [#allocation12], 144
    %v467 = vpack.c.bf16 0.0, %v462
    %s469 = ssub.s32 16, 1
    %470 = vst [vmem:[%s466] sm:%s469] %v467
    %s471 = scalar_lea.vmem [#allocation4], 296
    %v472 = vld [vmem:[%s471] sm:$0xff]
    %473 = xla_tuple %v472
    %474 = xla_tuple %473
    %475 = xla_tuple %v472
    %s476 = scalar_lea.vmem [#allocation12], 148
    %v477 = vpack.c.bf16 0.0, %v472
    %s479 = ssub.s32 16, 1
    %480 = vst [vmem:[%s476] sm:%s479] %v477
    %s481 = scalar_lea.vmem [#allocation4], 304
    %v482 = vld [vmem:[%s481] sm:$0xff]
    %483 = xla_tuple %v482
    %484 = xla_tuple %483
    %485 = xla_tuple %v482
    %s486 = scalar_lea.vmem [#allocation12], 152
    %v487 = vpack.c.bf16 0.0, %v482
    %s489 = ssub.s32 16, 1
    %490 = vst [vmem:[%s486] sm:%s489] %v487
    %s491 = scalar_lea.vmem [#allocation4], 312
    %v492 = vld [vmem:[%s491] sm:$0xff]
    %493 = xla_tuple %v492
    %494 = xla_tuple %493
    %495 = xla_tuple %v492
    %s496 = scalar_lea.vmem [#allocation12], 156
    %v497 = vpack.c.bf16 0.0, %v492
    %s499 = ssub.s32 16, 1
    %500 = vst [vmem:[%s496] sm:%s499] %v497
    %s501 = scalar_lea.vmem [#allocation4], 320
    %v502 = vld [vmem:[%s501] sm:$0xff]
    %503 = xla_tuple %v502
    %504 = xla_tuple %503
    %505 = xla_tuple %v502
    %s506 = scalar_lea.vmem [#allocation12], 160
    %v507 = vpack.c.bf16 0.0, %v502
    %s509 = ssub.s32 16, 1
    %510 = vst [vmem:[%s506] sm:%s509] %v507
    %s511 = scalar_lea.vmem [#allocation4], 328
    %v512 = vld [vmem:[%s511] sm:$0xff]
    %513 = xla_tuple %v512
    %514 = xla_tuple %513
    %515 = xla_tuple %v512
    %s516 = scalar_lea.vmem [#allocation12], 164
    %v517 = vpack.c.bf16 0.0, %v512
    %s519 = ssub.s32 16, 1
    %520 = vst [vmem:[%s516] sm:%s519] %v517
    %s521 = scalar_lea.vmem [#allocation4], 336
    %v522 = vld [vmem:[%s521] sm:$0xff]
    %523 = xla_tuple %v522
    %524 = xla_tuple %523
    %525 = xla_tuple %v522
    %s526 = scalar_lea.vmem [#allocation12], 168
    %v527 = vpack.c.bf16 0.0, %v522
    %s529 = ssub.s32 16, 1
    %530 = vst [vmem:[%s526] sm:%s529] %v527
    %s531 = scalar_lea.vmem [#allocation4], 344
    %v532 = vld [vmem:[%s531] sm:$0xff]
    %533 = xla_tuple %v532
    %534 = xla_tuple %533
    %535 = xla_tuple %v532
    %s536 = scalar_lea.vmem [#allocation12], 172
    %v537 = vpack.c.bf16 0.0, %v532
    %s539 = ssub.s32 16, 1
    %540 = vst [vmem:[%s536] sm:%s539] %v537
    %s541 = scalar_lea.vmem [#allocation4], 352
    %v542 = vld [vmem:[%s541] sm:$0xff]
    %543 = xla_tuple %v542
    %544 = xla_tuple %543
    %545 = xla_tuple %v542
    %s546 = scalar_lea.vmem [#allocation12], 176
    %v547 = vpack.c.bf16 0.0, %v542
    %s549 = ssub.s32 16, 1
    %550 = vst [vmem:[%s546] sm:%s549] %v547
    %s551 = scalar_lea.vmem [#allocation4], 360
    %v552 = vld [vmem:[%s551] sm:$0xff]
    %553 = xla_tuple %v552
    %554 = xla_tuple %553
    %555 = xla_tuple %v552
    %s556 = scalar_lea.vmem [#allocation12], 180
    %v557 = vpack.c.bf16 0.0, %v552
    %s559 = ssub.s32 16, 1
    %560 = vst [vmem:[%s556] sm:%s559] %v557
    %s561 = scalar_lea.vmem [#allocation4], 368
    %v562 = vld [vmem:[%s561] sm:$0xff]
    %563 = xla_tuple %v562
    %564 = xla_tuple %563
    %565 = xla_tuple %v562
    %s566 = scalar_lea.vmem [#allocation12], 184
    %v567 = vpack.c.bf16 0.0, %v562
    %s569 = ssub.s32 16, 1
    %570 = vst [vmem:[%s566] sm:%s569] %v567
    %s571 = scalar_lea.vmem [#allocation4], 376
    %v572 = vld [vmem:[%s571] sm:$0xff]
    %573 = xla_tuple %v572
    %574 = xla_tuple %573
    %575 = xla_tuple %v572
    %s576 = scalar_lea.vmem [#allocation12], 188
    %v577 = vpack.c.bf16 0.0, %v572
    %s579 = ssub.s32 16, 1
    %580 = vst [vmem:[%s576] sm:%s579] %v577
    %s581 = scalar_lea.vmem [#allocation4], 384
    %v582 = vld [vmem:[%s581] sm:$0xff]
    %583 = xla_tuple %v582
    %584 = xla_tuple %583
    %585 = xla_tuple %v582
    %s586 = scalar_lea.vmem [#allocation12], 192
    %v587 = vpack.c.bf16 0.0, %v582
    %s589 = ssub.s32 16, 1
    %590 = vst [vmem:[%s586] sm:%s589] %v587
    %s591 = scalar_lea.vmem [#allocation4], 392
    %v592 = vld [vmem:[%s591] sm:$0xff]
    %593 = xla_tuple %v592
    %594 = xla_tuple %593
    %595 = xla_tuple %v592
    %s596 = scalar_lea.vmem [#allocation12], 196
    %v597 = vpack.c.bf16 0.0, %v592
    %s599 = ssub.s32 16, 1
    %600 = vst [vmem:[%s596] sm:%s599] %v597
    %s601 = scalar_lea.vmem [#allocation4], 400
    %v602 = vld [vmem:[%s601] sm:$0xff]
    %603 = xla_tuple %v602
    %604 = xla_tuple %603
    %605 = xla_tuple %v602
    %s606 = scalar_lea.vmem [#allocation12], 200
    %v607 = vpack.c.bf16 0.0, %v602
    %s609 = ssub.s32 16, 1
    %610 = vst [vmem:[%s606] sm:%s609] %v607
    %s611 = scalar_lea.vmem [#allocation4], 408
    %v612 = vld [vmem:[%s611] sm:$0xff]
    %613 = xla_tuple %v612
    %614 = xla_tuple %613
    %615 = xla_tuple %v612
    %s616 = scalar_lea.vmem [#allocation12], 204
    %v617 = vpack.c.bf16 0.0, %v612
    %s619 = ssub.s32 16, 1
    %620 = vst [vmem:[%s616] sm:%s619] %v617
    %s621 = scalar_lea.vmem [#allocation4], 416
    %v622 = vld [vmem:[%s621] sm:$0xff]
    %623 = xla_tuple %v622
    %624 = xla_tuple %623
    %625 = xla_tuple %v622
    %s626 = scalar_lea.vmem [#allocation12], 208
    %v627 = vpack.c.bf16 0.0, %v622
    %s629 = ssub.s32 16, 1
    %630 = vst [vmem:[%s626] sm:%s629] %v627
    %s631 = scalar_lea.vmem [#allocation4], 424
    %v632 = vld [vmem:[%s631] sm:$0xff]
    %633 = xla_tuple %v632
    %634 = xla_tuple %633
    %635 = xla_tuple %v632
    %s636 = scalar_lea.vmem [#allocation12], 212
    %v637 = vpack.c.bf16 0.0, %v632
    %s639 = ssub.s32 16, 1
    %640 = vst [vmem:[%s636] sm:%s639] %v637
    %s641 = scalar_lea.vmem [#allocation4], 432
    %v642 = vld [vmem:[%s641] sm:$0xff]
    %643 = xla_tuple %v642
    %644 = xla_tuple %643
    %645 = xla_tuple %v642
    %s646 = scalar_lea.vmem [#allocation12], 216
    %v647 = vpack.c.bf16 0.0, %v642
    %s649 = ssub.s32 16, 1
    %650 = vst [vmem:[%s646] sm:%s649] %v647
    %s651 = scalar_lea.vmem [#allocation4], 440
    %v652 = vld [vmem:[%s651] sm:$0xff]
    %653 = xla_tuple %v652
    %654 = xla_tuple %653
    %655 = xla_tuple %v652
    %s656 = scalar_lea.vmem [#allocation12], 220
    %v657 = vpack.c.bf16 0.0, %v652
    %s659 = ssub.s32 16, 1
    %660 = vst [vmem:[%s656] sm:%s659] %v657
    %s661 = scalar_lea.vmem [#allocation4], 448
    %v662 = vld [vmem:[%s661] sm:$0xff]
    %663 = xla_tuple %v662
    %664 = xla_tuple %663
    %665 = xla_tuple %v662
    %s666 = scalar_lea.vmem [#allocation12], 224
    %v667 = vpack.c.bf16 0.0, %v662
    %s669 = ssub.s32 16, 1
    %670 = vst [vmem:[%s666] sm:%s669] %v667
    %s671 = scalar_lea.vmem [#allocation4], 456
    %v672 = vld [vmem:[%s671] sm:$0xff]
    %673 = xla_tuple %v672
    %674 = xla_tuple %673
    %675 = xla_tuple %v672
    %s676 = scalar_lea.vmem [#allocation12], 228
    %v677 = vpack.c.bf16 0.0, %v672
    %s679 = ssub.s32 16, 1
    %680 = vst [vmem:[%s676] sm:%s679] %v677
    %s681 = scalar_lea.vmem [#allocation4], 464
    %v682 = vld [vmem:[%s681] sm:$0xff]
    %683 = xla_tuple %v682
    %684 = xla_tuple %683
    %685 = xla_tuple %v682
    %s686 = scalar_lea.vmem [#allocation12], 232
    %v687 = vpack.c.bf16 0.0, %v682
    %s689 = ssub.s32 16, 1
    %690 = vst [vmem:[%s686] sm:%s689] %v687
    %s691 = scalar_lea.vmem [#allocation4], 472
    %v692 = vld [vmem:[%s691] sm:$0xff]
    %693 = xla_tuple %v692
    %694 = xla_tuple %693
    %695 = xla_tuple %v692
    %s696 = scalar_lea.vmem [#allocation12], 236
    %v697 = vpack.c.bf16 0.0, %v692
    %s699 = ssub.s32 16, 1
    %700 = vst [vmem:[%s696] sm:%s699] %v697
    %s701 = scalar_lea.vmem [#allocation4], 480
    %v702 = vld [vmem:[%s701] sm:$0xff]
    %703 = xla_tuple %v702
    %704 = xla_tuple %703
    %705 = xla_tuple %v702
    %s706 = scalar_lea.vmem [#allocation12], 240
    %v707 = vpack.c.bf16 0.0, %v702
    %s709 = ssub.s32 16, 1
    %710 = vst [vmem:[%s706] sm:%s709] %v707
    %s711 = scalar_lea.vmem [#allocation4], 488
    %v712 = vld [vmem:[%s711] sm:$0xff]
    %713 = xla_tuple %v712
    %714 = xla_tuple %713
    %715 = xla_tuple %v712
    %s716 = scalar_lea.vmem [#allocation12], 244
    %v717 = vpack.c.bf16 0.0, %v712
    %s719 = ssub.s32 16, 1
    %720 = vst [vmem:[%s716] sm:%s719] %v717
    %s721 = scalar_lea.vmem [#allocation4], 496
    %v722 = vld [vmem:[%s721] sm:$0xff]
    %723 = xla_tuple %v722
    %724 = xla_tuple %723
    %725 = xla_tuple %v722
    %s726 = scalar_lea.vmem [#allocation12], 248
    %v727 = vpack.c.bf16 0.0, %v722
    %s729 = ssub.s32 16, 1
    %730 = vst [vmem:[%s726] sm:%s729] %v727
    %s731 = scalar_lea.vmem [#allocation4], 504
    %v732 = vld [vmem:[%s731] sm:$0xff]
    %733 = xla_tuple %v732
    %734 = xla_tuple %733
    %735 = xla_tuple %v732
    %s736 = scalar_lea.vmem [#allocation12], 252
    %v737 = vpack.c.bf16 0.0, %v732
    %s739 = ssub.s32 16, 1
    %740 = vst [vmem:[%s736] sm:%s739] %v737
    %v742 = vlaneseq
    %v743 = vshrl.u32 %v742, 7
    %vm744 = vcmp.ge.s32.totalorder %v743, 1
    %v745 = vsel %vm744, 1, 0
    %v746 = vcvt.s32.f32 %v745
    %vm747 = vcmp.lt.s32.totalorder %v743, 7
    %v748 = vsel %vm747, 1, 0
    %v749 = vcvt.s32.f32 %v748
    %v750 = vld [vmem:[#allocation12] sm:$0xff]
    %v751 = vld [vmem:[#allocation12 + $0x8] sm:$0xff]
    %v752 = vld [vmem:[#allocation12 + $0x10] sm:$0xff]
    %v753 = vld [vmem:[#allocation12 + $0x18] sm:$0xff]
    %v754 = vld [vmem:[#allocation12 + $0x20] sm:$0xff]
    %v755 = vld [vmem:[#allocation12 + $0x28] sm:$0xff]
    %v756 = vld [vmem:[#allocation12 + $0x30] sm:$0xff]
    %v757 = vld [vmem:[#allocation12 + $0x38] sm:$0xff]
    %v758 = vld [vmem:[#allocation12 + $0x40] sm:$0xff]
    %v759 = vld [vmem:[#allocation12 + $0x48] sm:$0xff]
    %v760 = vld [vmem:[#allocation12 + $0x50] sm:$0xff]
    %v761 = vld [vmem:[#allocation12 + $0x58] sm:$0xff]
    %v762 = vld [vmem:[#allocation12 + $0x60] sm:$0xff]
    %v763 = vld [vmem:[#allocation12 + $0x68] sm:$0xff]
    %v764 = vld [vmem:[#allocation12 + $0x70] sm:$0xff]
    %v765 = vld [vmem:[#allocation12 + $0x78] sm:$0xff]
    %v766 = vld [vmem:[#allocation12 + $0x80] sm:$0xff]
    %v767 = vld [vmem:[#allocation12 + $0x88] sm:$0xff]
    %v768 = vld [vmem:[#allocation12 + $0x90] sm:$0xff]
    %v769 = vld [vmem:[#allocation12 + $0x98] sm:$0xff]
    %v770 = vld [vmem:[#allocation12 + $0xa0] sm:$0xff]
    %v771 = vld [vmem:[#allocation12 + $0xa8] sm:$0xff]
    %v772 = vld [vmem:[#allocation12 + $0xb0] sm:$0xff]
    %v773 = vld [vmem:[#allocation12 + $0xb8] sm:$0xff]
    %v774 = vld [vmem:[#allocation12 + $0xc0] sm:$0xff]
    %v775 = vld [vmem:[#allocation12 + $0xc8] sm:$0xff]
    %v776 = vld [vmem:[#allocation12 + $0xd0] sm:$0xff]
    %v777 = vld [vmem:[#allocation12 + $0xd8] sm:$0xff]
    %v778 = vld [vmem:[#allocation12 + $0xe0] sm:$0xff]
    %v779 = vld [vmem:[#allocation12 + $0xe8] sm:$0xff]
    %v780 = vld [vmem:[#allocation12 + $0xf0] sm:$0xff]
    %v781 = vld [vmem:[#allocation12 + $0xf8] sm:$0xff]
    %v782 = vunpack.c.l.bf16 %v750
    %v783 = vunpack.c.h.bf16 %v750
    %v784 = vunpack.c.l.bf16 %v751
    %v785 = vunpack.c.h.bf16 %v751
    %v786 = vunpack.c.l.bf16 %v752
    %v787 = vunpack.c.h.bf16 %v752
    %v788 = vunpack.c.l.bf16 %v753
    %v789 = vunpack.c.h.bf16 %v753
    %v790 = vunpack.c.l.bf16 %v754
    %v791 = vunpack.c.h.bf16 %v754
    %v792 = vunpack.c.l.bf16 %v755
    %v793 = vunpack.c.h.bf16 %v755
    %v794 = vunpack.c.l.bf16 %v756
    %v795 = vunpack.c.h.bf16 %v756
    %v796 = vunpack.c.l.bf16 %v757
    %v797 = vunpack.c.h.bf16 %v757
    %v798 = vunpack.c.l.bf16 %v758
    %v799 = vunpack.c.h.bf16 %v758
    %v800 = vunpack.c.l.bf16 %v759
    %v801 = vunpack.c.h.bf16 %v759
    %v802 = vunpack.c.l.bf16 %v760
    %v803 = vunpack.c.h.bf16 %v760
    %v804 = vunpack.c.l.bf16 %v761
    %v805 = vunpack.c.h.bf16 %v761
    %v806 = vunpack.c.l.bf16 %v762
    %v807 = vunpack.c.h.bf16 %v762
    %v808 = vunpack.c.l.bf16 %v763
    %v809 = vunpack.c.h.bf16 %v763
    %v810 = vunpack.c.l.bf16 %v764
    %v811 = vunpack.c.h.bf16 %v764
    %v812 = vunpack.c.l.bf16 %v765
    %v813 = vunpack.c.h.bf16 %v765
    %v814 = vunpack.c.l.bf16 %v766
    %v815 = vunpack.c.h.bf16 %v766
    %v816 = vunpack.c.l.bf16 %v767
    %v817 = vunpack.c.h.bf16 %v767
    %v818 = vunpack.c.l.bf16 %v768
    %v819 = vunpack.c.h.bf16 %v768
    %v820 = vunpack.c.l.bf16 %v769
    %v821 = vunpack.c.h.bf16 %v769
    %v822 = vunpack.c.l.bf16 %v770
    %v823 = vunpack.c.h.bf16 %v770
    %v824 = vunpack.c.l.bf16 %v771
    %v825 = vunpack.c.h.bf16 %v771
    %v826 = vunpack.c.l.bf16 %v772
    %v827 = vunpack.c.h.bf16 %v772
    %v828 = vunpack.c.l.bf16 %v773
    %v829 = vunpack.c.h.bf16 %v773
    %v830 = vunpack.c.l.bf16 %v774
    %v831 = vunpack.c.h.bf16 %v774
    %v832 = vunpack.c.l.bf16 %v775
    %v833 = vunpack.c.h.bf16 %v775
    %v834 = vunpack.c.l.bf16 %v776
    %v835 = vunpack.c.h.bf16 %v776
    %v836 = vunpack.c.l.bf16 %v777
    %v837 = vunpack.c.h.bf16 %v777
    %v838 = vunpack.c.l.bf16 %v778
    %v839 = vunpack.c.h.bf16 %v778
    %v840 = vunpack.c.l.bf16 %v779
    %v841 = vunpack.c.h.bf16 %v779
    %v842 = vunpack.c.l.bf16 %v780
    %v843 = vunpack.c.h.bf16 %v780
    %v844 = vunpack.c.l.bf16 %v781
    %v845 = vunpack.c.h.bf16 %v781
    %v846 = vld [vmem:[#allocation6] sm:$0x77]
    %v847 = vld [vmem:[#allocation6 + $0x8] sm:$0x77]
    %v848 = vld [vmem:[#allocation6 + $0x10] sm:$0x77]
    %v849 = vld [vmem:[#allocation6 + $0x18] sm:$0x77]
    %v850 = vld [vmem:[#allocation6 + $0x20] sm:$0x77]
    %v851 = vld [vmem:[#allocation6 + $0x28] sm:$0x77]
    %v852 = vrot.slane %v782, 7
    %v853 = vrot.slane %v783, 7
    %v854 = vrot.slane %v784, 7
    %v855 = vrot.slane %v785, 7
    %v856 = vrot.slane %v786, 7
    %v857 = vrot.slane %v787, 7
    %v858 = vrot.slane %v788, 7
    %v859 = vrot.slane %v789, 7
    %v860 = vrot.slane %v790, 7
    %v861 = vrot.slane %v791, 7
    %v862 = vrot.slane %v792, 7
    %v863 = vrot.slane %v793, 7
    %v864 = vrot.slane %v794, 7
    %v865 = vrot.slane %v795, 7
    %v866 = vrot.slane %v796, 7
    %v867 = vrot.slane %v797, 7
    %v868 = vrot.slane %v798, 7
    %v869 = vrot.slane %v799, 7
    %v870 = vrot.slane %v800, 7
    %v871 = vrot.slane %v801, 7
    %v872 = vrot.slane %v802, 7
    %v873 = vrot.slane %v803, 7
    %v874 = vrot.slane %v804, 7
    %v875 = vrot.slane %v805, 7
    %v876 = vrot.slane %v806, 7
    %v877 = vrot.slane %v807, 7
    %v878 = vrot.slane %v808, 7
    %v879 = vrot.slane %v809, 7
    %v880 = vrot.slane %v810, 7
    %v881 = vrot.slane %v811, 7
    %v882 = vrot.slane %v812, 7
    %v883 = vrot.slane %v813, 7
    %v884 = vrot.slane %v814, 7
    %v885 = vrot.slane %v815, 7
    %v886 = vrot.slane %v816, 7
    %v887 = vrot.slane %v817, 7
    %v888 = vrot.slane %v818, 7
    %v889 = vrot.slane %v819, 7
    %v890 = vrot.slane %v820, 7
    %v891 = vrot.slane %v821, 7
    %v892 = vrot.slane %v822, 7
    %v893 = vrot.slane %v823, 7
    %v894 = vrot.slane %v824, 7
    %v895 = vrot.slane %v825, 7
    %v896 = vrot.slane %v826, 7
    %v897 = vrot.slane %v827, 7
    %v898 = vrot.slane %v828, 7
    %v899 = vrot.slane %v829, 7
    %v900 = vrot.slane %v830, 7
    %v901 = vrot.slane %v831, 7
    %v902 = vrot.slane %v832, 7
    %v903 = vrot.slane %v833, 7
    %v904 = vrot.slane %v834, 7
    %v905 = vrot.slane %v835, 7
    %v906 = vrot.slane %v836, 7
    %v907 = vrot.slane %v837, 7
    %v908 = vrot.slane %v838, 7
    %v909 = vrot.slane %v839, 7
    %v910 = vrot.slane %v840, 7
    %v911 = vrot.slane %v841, 7
    %v912 = vrot.slane %v842, 7
    %v913 = vrot.slane %v843, 7
    %v914 = vrot.slane %v844, 7
    %v915 = vrot.slane %v845, 7
    %v916 = vmul.f32 %v852, %v746
    %v917 = vmul.f32 %v853, %v746
    %v918 = vmul.f32 %v854, %v746
    %v919 = vmul.f32 %v855, %v746
    %v920 = vmul.f32 %v856, %v746
    %v921 = vmul.f32 %v857, %v746
    %v922 = vmul.f32 %v858, %v746
    %v923 = vmul.f32 %v859, %v746
    %v924 = vmul.f32 %v860, %v746
    %v925 = vmul.f32 %v861, %v746
    %v926 = vmul.f32 %v862, %v746
    %v927 = vmul.f32 %v863, %v746
    %v928 = vmul.f32 %v864, %v746
    %v929 = vmul.f32 %v865, %v746
    %v930 = vmul.f32 %v866, %v746
    %v931 = vmul.f32 %v867, %v746
    %v932 = vmul.f32 %v868, %v746
    %v933 = vmul.f32 %v869, %v746
    %v934 = vmul.f32 %v870, %v746
    %v935 = vmul.f32 %v871, %v746
    %v936 = vmul.f32 %v872, %v746
    %v937 = vmul.f32 %v873, %v746
    %v938 = vmul.f32 %v874, %v746
    %v939 = vmul.f32 %v875, %v746
    %v940 = vmul.f32 %v876, %v746
    %v941 = vmul.f32 %v877, %v746
    %v942 = vmul.f32 %v878, %v746
    %v943 = vmul.f32 %v879, %v746
    %v944 = vmul.f32 %v880, %v746
    %v945 = vmul.f32 %v881, %v746
    %v946 = vmul.f32 %v882, %v746
    %v947 = vmul.f32 %v883, %v746
    %v948 = vmul.f32 %v884, %v746
    %v949 = vmul.f32 %v885, %v746
    %v950 = vmul.f32 %v886, %v746
    %v951 = vmul.f32 %v887, %v746
    %v952 = vmul.f32 %v888, %v746
    %v953 = vmul.f32 %v889, %v746
    %v954 = vmul.f32 %v890, %v746
    %v955 = vmul.f32 %v891, %v746
    %v956 = vmul.f32 %v892, %v746
    %v957 = vmul.f32 %v893, %v746
    %v958 = vmul.f32 %v894, %v746
    %v959 = vmul.f32 %v895, %v746
    %v960 = vmul.f32 %v896, %v746
    %v961 = vmul.f32 %v897, %v746
    %v962 = vmul.f32 %v898, %v746
    %v963 = vmul.f32 %v899, %v746
    %v964 = vmul.f32 %v900, %v746
    %v965 = vmul.f32 %v901, %v746
    %v966 = vmul.f32 %v902, %v746
    %v967 = vmul.f32 %v903, %v746
    %v968 = vmul.f32 %v904, %v746
    %v969 = vmul.f32 %v905, %v746
    %v970 = vmul.f32 %v906, %v746
    %v971 = vmul.f32 %v907, %v746
    %v972 = vmul.f32 %v908, %v746
    %v973 = vmul.f32 %v909, %v746
    %v974 = vmul.f32 %v910, %v746
    %v975 = vmul.f32 %v911, %v746
    %v976 = vmul.f32 %v912, %v746
    %v977 = vmul.f32 %v913, %v746
    %v978 = vmul.f32 %v914, %v746
    %v979 = vmul.f32 %v915, %v746
    %v980 = vrot.slane %v782, 1
    %v981 = vrot.slane %v783, 1
    %v982 = vrot.slane %v784, 1
    %v983 = vrot.slane %v785, 1
    %v984 = vrot.slane %v786, 1
    %v985 = vrot.slane %v787, 1
    %v986 = vrot.slane %v788, 1
    %v987 = vrot.slane %v789, 1
    %v988 = vrot.slane %v790, 1
    %v989 = vrot.slane %v791, 1
    %v990 = vrot.slane %v792, 1
    %v991 = vrot.slane %v793, 1
    %v992 = vrot.slane %v794, 1
    %v993 = vrot.slane %v795, 1
    %v994 = vrot.slane %v796, 1
    %v995 = vrot.slane %v797, 1
    %v996 = vrot.slane %v798, 1
    %v997 = vrot.slane %v799, 1
    %v998 = vrot.slane %v800, 1
    %v999 = vrot.slane %v801, 1
    %v1000 = vrot.slane %v802, 1
    %v1001 = vrot.slane %v803, 1
    %v1002 = vrot.slane %v804, 1
    %v1003 = vrot.slane %v805, 1
    %v1004 = vrot.slane %v806, 1
    %v1005 = vrot.slane %v807, 1
    %v1006 = vrot.slane %v808, 1
    %v1007 = vrot.slane %v809, 1
    %v1008 = vrot.slane %v810, 1
    %v1009 = vrot.slane %v811, 1
    %v1010 = vrot.slane %v812, 1
    %v1011 = vrot.slane %v813, 1
    %v1012 = vrot.slane %v814, 1
    %v1013 = vrot.slane %v815, 1
    %v1014 = vrot.slane %v816, 1
    %v1015 = vrot.slane %v817, 1
    %v1016 = vrot.slane %v818, 1
    %v1017 = vrot.slane %v819, 1
    %v1018 = vrot.slane %v820, 1
    %v1019 = vrot.slane %v821, 1
    %v1020 = vrot.slane %v822, 1
    %v1021 = vrot.slane %v823, 1
    %v1022 = vrot.slane %v824, 1
    %v1023 = vrot.slane %v825, 1
    %v1024 = vrot.slane %v826, 1
    %v1025 = vrot.slane %v827, 1
    %v1026 = vrot.slane %v828, 1
    %v1027 = vrot.slane %v829, 1
    %v1028 = vrot.slane %v830, 1
    %v1029 = vrot.slane %v831, 1
    %v1030 = vrot.slane %v832, 1
    %v1031 = vrot.slane %v833, 1
    %v1032 = vrot.slane %v834, 1
    %v1033 = vrot.slane %v835, 1
    %v1034 = vrot.slane %v836, 1
    %v1035 = vrot.slane %v837, 1
    %v1036 = vrot.slane %v838, 1
    %v1037 = vrot.slane %v839, 1
    %v1038 = vrot.slane %v840, 1
    %v1039 = vrot.slane %v841, 1
    %v1040 = vrot.slane %v842, 1
    %v1041 = vrot.slane %v843, 1
    %v1042 = vrot.slane %v844, 1
    %v1043 = vrot.slane %v845, 1
    %v1044 = vmul.f32 %v980, %v749
    %v1045 = vmul.f32 %v981, %v749
    %v1046 = vmul.f32 %v982, %v749
    %v1047 = vmul.f32 %v983, %v749
    %v1048 = vmul.f32 %v984, %v749
    %v1049 = vmul.f32 %v985, %v749
    %v1050 = vmul.f32 %v986, %v749
    %v1051 = vmul.f32 %v987, %v749
    %v1052 = vmul.f32 %v988, %v749
    %v1053 = vmul.f32 %v989, %v749
    %v1054 = vmul.f32 %v990, %v749
    %v1055 = vmul.f32 %v991, %v749
    %v1056 = vmul.f32 %v992, %v749
    %v1057 = vmul.f32 %v993, %v749
    %v1058 = vmul.f32 %v994, %v749
    %v1059 = vmul.f32 %v995, %v749
    %v1060 = vmul.f32 %v996, %v749
    %v1061 = vmul.f32 %v997, %v749
    %v1062 = vmul.f32 %v998, %v749
    %v1063 = vmul.f32 %v999, %v749
    %v1064 = vmul.f32 %v1000, %v749
    %v1065 = vmul.f32 %v1001, %v749
    %v1066 = vmul.f32 %v1002, %v749
    %v1067 = vmul.f32 %v1003, %v749
    %v1068 = vmul.f32 %v1004, %v749
    %v1069 = vmul.f32 %v1005, %v749
    %v1070 = vmul.f32 %v1006, %v749
    %v1071 = vmul.f32 %v1007, %v749
    %v1072 = vmul.f32 %v1008, %v749
    %v1073 = vmul.f32 %v1009, %v749
    %v1074 = vmul.f32 %v1010, %v749
    %v1075 = vmul.f32 %v1011, %v749
    %v1076 = vmul.f32 %v1012, %v749
    %v1077 = vmul.f32 %v1013, %v749
    %v1078 = vmul.f32 %v1014, %v749
    %v1079 = vmul.f32 %v1015, %v749
    %v1080 = vmul.f32 %v1016, %v749
    %v1081 = vmul.f32 %v1017, %v749
    %v1082 = vmul.f32 %v1018, %v749
    %v1083 = vmul.f32 %v1019, %v749
    %v1084 = vmul.f32 %v1020, %v749
    %v1085 = vmul.f32 %v1021, %v749
    %v1086 = vmul.f32 %v1022, %v749
    %v1087 = vmul.f32 %v1023, %v749
    %v1088 = vmul.f32 %v1024, %v749
    %v1089 = vmul.f32 %v1025, %v749
    %v1090 = vmul.f32 %v1026, %v749
    %v1091 = vmul.f32 %v1027, %v749
    %v1092 = vmul.f32 %v1028, %v749
    %v1093 = vmul.f32 %v1029, %v749
    %v1094 = vmul.f32 %v1030, %v749
    %v1095 = vmul.f32 %v1031, %v749
    %v1096 = vmul.f32 %v1032, %v749
    %v1097 = vmul.f32 %v1033, %v749
    %v1098 = vmul.f32 %v1034, %v749
    %v1099 = vmul.f32 %v1035, %v749
    %v1100 = vmul.f32 %v1036, %v749
    %v1101 = vmul.f32 %v1037, %v749
    %v1102 = vmul.f32 %v1038, %v749
    %v1103 = vmul.f32 %v1039, %v749
    %v1104 = vmul.f32 %v1040, %v749
    %v1105 = vmul.f32 %v1041, %v749
    %v1106 = vmul.f32 %v1042, %v749
    %v1107 = vmul.f32 %v1043, %v749
    %v1110 = vperm.slane %v848, 0
    %v1111 = vperm.slane %v848, 4
    %v1112 = vperm.slane %v849, 0
    %v1113 = vperm.slane %v849, 4
    %v1118 = vperm.slane %v1110, 0
    %v1119 = vperm.slane %v1111, 0
    %v1120 = vperm.slane %v1112, 0
    %v1121 = vperm.slane %v1113, 0
    %v1122 = vmul.f32 %v916, %v1118
    %v1123 = vmul.f32 %v917, %v1119
    %v1124 = vmul.f32 %v918, %v1120
    %v1125 = vmul.f32 %v919, %v1121
    %v1126 = vmul.f32 %v920, %v1118
    %v1127 = vmul.f32 %v921, %v1119
    %v1128 = vmul.f32 %v922, %v1120
    %v1129 = vmul.f32 %v923, %v1121
    %v1130 = vmul.f32 %v924, %v1118
    %v1131 = vmul.f32 %v925, %v1119
    %v1132 = vmul.f32 %v926, %v1120
    %v1133 = vmul.f32 %v927, %v1121
    %v1134 = vmul.f32 %v928, %v1118
    %v1135 = vmul.f32 %v929, %v1119
    %v1136 = vmul.f32 %v930, %v1120
    %v1137 = vmul.f32 %v931, %v1121
    %v1138 = vmul.f32 %v932, %v1118
    %v1139 = vmul.f32 %v933, %v1119
    %v1140 = vmul.f32 %v934, %v1120
    %v1141 = vmul.f32 %v935, %v1121
    %v1142 = vmul.f32 %v936, %v1118
    %v1143 = vmul.f32 %v937, %v1119
    %v1144 = vmul.f32 %v938, %v1120
    %v1145 = vmul.f32 %v939, %v1121
    %v1146 = vmul.f32 %v940, %v1118
    %v1147 = vmul.f32 %v941, %v1119
    %v1148 = vmul.f32 %v942, %v1120
    %v1149 = vmul.f32 %v943, %v1121
    %v1150 = vmul.f32 %v944, %v1118
    %v1151 = vmul.f32 %v945, %v1119
    %v1152 = vmul.f32 %v946, %v1120
    %v1153 = vmul.f32 %v947, %v1121
    %v1154 = vmul.f32 %v948, %v1118
    %v1155 = vmul.f32 %v949, %v1119
    %v1156 = vmul.f32 %v950, %v1120
    %v1157 = vmul.f32 %v951, %v1121
    %v1158 = vmul.f32 %v952, %v1118
    %v1159 = vmul.f32 %v953, %v1119
    %v1160 = vmul.f32 %v954, %v1120
    %v1161 = vmul.f32 %v955, %v1121
    %v1162 = vmul.f32 %v956, %v1118
    %v1163 = vmul.f32 %v957, %v1119
    %v1164 = vmul.f32 %v958, %v1120
    %v1165 = vmul.f32 %v959, %v1121
    %v1166 = vmul.f32 %v960, %v1118
    %v1167 = vmul.f32 %v961, %v1119
    %v1168 = vmul.f32 %v962, %v1120
    %v1169 = vmul.f32 %v963, %v1121
    %v1170 = vmul.f32 %v964, %v1118
    %v1171 = vmul.f32 %v965, %v1119
    %v1172 = vmul.f32 %v966, %v1120
    %v1173 = vmul.f32 %v967, %v1121
    %v1174 = vmul.f32 %v968, %v1118
    %v1175 = vmul.f32 %v969, %v1119
    %v1176 = vmul.f32 %v970, %v1120
    %v1177 = vmul.f32 %v971, %v1121
    %v1178 = vmul.f32 %v972, %v1118
    %v1179 = vmul.f32 %v973, %v1119
    %v1180 = vmul.f32 %v974, %v1120
    %v1181 = vmul.f32 %v975, %v1121
    %v1182 = vmul.f32 %v976, %v1118
    %v1183 = vmul.f32 %v977, %v1119
    %v1184 = vmul.f32 %v978, %v1120
    %v1185 = vmul.f32 %v979, %v1121
    %v1186 = vperm.slane %v848, 1
    %v1187 = vperm.slane %v848, 5
    %v1188 = vperm.slane %v849, 1
    %v1189 = vperm.slane %v849, 5
    %v1194 = vperm.slane %v1186, 1
    %v1195 = vperm.slane %v1187, 1
    %v1196 = vperm.slane %v1188, 1
    %v1197 = vperm.slane %v1189, 1
    %v1198 = vmul.f32 %v782, %v1194
    %v1199 = vmul.f32 %v783, %v1195
    %v1200 = vmul.f32 %v784, %v1196
    %v1201 = vmul.f32 %v785, %v1197
    %v1202 = vmul.f32 %v786, %v1194
    %v1203 = vmul.f32 %v787, %v1195
    %v1204 = vmul.f32 %v788, %v1196
    %v1205 = vmul.f32 %v789, %v1197
    %v1206 = vmul.f32 %v790, %v1194
    %v1207 = vmul.f32 %v791, %v1195
    %v1208 = vmul.f32 %v792, %v1196
    %v1209 = vmul.f32 %v793, %v1197
    %v1210 = vmul.f32 %v794, %v1194
    %v1211 = vmul.f32 %v795, %v1195
    %v1212 = vmul.f32 %v796, %v1196
    %v1213 = vmul.f32 %v797, %v1197
    %v1214 = vmul.f32 %v798, %v1194
    %v1215 = vmul.f32 %v799, %v1195
    %v1216 = vmul.f32 %v800, %v1196
    %v1217 = vmul.f32 %v801, %v1197
    %v1218 = vmul.f32 %v802, %v1194
    %v1219 = vmul.f32 %v803, %v1195
    %v1220 = vmul.f32 %v804, %v1196
    %v1221 = vmul.f32 %v805, %v1197
    %v1222 = vmul.f32 %v806, %v1194
    %v1223 = vmul.f32 %v807, %v1195
    %v1224 = vmul.f32 %v808, %v1196
    %v1225 = vmul.f32 %v809, %v1197
    %v1226 = vmul.f32 %v810, %v1194
    %v1227 = vmul.f32 %v811, %v1195
    %v1228 = vmul.f32 %v812, %v1196
    %v1229 = vmul.f32 %v813, %v1197
    %v1230 = vmul.f32 %v814, %v1194
    %v1231 = vmul.f32 %v815, %v1195
    %v1232 = vmul.f32 %v816, %v1196
    %v1233 = vmul.f32 %v817, %v1197
    %v1234 = vmul.f32 %v818, %v1194
    %v1235 = vmul.f32 %v819, %v1195
    %v1236 = vmul.f32 %v820, %v1196
    %v1237 = vmul.f32 %v821, %v1197
    %v1238 = vmul.f32 %v822, %v1194
    %v1239 = vmul.f32 %v823, %v1195
    %v1240 = vmul.f32 %v824, %v1196
    %v1241 = vmul.f32 %v825, %v1197
    %v1242 = vmul.f32 %v826, %v1194
    %v1243 = vmul.f32 %v827, %v1195
    %v1244 = vmul.f32 %v828, %v1196
    %v1245 = vmul.f32 %v829, %v1197
    %v1246 = vmul.f32 %v830, %v1194
    %v1247 = vmul.f32 %v831, %v1195
    %v1248 = vmul.f32 %v832, %v1196
    %v1249 = vmul.f32 %v833, %v1197
    %v1250 = vmul.f32 %v834, %v1194
    %v1251 = vmul.f32 %v835, %v1195
    %v1252 = vmul.f32 %v836, %v1196
    %v1253 = vmul.f32 %v837, %v1197
    %v1254 = vmul.f32 %v838, %v1194
    %v1255 = vmul.f32 %v839, %v1195
    %v1256 = vmul.f32 %v840, %v1196
    %v1257 = vmul.f32 %v841, %v1197
    %v1258 = vmul.f32 %v842, %v1194
    %v1259 = vmul.f32 %v843, %v1195
    %v1260 = vmul.f32 %v844, %v1196
    %v1261 = vmul.f32 %v845, %v1197
    %v1262 = vadd.f32 %v1122, %v1198
    %v1263 = vadd.f32 %v1123, %v1199
    %v1264 = vadd.f32 %v1124, %v1200
    %v1265 = vadd.f32 %v1125, %v1201
    %v1266 = vadd.f32 %v1126, %v1202
    %v1267 = vadd.f32 %v1127, %v1203
    %v1268 = vadd.f32 %v1128, %v1204
    %v1269 = vadd.f32 %v1129, %v1205
    %v1270 = vadd.f32 %v1130, %v1206
    %v1271 = vadd.f32 %v1131, %v1207
    %v1272 = vadd.f32 %v1132, %v1208
    %v1273 = vadd.f32 %v1133, %v1209
    %v1274 = vadd.f32 %v1134, %v1210
    %v1275 = vadd.f32 %v1135, %v1211
    %v1276 = vadd.f32 %v1136, %v1212
    %v1277 = vadd.f32 %v1137, %v1213
    %v1278 = vadd.f32 %v1138, %v1214
    %v1279 = vadd.f32 %v1139, %v1215
    %v1280 = vadd.f32 %v1140, %v1216
    %v1281 = vadd.f32 %v1141, %v1217
    %v1282 = vadd.f32 %v1142, %v1218
    %v1283 = vadd.f32 %v1143, %v1219
    %v1284 = vadd.f32 %v1144, %v1220
    %v1285 = vadd.f32 %v1145, %v1221
    %v1286 = vadd.f32 %v1146, %v1222
    %v1287 = vadd.f32 %v1147, %v1223
    %v1288 = vadd.f32 %v1148, %v1224
    %v1289 = vadd.f32 %v1149, %v1225
    %v1290 = vadd.f32 %v1150, %v1226
    %v1291 = vadd.f32 %v1151, %v1227
    %v1292 = vadd.f32 %v1152, %v1228
    %v1293 = vadd.f32 %v1153, %v1229
    %v1294 = vadd.f32 %v1154, %v1230
    %v1295 = vadd.f32 %v1155, %v1231
    %v1296 = vadd.f32 %v1156, %v1232
    %v1297 = vadd.f32 %v1157, %v1233
    %v1298 = vadd.f32 %v1158, %v1234
    %v1299 = vadd.f32 %v1159, %v1235
    %v1300 = vadd.f32 %v1160, %v1236
    %v1301 = vadd.f32 %v1161, %v1237
    %v1302 = vadd.f32 %v1162, %v1238
    %v1303 = vadd.f32 %v1163, %v1239
    %v1304 = vadd.f32 %v1164, %v1240
    %v1305 = vadd.f32 %v1165, %v1241
    %v1306 = vadd.f32 %v1166, %v1242
    %v1307 = vadd.f32 %v1167, %v1243
    %v1308 = vadd.f32 %v1168, %v1244
    %v1309 = vadd.f32 %v1169, %v1245
    %v1310 = vadd.f32 %v1170, %v1246
    %v1311 = vadd.f32 %v1171, %v1247
    %v1312 = vadd.f32 %v1172, %v1248
    %v1313 = vadd.f32 %v1173, %v1249
    %v1314 = vadd.f32 %v1174, %v1250
    %v1315 = vadd.f32 %v1175, %v1251
    %v1316 = vadd.f32 %v1176, %v1252
    %v1317 = vadd.f32 %v1177, %v1253
    %v1318 = vadd.f32 %v1178, %v1254
    %v1319 = vadd.f32 %v1179, %v1255
    %v1320 = vadd.f32 %v1180, %v1256
    %v1321 = vadd.f32 %v1181, %v1257
    %v1322 = vadd.f32 %v1182, %v1258
    %v1323 = vadd.f32 %v1183, %v1259
    %v1324 = vadd.f32 %v1184, %v1260
    %v1325 = vadd.f32 %v1185, %v1261
    %v1326 = vperm.slane %v848, 2
    %v1327 = vperm.slane %v848, 6
    %v1328 = vperm.slane %v849, 2
    %v1329 = vperm.slane %v849, 6
    %v1334 = vperm.slane %v1326, 2
    %v1335 = vperm.slane %v1327, 2
    %v1336 = vperm.slane %v1328, 2
    %v1337 = vperm.slane %v1329, 2
    %v1338 = vmul.f32 %v1044, %v1334
    %v1339 = vmul.f32 %v1045, %v1335
    %v1340 = vmul.f32 %v1046, %v1336
    %v1341 = vmul.f32 %v1047, %v1337
    %v1342 = vmul.f32 %v1048, %v1334
    %v1343 = vmul.f32 %v1049, %v1335
    %v1344 = vmul.f32 %v1050, %v1336
    %v1345 = vmul.f32 %v1051, %v1337
    %v1346 = vmul.f32 %v1052, %v1334
    %v1347 = vmul.f32 %v1053, %v1335
    %v1348 = vmul.f32 %v1054, %v1336
    %v1349 = vmul.f32 %v1055, %v1337
    %v1350 = vmul.f32 %v1056, %v1334
    %v1351 = vmul.f32 %v1057, %v1335
    %v1352 = vmul.f32 %v1058, %v1336
    %v1353 = vmul.f32 %v1059, %v1337
    %v1354 = vmul.f32 %v1060, %v1334
    %v1355 = vmul.f32 %v1061, %v1335
    %v1356 = vmul.f32 %v1062, %v1336
    %v1357 = vmul.f32 %v1063, %v1337
    %v1358 = vmul.f32 %v1064, %v1334
    %v1359 = vmul.f32 %v1065, %v1335
    %v1360 = vmul.f32 %v1066, %v1336
    %v1361 = vmul.f32 %v1067, %v1337
    %v1362 = vmul.f32 %v1068, %v1334
    %v1363 = vmul.f32 %v1069, %v1335
    %v1364 = vmul.f32 %v1070, %v1336
    %v1365 = vmul.f32 %v1071, %v1337
    %v1366 = vmul.f32 %v1072, %v1334
    %v1367 = vmul.f32 %v1073, %v1335
    %v1368 = vmul.f32 %v1074, %v1336
    %v1369 = vmul.f32 %v1075, %v1337
    %v1370 = vmul.f32 %v1076, %v1334
    %v1371 = vmul.f32 %v1077, %v1335
    %v1372 = vmul.f32 %v1078, %v1336
    %v1373 = vmul.f32 %v1079, %v1337
    %v1374 = vmul.f32 %v1080, %v1334
    %v1375 = vmul.f32 %v1081, %v1335
    %v1376 = vmul.f32 %v1082, %v1336
    %v1377 = vmul.f32 %v1083, %v1337
    %v1378 = vmul.f32 %v1084, %v1334
    %v1379 = vmul.f32 %v1085, %v1335
    %v1380 = vmul.f32 %v1086, %v1336
    %v1381 = vmul.f32 %v1087, %v1337
    %v1382 = vmul.f32 %v1088, %v1334
    %v1383 = vmul.f32 %v1089, %v1335
    %v1384 = vmul.f32 %v1090, %v1336
    %v1385 = vmul.f32 %v1091, %v1337
    %v1386 = vmul.f32 %v1092, %v1334
    %v1387 = vmul.f32 %v1093, %v1335
    %v1388 = vmul.f32 %v1094, %v1336
    %v1389 = vmul.f32 %v1095, %v1337
    %v1390 = vmul.f32 %v1096, %v1334
    %v1391 = vmul.f32 %v1097, %v1335
    %v1392 = vmul.f32 %v1098, %v1336
    %v1393 = vmul.f32 %v1099, %v1337
    %v1394 = vmul.f32 %v1100, %v1334
    %v1395 = vmul.f32 %v1101, %v1335
    %v1396 = vmul.f32 %v1102, %v1336
    %v1397 = vmul.f32 %v1103, %v1337
    %v1398 = vmul.f32 %v1104, %v1334
    %v1399 = vmul.f32 %v1105, %v1335
    %v1400 = vmul.f32 %v1106, %v1336
    %v1401 = vmul.f32 %v1107, %v1337
    %v1402 = vadd.f32 %v1262, %v1338
    %v1403 = vadd.f32 %v1263, %v1339
    %v1404 = vadd.f32 %v1264, %v1340
    %v1405 = vadd.f32 %v1265, %v1341
    %v1406 = vadd.f32 %v1266, %v1342
    %v1407 = vadd.f32 %v1267, %v1343
    %v1408 = vadd.f32 %v1268, %v1344
    %v1409 = vadd.f32 %v1269, %v1345
    %v1410 = vadd.f32 %v1270, %v1346
    %v1411 = vadd.f32 %v1271, %v1347
    %v1412 = vadd.f32 %v1272, %v1348
    %v1413 = vadd.f32 %v1273, %v1349
    %v1414 = vadd.f32 %v1274, %v1350
    %v1415 = vadd.f32 %v1275, %v1351
    %v1416 = vadd.f32 %v1276, %v1352
    %v1417 = vadd.f32 %v1277, %v1353
    %v1418 = vadd.f32 %v1278, %v1354
    %v1419 = vadd.f32 %v1279, %v1355
    %v1420 = vadd.f32 %v1280, %v1356
    %v1421 = vadd.f32 %v1281, %v1357
    %v1422 = vadd.f32 %v1282, %v1358
    %v1423 = vadd.f32 %v1283, %v1359
    %v1424 = vadd.f32 %v1284, %v1360
    %v1425 = vadd.f32 %v1285, %v1361
    %v1426 = vadd.f32 %v1286, %v1362
    %v1427 = vadd.f32 %v1287, %v1363
    %v1428 = vadd.f32 %v1288, %v1364
    %v1429 = vadd.f32 %v1289, %v1365
    %v1430 = vadd.f32 %v1290, %v1366
    %v1431 = vadd.f32 %v1291, %v1367
    %v1432 = vadd.f32 %v1292, %v1368
    %v1433 = vadd.f32 %v1293, %v1369
    %v1434 = vadd.f32 %v1294, %v1370
    %v1435 = vadd.f32 %v1295, %v1371
    %v1436 = vadd.f32 %v1296, %v1372
    %v1437 = vadd.f32 %v1297, %v1373
    %v1438 = vadd.f32 %v1298, %v1374
    %v1439 = vadd.f32 %v1299, %v1375
    %v1440 = vadd.f32 %v1300, %v1376
    %v1441 = vadd.f32 %v1301, %v1377
    %v1442 = vadd.f32 %v1302, %v1378
    %v1443 = vadd.f32 %v1303, %v1379
    %v1444 = vadd.f32 %v1304, %v1380
    %v1445 = vadd.f32 %v1305, %v1381
    %v1446 = vadd.f32 %v1306, %v1382
    %v1447 = vadd.f32 %v1307, %v1383
    %v1448 = vadd.f32 %v1308, %v1384
    %v1449 = vadd.f32 %v1309, %v1385
    %v1450 = vadd.f32 %v1310, %v1386
    %v1451 = vadd.f32 %v1311, %v1387
    %v1452 = vadd.f32 %v1312, %v1388
    %v1453 = vadd.f32 %v1313, %v1389
    %v1454 = vadd.f32 %v1314, %v1390
    %v1455 = vadd.f32 %v1315, %v1391
    %v1456 = vadd.f32 %v1316, %v1392
    %v1457 = vadd.f32 %v1317, %v1393
    %v1458 = vadd.f32 %v1318, %v1394
    %v1459 = vadd.f32 %v1319, %v1395
    %v1460 = vadd.f32 %v1320, %v1396
    %v1461 = vadd.f32 %v1321, %v1397
    %v1462 = vadd.f32 %v1322, %v1398
    %v1463 = vadd.f32 %v1323, %v1399
    %v1464 = vadd.f32 %v1324, %v1400
    %v1465 = vadd.f32 %v1325, %v1401
    %1466 = vst [vmem:[#allocation2] sm:$0xff] %v1402
    %1467 = vst [vmem:[#allocation2 + $0x8] sm:$0xff] %v1403
    %1468 = vst [vmem:[#allocation2 + $0x10] sm:$0xff] %v1404
    %vm1469 = vcmask 523264
    %1470 = vst.msk [vmem:[#allocation2 + $0x18] sm:$0xff] %vm1469, %v1405
    %1471 = vst [vmem:[#allocation2 + $0x20] sm:$0xff] %v1406
    %1472 = vst [vmem:[#allocation2 + $0x28] sm:$0xff] %v1407
    %1473 = vst [vmem:[#allocation2 + $0x30] sm:$0xff] %v1408
    %1474 = vst.msk [vmem:[#allocation2 + $0x38] sm:$0xff] %vm1469, %v1409
    %1475 = vst [vmem:[#allocation2 + $0x40] sm:$0xff] %v1410
    %1476 = vst [vmem:[#allocation2 + $0x48] sm:$0xff] %v1411
    %1477 = vst [vmem:[#allocation2 + $0x50] sm:$0xff] %v1412
    %1478 = vst.msk [vmem:[#allocation2 + $0x58] sm:$0xff] %vm1469, %v1413
    %1479 = vst [vmem:[#allocation2 + $0x60] sm:$0xff] %v1414
    %1480 = vst [vmem:[#allocation2 + $0x68] sm:$0xff] %v1415
    %1481 = vst [vmem:[#allocation2 + $0x70] sm:$0xff] %v1416
    %1482 = vst.msk [vmem:[#allocation2 + $0x78] sm:$0xff] %vm1469, %v1417
    %1483 = vst [vmem:[#allocation2 + $0x80] sm:$0xff] %v1418
    %1484 = vst [vmem:[#allocation2 + $0x88] sm:$0xff] %v1419
    %1485 = vst [vmem:[#allocation2 + $0x90] sm:$0xff] %v1420
    %1486 = vst.msk [vmem:[#allocation2 + $0x98] sm:$0xff] %vm1469, %v1421
    %1487 = vst [vmem:[#allocation2 + $0xa0] sm:$0xff] %v1422
    %1488 = vst [vmem:[#allocation2 + $0xa8] sm:$0xff] %v1423
    %1489 = vst [vmem:[#allocation2 + $0xb0] sm:$0xff] %v1424
    %1490 = vst.msk [vmem:[#allocation2 + $0xb8] sm:$0xff] %vm1469, %v1425
    %1491 = vst [vmem:[#allocation2 + $0xc0] sm:$0xff] %v1426
    %1492 = vst [vmem:[#allocation2 + $0xc8] sm:$0xff] %v1427
    %1493 = vst [vmem:[#allocation2 + $0xd0] sm:$0xff] %v1428
    %1494 = vst.msk [vmem:[#allocation2 + $0xd8] sm:$0xff] %vm1469, %v1429
    %1495 = vst [vmem:[#allocation2 + $0xe0] sm:$0xff] %v1430
    %1496 = vst [vmem:[#allocation2 + $0xe8] sm:$0xff] %v1431
    %1497 = vst [vmem:[#allocation2 + $0xf0] sm:$0xff] %v1432
    %1498 = vst.msk [vmem:[#allocation2 + $0xf8] sm:$0xff] %vm1469, %v1433
    %1499 = vst [vmem:[#allocation2 + $0x100] sm:$0xff] %v1434
    %1500 = vst [vmem:[#allocation2 + $0x108] sm:$0xff] %v1435
    %1501 = vst [vmem:[#allocation2 + $0x110] sm:$0xff] %v1436
    %1502 = vst.msk [vmem:[#allocation2 + $0x118] sm:$0xff] %vm1469, %v1437
    %1503 = vst [vmem:[#allocation2 + $0x120] sm:$0xff] %v1438
    %1504 = vst [vmem:[#allocation2 + $0x128] sm:$0xff] %v1439
    %1505 = vst [vmem:[#allocation2 + $0x130] sm:$0xff] %v1440
    %1506 = vst.msk [vmem:[#allocation2 + $0x138] sm:$0xff] %vm1469, %v1441
    %1507 = vst [vmem:[#allocation2 + $0x140] sm:$0xff] %v1442
    %1508 = vst [vmem:[#allocation2 + $0x148] sm:$0xff] %v1443
    %1509 = vst [vmem:[#allocation2 + $0x150] sm:$0xff] %v1444
    %1510 = vst.msk [vmem:[#allocation2 + $0x158] sm:$0xff] %vm1469, %v1445
    %1511 = vst [vmem:[#allocation2 + $0x160] sm:$0xff] %v1446
    %1512 = vst [vmem:[#allocation2 + $0x168] sm:$0xff] %v1447
    %1513 = vst [vmem:[#allocation2 + $0x170] sm:$0xff] %v1448
    %1514 = vst.msk [vmem:[#allocation2 + $0x178] sm:$0xff] %vm1469, %v1449
    %1515 = vst [vmem:[#allocation2 + $0x180] sm:$0xff] %v1450
    %1516 = vst [vmem:[#allocation2 + $0x188] sm:$0xff] %v1451
    %1517 = vst [vmem:[#allocation2 + $0x190] sm:$0xff] %v1452
    %1518 = vst.msk [vmem:[#allocation2 + $0x198] sm:$0xff] %vm1469, %v1453
    %1519 = vst [vmem:[#allocation2 + $0x1a0] sm:$0xff] %v1454
    %1520 = vst [vmem:[#allocation2 + $0x1a8] sm:$0xff] %v1455
    %1521 = vst [vmem:[#allocation2 + $0x1b0] sm:$0xff] %v1456
    %1522 = vst.msk [vmem:[#allocation2 + $0x1b8] sm:$0xff] %vm1469, %v1457
    %1523 = vst [vmem:[#allocation2 + $0x1c0] sm:$0xff] %v1458
    %1524 = vst [vmem:[#allocation2 + $0x1c8] sm:$0xff] %v1459
    %1525 = vst [vmem:[#allocation2 + $0x1d0] sm:$0xff] %v1460
    %1526 = vst.msk [vmem:[#allocation2 + $0x1d8] sm:$0xff] %vm1469, %v1461
    %1527 = vst [vmem:[#allocation2 + $0x1e0] sm:$0xff] %v1462
    %1528 = vst [vmem:[#allocation2 + $0x1e8] sm:$0xff] %v1463
    %1529 = vst [vmem:[#allocation2 + $0x1f0] sm:$0xff] %v1464
    %1530 = vst.msk [vmem:[#allocation2 + $0x1f8] sm:$0xff] %vm1469, %v1465
    %s1531 = scalar_lea.vmem [#allocation2], 32
    %v1532 = vld [vmem:[%s1531] sm:$0xff]
    %v1533 = vld [vmem:[%s1531 + $0x8] sm:$0xff]
    %v1534 = vld [vmem:[%s1531 + $0x10] sm:$0xff]
    %v1535 = vld [vmem:[%s1531 + $0x18] sm:$0xff]
    %v1536 = vld [vmem:[%s1531 + $0x20] sm:$0xff]
    %v1537 = vld [vmem:[%s1531 + $0x28] sm:$0xff]
    %v1538 = vld [vmem:[%s1531 + $0x30] sm:$0xff]
    %v1539 = vld [vmem:[%s1531 + $0x38] sm:$0xff]
    %v1540 = vld [vmem:[%s1531 + $0x40] sm:$0xff]
    %v1541 = vld [vmem:[%s1531 + $0x48] sm:$0xff]
    %v1542 = vld [vmem:[%s1531 + $0x50] sm:$0xff]
    %v1543 = vld [vmem:[%s1531 + $0x58] sm:$0xff]
    %v1544 = vld [vmem:[%s1531 + $0x60] sm:$0xff]
    %v1545 = vld [vmem:[%s1531 + $0x68] sm:$0xff]
    %v1546 = vld [vmem:[%s1531 + $0x70] sm:$0xff]
    %v1547 = vld [vmem:[%s1531 + $0x78] sm:$0xff]
    %v1548 = vld [vmem:[%s1531 + $0x80] sm:$0xff]
    %v1549 = vld [vmem:[%s1531 + $0x88] sm:$0xff]
    %v1550 = vld [vmem:[%s1531 + $0x90] sm:$0xff]
    %v1551 = vld [vmem:[%s1531 + $0x98] sm:$0xff]
    %v1552 = vld [vmem:[%s1531 + $0xa0] sm:$0xff]
    %v1553 = vld [vmem:[%s1531 + $0xa8] sm:$0xff]
    %v1554 = vld [vmem:[%s1531 + $0xb0] sm:$0xff]
    %v1555 = vld [vmem:[%s1531 + $0xb8] sm:$0xff]
    %v1556 = vld [vmem:[%s1531 + $0xc0] sm:$0xff]
    %v1557 = vld [vmem:[%s1531 + $0xc8] sm:$0xff]
    %v1558 = vld [vmem:[%s1531 + $0xd0] sm:$0xff]
    %v1559 = vld [vmem:[%s1531 + $0xd8] sm:$0xff]
    %v1560 = vld [vmem:[%s1531 + $0x100] sm:$0xff]
    %v1561 = vld [vmem:[%s1531 + $0x108] sm:$0xff]
    %v1562 = vld [vmem:[%s1531 + $0x110] sm:$0xff]
    %v1563 = vld [vmem:[%s1531 + $0x118] sm:$0xff]
    %v1564 = vld [vmem:[%s1531 + $0x120] sm:$0xff]
    %v1565 = vld [vmem:[%s1531 + $0x128] sm:$0xff]
    %v1566 = vld [vmem:[%s1531 + $0x130] sm:$0xff]
    %v1567 = vld [vmem:[%s1531 + $0x138] sm:$0xff]
    %v1568 = vld [vmem:[%s1531 + $0x140] sm:$0xff]
    %v1569 = vld [vmem:[%s1531 + $0x148] sm:$0xff]
    %v1570 = vld [vmem:[%s1531 + $0x150] sm:$0xff]
    %v1571 = vld [vmem:[%s1531 + $0x158] sm:$0xff]
    %v1572 = vld [vmem:[%s1531 + $0x160] sm:$0xff]
    %v1573 = vld [vmem:[%s1531 + $0x168] sm:$0xff]
    %v1574 = vld [vmem:[%s1531 + $0x170] sm:$0xff]
    %v1575 = vld [vmem:[%s1531 + $0x178] sm:$0xff]
    %v1576 = vld [vmem:[%s1531 + $0x180] sm:$0xff]
    %v1577 = vld [vmem:[%s1531 + $0x188] sm:$0xff]
    %v1578 = vld [vmem:[%s1531 + $0x190] sm:$0xff]
    %v1579 = vld [vmem:[%s1531 + $0x198] sm:$0xff]
    %v1580 = vld [vmem:[%s1531 + $0x1a0] sm:$0xff]
    %v1581 = vld [vmem:[%s1531 + $0x1a8] sm:$0xff]
    %v1582 = vld [vmem:[%s1531 + $0x1b0] sm:$0xff]
    %v1583 = vld [vmem:[%s1531 + $0x1b8] sm:$0xff]
    %v1584 = vld [vmem:[%s1531 + $0x1c0] sm:$0xff]
    %v1585 = vld [vmem:[%s1531 + $0x1c8] sm:$0xff]
    %v1586 = vld [vmem:[%s1531 + $0x1d0] sm:$0xff]
    %v1587 = vld [vmem:[%s1531 + $0x1d8] sm:$0xff]
    %v1590 = vperm.slane %v846, 0
    %v1591 = vperm.slane %v846, 4
    %v1592 = vperm.slane %v847, 0
    %v1593 = vperm.slane %v847, 4
    %v1598 = vperm.slane %v1590, 0
    %v1599 = vperm.slane %v1591, 0
    %v1600 = vperm.slane %v1592, 0
    %v1601 = vperm.slane %v1593, 0
    %v1602 = vmul.f32 %v916, %v1598
    %v1603 = vmul.f32 %v917, %v1599
    %v1604 = vmul.f32 %v918, %v1600
    %v1605 = vmul.f32 %v919, %v1601
    %v1606 = vmul.f32 %v920, %v1598
    %v1607 = vmul.f32 %v921, %v1599
    %v1608 = vmul.f32 %v922, %v1600
    %v1609 = vmul.f32 %v923, %v1601
    %v1610 = vmul.f32 %v924, %v1598
    %v1611 = vmul.f32 %v925, %v1599
    %v1612 = vmul.f32 %v926, %v1600
    %v1613 = vmul.f32 %v927, %v1601
    %v1614 = vmul.f32 %v928, %v1598
    %v1615 = vmul.f32 %v929, %v1599
    %v1616 = vmul.f32 %v930, %v1600
    %v1617 = vmul.f32 %v931, %v1601
    %v1618 = vmul.f32 %v932, %v1598
    %v1619 = vmul.f32 %v933, %v1599
    %v1620 = vmul.f32 %v934, %v1600
    %v1621 = vmul.f32 %v935, %v1601
    %v1622 = vmul.f32 %v936, %v1598
    %v1623 = vmul.f32 %v937, %v1599
    %v1624 = vmul.f32 %v938, %v1600
    %v1625 = vmul.f32 %v939, %v1601
    %v1626 = vmul.f32 %v940, %v1598
    %v1627 = vmul.f32 %v941, %v1599
    %v1628 = vmul.f32 %v942, %v1600
    %v1629 = vmul.f32 %v943, %v1601
    %v1630 = vmul.f32 %v948, %v1598
    %v1631 = vmul.f32 %v949, %v1599
    %v1632 = vmul.f32 %v950, %v1600
    %v1633 = vmul.f32 %v951, %v1601
    %v1634 = vmul.f32 %v952, %v1598
    %v1635 = vmul.f32 %v953, %v1599
    %v1636 = vmul.f32 %v954, %v1600
    %v1637 = vmul.f32 %v955, %v1601
    %v1638 = vmul.f32 %v956, %v1598
    %v1639 = vmul.f32 %v957, %v1599
    %v1640 = vmul.f32 %v958, %v1600
    %v1641 = vmul.f32 %v959, %v1601
    %v1642 = vmul.f32 %v960, %v1598
    %v1643 = vmul.f32 %v961, %v1599
    %v1644 = vmul.f32 %v962, %v1600
    %v1645 = vmul.f32 %v963, %v1601
    %v1646 = vmul.f32 %v964, %v1598
    %v1647 = vmul.f32 %v965, %v1599
    %v1648 = vmul.f32 %v966, %v1600
    %v1649 = vmul.f32 %v967, %v1601
    %v1650 = vmul.f32 %v968, %v1598
    %v1651 = vmul.f32 %v969, %v1599
    %v1652 = vmul.f32 %v970, %v1600
    %v1653 = vmul.f32 %v971, %v1601
    %v1654 = vmul.f32 %v972, %v1598
    %v1655 = vmul.f32 %v973, %v1599
    %v1656 = vmul.f32 %v974, %v1600
    %v1657 = vmul.f32 %v975, %v1601
    %v1658 = vperm.slane %v846, 1
    %v1659 = vperm.slane %v846, 5
    %v1660 = vperm.slane %v847, 1
    %v1661 = vperm.slane %v847, 5
    %v1666 = vperm.slane %v1658, 1
    %v1667 = vperm.slane %v1659, 1
    %v1668 = vperm.slane %v1660, 1
    %v1669 = vperm.slane %v1661, 1
    %v1670 = vmul.f32 %v782, %v1666
    %v1671 = vmul.f32 %v783, %v1667
    %v1672 = vmul.f32 %v784, %v1668
    %v1673 = vmul.f32 %v785, %v1669
    %v1674 = vmul.f32 %v786, %v1666
    %v1675 = vmul.f32 %v787, %v1667
    %v1676 = vmul.f32 %v788, %v1668
    %v1677 = vmul.f32 %v789, %v1669
    %v1678 = vmul.f32 %v790, %v1666
    %v1679 = vmul.f32 %v791, %v1667
    %v1680 = vmul.f32 %v792, %v1668
    %v1681 = vmul.f32 %v793, %v1669
    %v1682 = vmul.f32 %v794, %v1666
    %v1683 = vmul.f32 %v795, %v1667
    %v1684 = vmul.f32 %v796, %v1668
    %v1685 = vmul.f32 %v797, %v1669
    %v1686 = vmul.f32 %v798, %v1666
    %v1687 = vmul.f32 %v799, %v1667
    %v1688 = vmul.f32 %v800, %v1668
    %v1689 = vmul.f32 %v801, %v1669
    %v1690 = vmul.f32 %v802, %v1666
    %v1691 = vmul.f32 %v803, %v1667
    %v1692 = vmul.f32 %v804, %v1668
    %v1693 = vmul.f32 %v805, %v1669
    %v1694 = vmul.f32 %v806, %v1666
    %v1695 = vmul.f32 %v807, %v1667
    %v1696 = vmul.f32 %v808, %v1668
    %v1697 = vmul.f32 %v809, %v1669
    %v1698 = vmul.f32 %v814, %v1666
    %v1699 = vmul.f32 %v815, %v1667
    %v1700 = vmul.f32 %v816, %v1668
    %v1701 = vmul.f32 %v817, %v1669
    %v1702 = vmul.f32 %v818, %v1666
    %v1703 = vmul.f32 %v819, %v1667
    %v1704 = vmul.f32 %v820, %v1668
    %v1705 = vmul.f32 %v821, %v1669
    %v1706 = vmul.f32 %v822, %v1666
    %v1707 = vmul.f32 %v823, %v1667
    %v1708 = vmul.f32 %v824, %v1668
    %v1709 = vmul.f32 %v825, %v1669
    %v1710 = vmul.f32 %v826, %v1666
    %v1711 = vmul.f32 %v827, %v1667
    %v1712 = vmul.f32 %v828, %v1668
    %v1713 = vmul.f32 %v829, %v1669
    %v1714 = vmul.f32 %v830, %v1666
    %v1715 = vmul.f32 %v831, %v1667
    %v1716 = vmul.f32 %v832, %v1668
    %v1717 = vmul.f32 %v833, %v1669
    %v1718 = vmul.f32 %v834, %v1666
    %v1719 = vmul.f32 %v835, %v1667
    %v1720 = vmul.f32 %v836, %v1668
    %v1721 = vmul.f32 %v837, %v1669
    %v1722 = vmul.f32 %v838, %v1666
    %v1723 = vmul.f32 %v839, %v1667
    %v1724 = vmul.f32 %v840, %v1668
    %v1725 = vmul.f32 %v841, %v1669
    %v1726 = vadd.f32 %v1602, %v1670
    %v1727 = vadd.f32 %v1603, %v1671
    %v1728 = vadd.f32 %v1604, %v1672
    %v1729 = vadd.f32 %v1605, %v1673
    %v1730 = vadd.f32 %v1606, %v1674
    %v1731 = vadd.f32 %v1607, %v1675
    %v1732 = vadd.f32 %v1608, %v1676
    %v1733 = vadd.f32 %v1609, %v1677
    %v1734 = vadd.f32 %v1610, %v1678
    %v1735 = vadd.f32 %v1611, %v1679
    %v1736 = vadd.f32 %v1612, %v1680
    %v1737 = vadd.f32 %v1613, %v1681
    %v1738 = vadd.f32 %v1614, %v1682
    %v1739 = vadd.f32 %v1615, %v1683
    %v1740 = vadd.f32 %v1616, %v1684
    %v1741 = vadd.f32 %v1617, %v1685
    %v1742 = vadd.f32 %v1618, %v1686
    %v1743 = vadd.f32 %v1619, %v1687
    %v1744 = vadd.f32 %v1620, %v1688
    %v1745 = vadd.f32 %v1621, %v1689
    %v1746 = vadd.f32 %v1622, %v1690
    %v1747 = vadd.f32 %v1623, %v1691
    %v1748 = vadd.f32 %v1624, %v1692
    %v1749 = vadd.f32 %v1625, %v1693
    %v1750 = vadd.f32 %v1626, %v1694
    %v1751 = vadd.f32 %v1627, %v1695
    %v1752 = vadd.f32 %v1628, %v1696
    %v1753 = vadd.f32 %v1629, %v1697
    %v1754 = vadd.f32 %v1630, %v1698
    %v1755 = vadd.f32 %v1631, %v1699
    %v1756 = vadd.f32 %v1632, %v1700
    %v1757 = vadd.f32 %v1633, %v1701
    %v1758 = vadd.f32 %v1634, %v1702
    %v1759 = vadd.f32 %v1635, %v1703
    %v1760 = vadd.f32 %v1636, %v1704
    %v1761 = vadd.f32 %v1637, %v1705
    %v1762 = vadd.f32 %v1638, %v1706
    %v1763 = vadd.f32 %v1639, %v1707
    %v1764 = vadd.f32 %v1640, %v1708
    %v1765 = vadd.f32 %v1641, %v1709
    %v1766 = vadd.f32 %v1642, %v1710
    %v1767 = vadd.f32 %v1643, %v1711
    %v1768 = vadd.f32 %v1644, %v1712
    %v1769 = vadd.f32 %v1645, %v1713
    %v1770 = vadd.f32 %v1646, %v1714
    %v1771 = vadd.f32 %v1647, %v1715
    %v1772 = vadd.f32 %v1648, %v1716
    %v1773 = vadd.f32 %v1649, %v1717
    %v1774 = vadd.f32 %v1650, %v1718
    %v1775 = vadd.f32 %v1651, %v1719
    %v1776 = vadd.f32 %v1652, %v1720
    %v1777 = vadd.f32 %v1653, %v1721
    %v1778 = vadd.f32 %v1654, %v1722
    %v1779 = vadd.f32 %v1655, %v1723
    %v1780 = vadd.f32 %v1656, %v1724
    %v1781 = vadd.f32 %v1657, %v1725
    %v1782 = vperm.slane %v846, 2
    %v1783 = vperm.slane %v846, 6
    %v1784 = vperm.slane %v847, 2
    %v1785 = vperm.slane %v847, 6
    %v1790 = vperm.slane %v1782, 2
    %v1791 = vperm.slane %v1783, 2
    %v1792 = vperm.slane %v1784, 2
    %v1793 = vperm.slane %v1785, 2
    %v1794 = vmul.f32 %v1044, %v1790
    %v1795 = vmul.f32 %v1045, %v1791
    %v1796 = vmul.f32 %v1046, %v1792
    %v1797 = vmul.f32 %v1047, %v1793
    %v1798 = vmul.f32 %v1048, %v1790
    %v1799 = vmul.f32 %v1049, %v1791
    %v1800 = vmul.f32 %v1050, %v1792
    %v1801 = vmul.f32 %v1051, %v1793
    %v1802 = vmul.f32 %v1052, %v1790
    %v1803 = vmul.f32 %v1053, %v1791
    %v1804 = vmul.f32 %v1054, %v1792
    %v1805 = vmul.f32 %v1055, %v1793
    %v1806 = vmul.f32 %v1056, %v1790
    %v1807 = vmul.f32 %v1057, %v1791
    %v1808 = vmul.f32 %v1058, %v1792
    %v1809 = vmul.f32 %v1059, %v1793
    %v1810 = vmul.f32 %v1060, %v1790
    %v1811 = vmul.f32 %v1061, %v1791
    %v1812 = vmul.f32 %v1062, %v1792
    %v1813 = vmul.f32 %v1063, %v1793
    %v1814 = vmul.f32 %v1064, %v1790
    %v1815 = vmul.f32 %v1065, %v1791
    %v1816 = vmul.f32 %v1066, %v1792
    %v1817 = vmul.f32 %v1067, %v1793
    %v1818 = vmul.f32 %v1068, %v1790
    %v1819 = vmul.f32 %v1069, %v1791
    %v1820 = vmul.f32 %v1070, %v1792
    %v1821 = vmul.f32 %v1071, %v1793
    %v1822 = vmul.f32 %v1076, %v1790
    %v1823 = vmul.f32 %v1077, %v1791
    %v1824 = vmul.f32 %v1078, %v1792
    %v1825 = vmul.f32 %v1079, %v1793
    %v1826 = vmul.f32 %v1080, %v1790
    %v1827 = vmul.f32 %v1081, %v1791
    %v1828 = vmul.f32 %v1082, %v1792
    %v1829 = vmul.f32 %v1083, %v1793
    %v1830 = vmul.f32 %v1084, %v1790
    %v1831 = vmul.f32 %v1085, %v1791
    %v1832 = vmul.f32 %v1086, %v1792
    %v1833 = vmul.f32 %v1087, %v1793
    %v1834 = vmul.f32 %v1088, %v1790
    %v1835 = vmul.f32 %v1089, %v1791
    %v1836 = vmul.f32 %v1090, %v1792
    %v1837 = vmul.f32 %v1091, %v1793
    %v1838 = vmul.f32 %v1092, %v1790
    %v1839 = vmul.f32 %v1093, %v1791
    %v1840 = vmul.f32 %v1094, %v1792
    %v1841 = vmul.f32 %v1095, %v1793
    %v1842 = vmul.f32 %v1096, %v1790
    %v1843 = vmul.f32 %v1097, %v1791
    %v1844 = vmul.f32 %v1098, %v1792
    %v1845 = vmul.f32 %v1099, %v1793
    %v1846 = vmul.f32 %v1100, %v1790
    %v1847 = vmul.f32 %v1101, %v1791
    %v1848 = vmul.f32 %v1102, %v1792
    %v1849 = vmul.f32 %v1103, %v1793
    %v1850 = vadd.f32 %v1726, %v1794
    %v1851 = vadd.f32 %v1727, %v1795
    %v1852 = vadd.f32 %v1728, %v1796
    %v1853 = vadd.f32 %v1729, %v1797
    %v1854 = vadd.f32 %v1730, %v1798
    %v1855 = vadd.f32 %v1731, %v1799
    %v1856 = vadd.f32 %v1732, %v1800
    %v1857 = vadd.f32 %v1733, %v1801
    %v1858 = vadd.f32 %v1734, %v1802
    %v1859 = vadd.f32 %v1735, %v1803
    %v1860 = vadd.f32 %v1736, %v1804
    %v1861 = vadd.f32 %v1737, %v1805
    %v1862 = vadd.f32 %v1738, %v1806
    %v1863 = vadd.f32 %v1739, %v1807
    %v1864 = vadd.f32 %v1740, %v1808
    %v1865 = vadd.f32 %v1741, %v1809
    %v1866 = vadd.f32 %v1742, %v1810
    %v1867 = vadd.f32 %v1743, %v1811
    %v1868 = vadd.f32 %v1744, %v1812
    %v1869 = vadd.f32 %v1745, %v1813
    %v1870 = vadd.f32 %v1746, %v1814
    %v1871 = vadd.f32 %v1747, %v1815
    %v1872 = vadd.f32 %v1748, %v1816
    %v1873 = vadd.f32 %v1749, %v1817
    %v1874 = vadd.f32 %v1750, %v1818
    %v1875 = vadd.f32 %v1751, %v1819
    %v1876 = vadd.f32 %v1752, %v1820
    %v1877 = vadd.f32 %v1753, %v1821
    %v1878 = vadd.f32 %v1754, %v1822
    %v1879 = vadd.f32 %v1755, %v1823
    %v1880 = vadd.f32 %v1756, %v1824
    %v1881 = vadd.f32 %v1757, %v1825
    %v1882 = vadd.f32 %v1758, %v1826
    %v1883 = vadd.f32 %v1759, %v1827
    %v1884 = vadd.f32 %v1760, %v1828
    %v1885 = vadd.f32 %v1761, %v1829
    %v1886 = vadd.f32 %v1762, %v1830
    %v1887 = vadd.f32 %v1763, %v1831
    %v1888 = vadd.f32 %v1764, %v1832
    %v1889 = vadd.f32 %v1765, %v1833
    %v1890 = vadd.f32 %v1766, %v1834
    %v1891 = vadd.f32 %v1767, %v1835
    %v1892 = vadd.f32 %v1768, %v1836
    %v1893 = vadd.f32 %v1769, %v1837
    %v1894 = vadd.f32 %v1770, %v1838
    %v1895 = vadd.f32 %v1771, %v1839
    %v1896 = vadd.f32 %v1772, %v1840
    %v1897 = vadd.f32 %v1773, %v1841
    %v1898 = vadd.f32 %v1774, %v1842
    %v1899 = vadd.f32 %v1775, %v1843
    %v1900 = vadd.f32 %v1776, %v1844
    %v1901 = vadd.f32 %v1777, %v1845
    %v1902 = vadd.f32 %v1778, %v1846
    %v1903 = vadd.f32 %v1779, %v1847
    %v1904 = vadd.f32 %v1780, %v1848
    %v1905 = vadd.f32 %v1781, %v1849
    %v1906 = vadd.f32 %v1532, %v1850
    %v1907 = vadd.f32 %v1533, %v1851
    %v1908 = vadd.f32 %v1534, %v1852
    %v1909 = vadd.f32 %v1535, %v1853
    %v1910 = vadd.f32 %v1536, %v1854
    %v1911 = vadd.f32 %v1537, %v1855
    %v1912 = vadd.f32 %v1538, %v1856
    %v1913 = vadd.f32 %v1539, %v1857
    %v1914 = vadd.f32 %v1540, %v1858
    %v1915 = vadd.f32 %v1541, %v1859
    %v1916 = vadd.f32 %v1542, %v1860
    %v1917 = vadd.f32 %v1543, %v1861
    %v1918 = vadd.f32 %v1544, %v1862
    %v1919 = vadd.f32 %v1545, %v1863
    %v1920 = vadd.f32 %v1546, %v1864
    %v1921 = vadd.f32 %v1547, %v1865
    %v1922 = vadd.f32 %v1548, %v1866
    %v1923 = vadd.f32 %v1549, %v1867
    %v1924 = vadd.f32 %v1550, %v1868
    %v1925 = vadd.f32 %v1551, %v1869
    %v1926 = vadd.f32 %v1552, %v1870
    %v1927 = vadd.f32 %v1553, %v1871
    %v1928 = vadd.f32 %v1554, %v1872
    %v1929 = vadd.f32 %v1555, %v1873
    %v1930 = vadd.f32 %v1556, %v1874
    %v1931 = vadd.f32 %v1557, %v1875
    %v1932 = vadd.f32 %v1558, %v1876
    %v1933 = vadd.f32 %v1559, %v1877
    %v1934 = vadd.f32 %v1560, %v1878
    %v1935 = vadd.f32 %v1561, %v1879
    %v1936 = vadd.f32 %v1562, %v1880
    %v1937 = vadd.f32 %v1563, %v1881
    %v1938 = vadd.f32 %v1564, %v1882
    %v1939 = vadd.f32 %v1565, %v1883
    %v1940 = vadd.f32 %v1566, %v1884
    %v1941 = vadd.f32 %v1567, %v1885
    %v1942 = vadd.f32 %v1568, %v1886
    %v1943 = vadd.f32 %v1569, %v1887
    %v1944 = vadd.f32 %v1570, %v1888
    %v1945 = vadd.f32 %v1571, %v1889
    %v1946 = vadd.f32 %v1572, %v1890
    %v1947 = vadd.f32 %v1573, %v1891
    %v1948 = vadd.f32 %v1574, %v1892
    %v1949 = vadd.f32 %v1575, %v1893
    %v1950 = vadd.f32 %v1576, %v1894
    %v1951 = vadd.f32 %v1577, %v1895
    %v1952 = vadd.f32 %v1578, %v1896
    %v1953 = vadd.f32 %v1579, %v1897
    %v1954 = vadd.f32 %v1580, %v1898
    %v1955 = vadd.f32 %v1581, %v1899
    %v1956 = vadd.f32 %v1582, %v1900
    %v1957 = vadd.f32 %v1583, %v1901
    %v1958 = vadd.f32 %v1584, %v1902
    %v1959 = vadd.f32 %v1585, %v1903
    %v1960 = vadd.f32 %v1586, %v1904
    %v1961 = vadd.f32 %v1587, %v1905
    %1962 = vst [vmem:[%s1531] sm:$0xff] %v1906
    %1963 = vst [vmem:[%s1531 + $0x8] sm:$0xff] %v1907
    %1964 = vst [vmem:[%s1531 + $0x10] sm:$0xff] %v1908
    %1965 = vst.msk [vmem:[%s1531 + $0x18] sm:$0xff] %vm1469, %v1909
    %1966 = vst [vmem:[%s1531 + $0x20] sm:$0xff] %v1910
    %1967 = vst [vmem:[%s1531 + $0x28] sm:$0xff] %v1911
    %1968 = vst [vmem:[%s1531 + $0x30] sm:$0xff] %v1912
    %1969 = vst.msk [vmem:[%s1531 + $0x38] sm:$0xff] %vm1469, %v1913
    %1970 = vst [vmem:[%s1531 + $0x40] sm:$0xff] %v1914
    %1971 = vst [vmem:[%s1531 + $0x48] sm:$0xff] %v1915
    %1972 = vst [vmem:[%s1531 + $0x50] sm:$0xff] %v1916
    %1973 = vst.msk [vmem:[%s1531 + $0x58] sm:$0xff] %vm1469, %v1917
    %1974 = vst [vmem:[%s1531 + $0x60] sm:$0xff] %v1918
    %1975 = vst [vmem:[%s1531 + $0x68] sm:$0xff] %v1919
    %1976 = vst [vmem:[%s1531 + $0x70] sm:$0xff] %v1920
    %1977 = vst.msk [vmem:[%s1531 + $0x78] sm:$0xff] %vm1469, %v1921
    %1978 = vst [vmem:[%s1531 + $0x80] sm:$0xff] %v1922
    %1979 = vst [vmem:[%s1531 + $0x88] sm:$0xff] %v1923
    %1980 = vst [vmem:[%s1531 + $0x90] sm:$0xff] %v1924
    %1981 = vst.msk [vmem:[%s1531 + $0x98] sm:$0xff] %vm1469, %v1925
    %1982 = vst [vmem:[%s1531 + $0xa0] sm:$0xff] %v1926
    %1983 = vst [vmem:[%s1531 + $0xa8] sm:$0xff] %v1927
    %1984 = vst [vmem:[%s1531 + $0xb0] sm:$0xff] %v1928
    %1985 = vst.msk [vmem:[%s1531 + $0xb8] sm:$0xff] %vm1469, %v1929
    %1986 = vst [vmem:[%s1531 + $0xc0] sm:$0xff] %v1930
    %1987 = vst [vmem:[%s1531 + $0xc8] sm:$0xff] %v1931
    %1988 = vst [vmem:[%s1531 + $0xd0] sm:$0xff] %v1932
    %1989 = vst.msk [vmem:[%s1531 + $0xd8] sm:$0xff] %vm1469, %v1933
    %1990 = vst [vmem:[%s1531 + $0x100] sm:$0xff] %v1934
    %1991 = vst [vmem:[%s1531 + $0x108] sm:$0xff] %v1935
    %1992 = vst [vmem:[%s1531 + $0x110] sm:$0xff] %v1936
    %1993 = vst.msk [vmem:[%s1531 + $0x118] sm:$0xff] %vm1469, %v1937
    %1994 = vst [vmem:[%s1531 + $0x120] sm:$0xff] %v1938
    %1995 = vst [vmem:[%s1531 + $0x128] sm:$0xff] %v1939
    %1996 = vst [vmem:[%s1531 + $0x130] sm:$0xff] %v1940
    %1997 = vst.msk [vmem:[%s1531 + $0x138] sm:$0xff] %vm1469, %v1941
    %1998 = vst [vmem:[%s1531 + $0x140] sm:$0xff] %v1942
    %1999 = vst [vmem:[%s1531 + $0x148] sm:$0xff] %v1943
    %2000 = vst [vmem:[%s1531 + $0x150] sm:$0xff] %v1944
    %2001 = vst.msk [vmem:[%s1531 + $0x158] sm:$0xff] %vm1469, %v1945
    %2002 = vst [vmem:[%s1531 + $0x160] sm:$0xff] %v1946
    %2003 = vst [vmem:[%s1531 + $0x168] sm:$0xff] %v1947
    %2004 = vst [vmem:[%s1531 + $0x170] sm:$0xff] %v1948
    %2005 = vst.msk [vmem:[%s1531 + $0x178] sm:$0xff] %vm1469, %v1949
    %2006 = vst [vmem:[%s1531 + $0x180] sm:$0xff] %v1950
    %2007 = vst [vmem:[%s1531 + $0x188] sm:$0xff] %v1951
    %2008 = vst [vmem:[%s1531 + $0x190] sm:$0xff] %v1952
    %2009 = vst.msk [vmem:[%s1531 + $0x198] sm:$0xff] %vm1469, %v1953
    %2010 = vst [vmem:[%s1531 + $0x1a0] sm:$0xff] %v1954
    %2011 = vst [vmem:[%s1531 + $0x1a8] sm:$0xff] %v1955
    %2012 = vst [vmem:[%s1531 + $0x1b0] sm:$0xff] %v1956
    %2013 = vst.msk [vmem:[%s1531 + $0x1b8] sm:$0xff] %vm1469, %v1957
    %2014 = vst [vmem:[%s1531 + $0x1c0] sm:$0xff] %v1958
    %2015 = vst [vmem:[%s1531 + $0x1c8] sm:$0xff] %v1959
    %2016 = vst [vmem:[%s1531 + $0x1d0] sm:$0xff] %v1960
    %2017 = vst.msk [vmem:[%s1531 + $0x1d8] sm:$0xff] %vm1469, %v1961
    %v2018 = vld [vmem:[#allocation2] sm:$0xff]
    %v2019 = vld [vmem:[#allocation2 + $0x8] sm:$0xff]
    %v2020 = vld [vmem:[#allocation2 + $0x10] sm:$0xff]
    %v2021 = vld [vmem:[#allocation2 + $0x18] sm:$0xff]
    %v2022 = vld [vmem:[#allocation2 + $0x20] sm:$0xff]
    %v2023 = vld [vmem:[#allocation2 + $0x28] sm:$0xff]
    %v2024 = vld [vmem:[#allocation2 + $0x30] sm:$0xff]
    %v2025 = vld [vmem:[#allocation2 + $0x38] sm:$0xff]
    %v2026 = vld [vmem:[#allocation2 + $0x40] sm:$0xff]
    %v2027 = vld [vmem:[#allocation2 + $0x48] sm:$0xff]
    %v2028 = vld [vmem:[#allocation2 + $0x50] sm:$0xff]
    %v2029 = vld [vmem:[#allocation2 + $0x58] sm:$0xff]
    %v2030 = vld [vmem:[#allocation2 + $0x60] sm:$0xff]
    %v2031 = vld [vmem:[#allocation2 + $0x68] sm:$0xff]
    %v2032 = vld [vmem:[#allocation2 + $0x70] sm:$0xff]
    %v2033 = vld [vmem:[#allocation2 + $0x78] sm:$0xff]
    %v2034 = vld [vmem:[#allocation2 + $0x80] sm:$0xff]
    %v2035 = vld [vmem:[#allocation2 + $0x88] sm:$0xff]
    %v2036 = vld [vmem:[#allocation2 + $0x90] sm:$0xff]
    %v2037 = vld [vmem:[#allocation2 + $0x98] sm:$0xff]
    %v2038 = vld [vmem:[#allocation2 + $0xa0] sm:$0xff]
    %v2039 = vld [vmem:[#allocation2 + $0xa8] sm:$0xff]
    %v2040 = vld [vmem:[#allocation2 + $0xb0] sm:$0xff]
    %v2041 = vld [vmem:[#allocation2 + $0xb8] sm:$0xff]
    %v2042 = vld [vmem:[#allocation2 + $0xc0] sm:$0xff]
    %v2043 = vld [vmem:[#allocation2 + $0xc8] sm:$0xff]
    %v2044 = vld [vmem:[#allocation2 + $0xd0] sm:$0xff]
    %v2045 = vld [vmem:[#allocation2 + $0xd8] sm:$0xff]
    %v2046 = vld [vmem:[#allocation2 + $0x100] sm:$0xff]
    %v2047 = vld [vmem:[#allocation2 + $0x108] sm:$0xff]
    %v2048 = vld [vmem:[#allocation2 + $0x110] sm:$0xff]
    %v2049 = vld [vmem:[#allocation2 + $0x118] sm:$0xff]
    %v2050 = vld [vmem:[#allocation2 + $0x120] sm:$0xff]
    %v2051 = vld [vmem:[#allocation2 + $0x128] sm:$0xff]
    %v2052 = vld [vmem:[#allocation2 + $0x130] sm:$0xff]
    %v2053 = vld [vmem:[#allocation2 + $0x138] sm:$0xff]
    %v2054 = vld [vmem:[#allocation2 + $0x140] sm:$0xff]
    %v2055 = vld [vmem:[#allocation2 + $0x148] sm:$0xff]
    %v2056 = vld [vmem:[#allocation2 + $0x150] sm:$0xff]
    %v2057 = vld [vmem:[#allocation2 + $0x158] sm:$0xff]
    %v2058 = vld [vmem:[#allocation2 + $0x160] sm:$0xff]
    %v2059 = vld [vmem:[#allocation2 + $0x168] sm:$0xff]
    %v2060 = vld [vmem:[#allocation2 + $0x170] sm:$0xff]
    %v2061 = vld [vmem:[#allocation2 + $0x178] sm:$0xff]
    %v2062 = vld [vmem:[#allocation2 + $0x180] sm:$0xff]
    %v2063 = vld [vmem:[#allocation2 + $0x188] sm:$0xff]
    %v2064 = vld [vmem:[#allocation2 + $0x190] sm:$0xff]
    %v2065 = vld [vmem:[#allocation2 + $0x198] sm:$0xff]
    %v2066 = vld [vmem:[#allocation2 + $0x1a0] sm:$0xff]
    %v2067 = vld [vmem:[#allocation2 + $0x1a8] sm:$0xff]
    %v2068 = vld [vmem:[#allocation2 + $0x1b0] sm:$0xff]
    %v2069 = vld [vmem:[#allocation2 + $0x1b8] sm:$0xff]
    %v2070 = vld [vmem:[#allocation2 + $0x1c0] sm:$0xff]
    %v2071 = vld [vmem:[#allocation2 + $0x1c8] sm:$0xff]
    %v2072 = vld [vmem:[#allocation2 + $0x1d0] sm:$0xff]
    %v2073 = vld [vmem:[#allocation2 + $0x1d8] sm:$0xff]
    %v2076 = vperm.slane %v850, 0
    %v2077 = vperm.slane %v850, 4
    %v2078 = vperm.slane %v851, 0
    %v2079 = vperm.slane %v851, 4
    %v2084 = vperm.slane %v2076, 0
    %v2085 = vperm.slane %v2077, 0
    %v2086 = vperm.slane %v2078, 0
    %v2087 = vperm.slane %v2079, 0
    %v2088 = vmul.f32 %v920, %v2084
    %v2089 = vmul.f32 %v921, %v2085
    %v2090 = vmul.f32 %v922, %v2086
    %v2091 = vmul.f32 %v923, %v2087
    %v2092 = vmul.f32 %v924, %v2084
    %v2093 = vmul.f32 %v925, %v2085
    %v2094 = vmul.f32 %v926, %v2086
    %v2095 = vmul.f32 %v927, %v2087
    %v2096 = vmul.f32 %v928, %v2084
    %v2097 = vmul.f32 %v929, %v2085
    %v2098 = vmul.f32 %v930, %v2086
    %v2099 = vmul.f32 %v931, %v2087
    %v2100 = vmul.f32 %v932, %v2084
    %v2101 = vmul.f32 %v933, %v2085
    %v2102 = vmul.f32 %v934, %v2086
    %v2103 = vmul.f32 %v935, %v2087
    %v2104 = vmul.f32 %v936, %v2084
    %v2105 = vmul.f32 %v937, %v2085
    %v2106 = vmul.f32 %v938, %v2086
    %v2107 = vmul.f32 %v939, %v2087
    %v2108 = vmul.f32 %v940, %v2084
    %v2109 = vmul.f32 %v941, %v2085
    %v2110 = vmul.f32 %v942, %v2086
    %v2111 = vmul.f32 %v943, %v2087
    %v2112 = vmul.f32 %v944, %v2084
    %v2113 = vmul.f32 %v945, %v2085
    %v2114 = vmul.f32 %v946, %v2086
    %v2115 = vmul.f32 %v947, %v2087
    %v2116 = vmul.f32 %v952, %v2084
    %v2117 = vmul.f32 %v953, %v2085
    %v2118 = vmul.f32 %v954, %v2086
    %v2119 = vmul.f32 %v955, %v2087
    %v2120 = vmul.f32 %v956, %v2084
    %v2121 = vmul.f32 %v957, %v2085
    %v2122 = vmul.f32 %v958, %v2086
    %v2123 = vmul.f32 %v959, %v2087
    %v2124 = vmul.f32 %v960, %v2084
    %v2125 = vmul.f32 %v961, %v2085
    %v2126 = vmul.f32 %v962, %v2086
    %v2127 = vmul.f32 %v963, %v2087
    %v2128 = vmul.f32 %v964, %v2084
    %v2129 = vmul.f32 %v965, %v2085
    %v2130 = vmul.f32 %v966, %v2086
    %v2131 = vmul.f32 %v967, %v2087
    %v2132 = vmul.f32 %v968, %v2084
    %v2133 = vmul.f32 %v969, %v2085
    %v2134 = vmul.f32 %v970, %v2086
    %v2135 = vmul.f32 %v971, %v2087
    %v2136 = vmul.f32 %v972, %v2084
    %v2137 = vmul.f32 %v973, %v2085
    %v2138 = vmul.f32 %v974, %v2086
    %v2139 = vmul.f32 %v975, %v2087
    %v2140 = vmul.f32 %v976, %v2084
    %v2141 = vmul.f32 %v977, %v2085
    %v2142 = vmul.f32 %v978, %v2086
    %v2143 = vmul.f32 %v979, %v2087
    %v2144 = vperm.slane %v850, 1
    %v2145 = vperm.slane %v850, 5
    %v2146 = vperm.slane %v851, 1
    %v2147 = vperm.slane %v851, 5
    %v2152 = vperm.slane %v2144, 1
    %v2153 = vperm.slane %v2145, 1
    %v2154 = vperm.slane %v2146, 1
    %v2155 = vperm.slane %v2147, 1
    %v2156 = vmul.f32 %v786, %v2152
    %v2157 = vmul.f32 %v787, %v2153
    %v2158 = vmul.f32 %v788, %v2154
    %v2159 = vmul.f32 %v789, %v2155
    %v2160 = vmul.f32 %v790, %v2152
    %v2161 = vmul.f32 %v791, %v2153
    %v2162 = vmul.f32 %v792, %v2154
    %v2163 = vmul.f32 %v793, %v2155
    %v2164 = vmul.f32 %v794, %v2152
    %v2165 = vmul.f32 %v795, %v2153
    %v2166 = vmul.f32 %v796, %v2154
    %v2167 = vmul.f32 %v797, %v2155
    %v2168 = vmul.f32 %v798, %v2152
    %v2169 = vmul.f32 %v799, %v2153
    %v2170 = vmul.f32 %v800, %v2154
    %v2171 = vmul.f32 %v801, %v2155
    %v2172 = vmul.f32 %v802, %v2152
    %v2173 = vmul.f32 %v803, %v2153
    %v2174 = vmul.f32 %v804, %v2154
    %v2175 = vmul.f32 %v805, %v2155
    %v2176 = vmul.f32 %v806, %v2152
    %v2177 = vmul.f32 %v807, %v2153
    %v2178 = vmul.f32 %v808, %v2154
    %v2179 = vmul.f32 %v809, %v2155
    %v2180 = vmul.f32 %v810, %v2152
    %v2181 = vmul.f32 %v811, %v2153
    %v2182 = vmul.f32 %v812, %v2154
    %v2183 = vmul.f32 %v813, %v2155
    %v2184 = vmul.f32 %v818, %v2152
    %v2185 = vmul.f32 %v819, %v2153
    %v2186 = vmul.f32 %v820, %v2154
    %v2187 = vmul.f32 %v821, %v2155
    %v2188 = vmul.f32 %v822, %v2152
    %v2189 = vmul.f32 %v823, %v2153
    %v2190 = vmul.f32 %v824, %v2154
    %v2191 = vmul.f32 %v825, %v2155
    %v2192 = vmul.f32 %v826, %v2152
    %v2193 = vmul.f32 %v827, %v2153
    %v2194 = vmul.f32 %v828, %v2154
    %v2195 = vmul.f32 %v829, %v2155
    %v2196 = vmul.f32 %v830, %v2152
    %v2197 = vmul.f32 %v831, %v2153
    %v2198 = vmul.f32 %v832, %v2154
    %v2199 = vmul.f32 %v833, %v2155
    %v2200 = vmul.f32 %v834, %v2152
    %v2201 = vmul.f32 %v835, %v2153
    %v2202 = vmul.f32 %v836, %v2154
    %v2203 = vmul.f32 %v837, %v2155
    %v2204 = vmul.f32 %v838, %v2152
    %v2205 = vmul.f32 %v839, %v2153
    %v2206 = vmul.f32 %v840, %v2154
    %v2207 = vmul.f32 %v841, %v2155
    %v2208 = vmul.f32 %v842, %v2152
    %v2209 = vmul.f32 %v843, %v2153
    %v2210 = vmul.f32 %v844, %v2154
    %v2211 = vmul.f32 %v845, %v2155
    %v2212 = vadd.f32 %v2088, %v2156
    %v2213 = vadd.f32 %v2089, %v2157
    %v2214 = vadd.f32 %v2090, %v2158
    %v2215 = vadd.f32 %v2091, %v2159
    %v2216 = vadd.f32 %v2092, %v2160
    %v2217 = vadd.f32 %v2093, %v2161
    %v2218 = vadd.f32 %v2094, %v2162
    %v2219 = vadd.f32 %v2095, %v2163
    %v2220 = vadd.f32 %v2096, %v2164
    %v2221 = vadd.f32 %v2097, %v2165
    %v2222 = vadd.f32 %v2098, %v2166
    %v2223 = vadd.f32 %v2099, %v2167
    %v2224 = vadd.f32 %v2100, %v2168
    %v2225 = vadd.f32 %v2101, %v2169
    %v2226 = vadd.f32 %v2102, %v2170
    %v2227 = vadd.f32 %v2103, %v2171
    %v2228 = vadd.f32 %v2104, %v2172
    %v2229 = vadd.f32 %v2105, %v2173
    %v2230 = vadd.f32 %v2106, %v2174
    %v2231 = vadd.f32 %v2107, %v2175
    %v2232 = vadd.f32 %v2108, %v2176
    %v2233 = vadd.f32 %v2109, %v2177
    %v2234 = vadd.f32 %v2110, %v2178
    %v2235 = vadd.f32 %v2111, %v2179
    %v2236 = vadd.f32 %v2112, %v2180
    %v2237 = vadd.f32 %v2113, %v2181
    %v2238 = vadd.f32 %v2114, %v2182
    %v2239 = vadd.f32 %v2115, %v2183
    %v2240 = vadd.f32 %v2116, %v2184
    %v2241 = vadd.f32 %v2117, %v2185
    %v2242 = vadd.f32 %v2118, %v2186
    %v2243 = vadd.f32 %v2119, %v2187
    %v2244 = vadd.f32 %v2120, %v2188
    %v2245 = vadd.f32 %v2121, %v2189
    %v2246 = vadd.f32 %v2122, %v2190
    %v2247 = vadd.f32 %v2123, %v2191
    %v2248 = vadd.f32 %v2124, %v2192
    %v2249 = vadd.f32 %v2125, %v2193
    %v2250 = vadd.f32 %v2126, %v2194
    %v2251 = vadd.f32 %v2127, %v2195
    %v2252 = vadd.f32 %v2128, %v2196
    %v2253 = vadd.f32 %v2129, %v2197
    %v2254 = vadd.f32 %v2130, %v2198
    %v2255 = vadd.f32 %v2131, %v2199
    %v2256 = vadd.f32 %v2132, %v2200
    %v2257 = vadd.f32 %v2133, %v2201
    %v2258 = vadd.f32 %v2134, %v2202
    %v2259 = vadd.f32 %v2135, %v2203
    %v2260 = vadd.f32 %v2136, %v2204
    %v2261 = vadd.f32 %v2137, %v2205
    %v2262 = vadd.f32 %v2138, %v2206
    %v2263 = vadd.f32 %v2139, %v2207
    %v2264 = vadd.f32 %v2140, %v2208
    %v2265 = vadd.f32 %v2141, %v2209
    %v2266 = vadd.f32 %v2142, %v2210
    %v2267 = vadd.f32 %v2143, %v2211
    %v2268 = vperm.slane %v850, 2
    %v2269 = vperm.slane %v850, 6
    %v2270 = vperm.slane %v851, 2
    %v2271 = vperm.slane %v851, 6
    %v2276 = vperm.slane %v2268, 2
    %v2277 = vperm.slane %v2269, 2
    %v2278 = vperm.slane %v2270, 2
    %v2279 = vperm.slane %v2271, 2
    %v2280 = vmul.f32 %v1048, %v2276
    %v2281 = vmul.f32 %v1049, %v2277
    %v2282 = vmul.f32 %v1050, %v2278
    %v2283 = vmul.f32 %v1051, %v2279
    %v2284 = vmul.f32 %v1052, %v2276
    %v2285 = vmul.f32 %v1053, %v2277
    %v2286 = vmul.f32 %v1054, %v2278
    %v2287 = vmul.f32 %v1055, %v2279
    %v2288 = vmul.f32 %v1056, %v2276
    %v2289 = vmul.f32 %v1057, %v2277
    %v2290 = vmul.f32 %v1058, %v2278
    %v2291 = vmul.f32 %v1059, %v2279
    %v2292 = vmul.f32 %v1060, %v2276
    %v2293 = vmul.f32 %v1061, %v2277
    %v2294 = vmul.f32 %v1062, %v2278
    %v2295 = vmul.f32 %v1063, %v2279
    %v2296 = vmul.f32 %v1064, %v2276
    %v2297 = vmul.f32 %v1065, %v2277
    %v2298 = vmul.f32 %v1066, %v2278
    %v2299 = vmul.f32 %v1067, %v2279
    %v2300 = vmul.f32 %v1068, %v2276
    %v2301 = vmul.f32 %v1069, %v2277
    %v2302 = vmul.f32 %v1070, %v2278
    %v2303 = vmul.f32 %v1071, %v2279
    %v2304 = vmul.f32 %v1072, %v2276
    %v2305 = vmul.f32 %v1073, %v2277
    %v2306 = vmul.f32 %v1074, %v2278
    %v2307 = vmul.f32 %v1075, %v2279
    %v2308 = vmul.f32 %v1080, %v2276
    %v2309 = vmul.f32 %v1081, %v2277
    %v2310 = vmul.f32 %v1082, %v2278
    %v2311 = vmul.f32 %v1083, %v2279
    %v2312 = vmul.f32 %v1084, %v2276
    %v2313 = vmul.f32 %v1085, %v2277
    %v2314 = vmul.f32 %v1086, %v2278
    %v2315 = vmul.f32 %v1087, %v2279
    %v2316 = vmul.f32 %v1088, %v2276
    %v2317 = vmul.f32 %v1089, %v2277
    %v2318 = vmul.f32 %v1090, %v2278
    %v2319 = vmul.f32 %v1091, %v2279
    %v2320 = vmul.f32 %v1092, %v2276
    %v2321 = vmul.f32 %v1093, %v2277
    %v2322 = vmul.f32 %v1094, %v2278
    %v2323 = vmul.f32 %v1095, %v2279
    %v2324 = vmul.f32 %v1096, %v2276
    %v2325 = vmul.f32 %v1097, %v2277
    %v2326 = vmul.f32 %v1098, %v2278
    %v2327 = vmul.f32 %v1099, %v2279
    %v2328 = vmul.f32 %v1100, %v2276
    %v2329 = vmul.f32 %v1101, %v2277
    %v2330 = vmul.f32 %v1102, %v2278
    %v2331 = vmul.f32 %v1103, %v2279
    %v2332 = vmul.f32 %v1104, %v2276
    %v2333 = vmul.f32 %v1105, %v2277
    %v2334 = vmul.f32 %v1106, %v2278
    %v2335 = vmul.f32 %v1107, %v2279
    %v2336 = vadd.f32 %v2212, %v2280
    %v2337 = vadd.f32 %v2213, %v2281
    %v2338 = vadd.f32 %v2214, %v2282
    %v2339 = vadd.f32 %v2215, %v2283
    %v2340 = vadd.f32 %v2216, %v2284
    %v2341 = vadd.f32 %v2217, %v2285
    %v2342 = vadd.f32 %v2218, %v2286
    %v2343 = vadd.f32 %v2219, %v2287
    %v2344 = vadd.f32 %v2220, %v2288
    %v2345 = vadd.f32 %v2221, %v2289
    %v2346 = vadd.f32 %v2222, %v2290
    %v2347 = vadd.f32 %v2223, %v2291
    %v2348 = vadd.f32 %v2224, %v2292
    %v2349 = vadd.f32 %v2225, %v2293
    %v2350 = vadd.f32 %v2226, %v2294
    %v2351 = vadd.f32 %v2227, %v2295
    %v2352 = vadd.f32 %v2228, %v2296
    %v2353 = vadd.f32 %v2229, %v2297
    %v2354 = vadd.f32 %v2230, %v2298
    %v2355 = vadd.f32 %v2231, %v2299
    %v2356 = vadd.f32 %v2232, %v2300
    %v2357 = vadd.f32 %v2233, %v2301
    %v2358 = vadd.f32 %v2234, %v2302
    %v2359 = vadd.f32 %v2235, %v2303
    %v2360 = vadd.f32 %v2236, %v2304
    %v2361 = vadd.f32 %v2237, %v2305
    %v2362 = vadd.f32 %v2238, %v2306
    %v2363 = vadd.f32 %v2239, %v2307
    %v2364 = vadd.f32 %v2240, %v2308
    %v2365 = vadd.f32 %v2241, %v2309
    %v2366 = vadd.f32 %v2242, %v2310
    %v2367 = vadd.f32 %v2243, %v2311
    %v2368 = vadd.f32 %v2244, %v2312
    %v2369 = vadd.f32 %v2245, %v2313
    %v2370 = vadd.f32 %v2246, %v2314
    %v2371 = vadd.f32 %v2247, %v2315
    %v2372 = vadd.f32 %v2248, %v2316
    %v2373 = vadd.f32 %v2249, %v2317
    %v2374 = vadd.f32 %v2250, %v2318
    %v2375 = vadd.f32 %v2251, %v2319
    %v2376 = vadd.f32 %v2252, %v2320
    %v2377 = vadd.f32 %v2253, %v2321
    %v2378 = vadd.f32 %v2254, %v2322
    %v2379 = vadd.f32 %v2255, %v2323
    %v2380 = vadd.f32 %v2256, %v2324
    %v2381 = vadd.f32 %v2257, %v2325
    %v2382 = vadd.f32 %v2258, %v2326
    %v2383 = vadd.f32 %v2259, %v2327
    %v2384 = vadd.f32 %v2260, %v2328
    %v2385 = vadd.f32 %v2261, %v2329
    %v2386 = vadd.f32 %v2262, %v2330
    %v2387 = vadd.f32 %v2263, %v2331
    %v2388 = vadd.f32 %v2264, %v2332
    %v2389 = vadd.f32 %v2265, %v2333
    %v2390 = vadd.f32 %v2266, %v2334
    %v2391 = vadd.f32 %v2267, %v2335
    %v2392 = vadd.f32 %v2018, %v2336
    %v2393 = vadd.f32 %v2019, %v2337
    %v2394 = vadd.f32 %v2020, %v2338
    %v2395 = vadd.f32 %v2021, %v2339
    %v2396 = vadd.f32 %v2022, %v2340
    %v2397 = vadd.f32 %v2023, %v2341
    %v2398 = vadd.f32 %v2024, %v2342
    %v2399 = vadd.f32 %v2025, %v2343
    %v2400 = vadd.f32 %v2026, %v2344
    %v2401 = vadd.f32 %v2027, %v2345
    %v2402 = vadd.f32 %v2028, %v2346
    %v2403 = vadd.f32 %v2029, %v2347
    %v2404 = vadd.f32 %v2030, %v2348
    %v2405 = vadd.f32 %v2031, %v2349
    %v2406 = vadd.f32 %v2032, %v2350
    %v2407 = vadd.f32 %v2033, %v2351
    %v2408 = vadd.f32 %v2034, %v2352
    %v2409 = vadd.f32 %v2035, %v2353
    %v2410 = vadd.f32 %v2036, %v2354
    %v2411 = vadd.f32 %v2037, %v2355
    %v2412 = vadd.f32 %v2038, %v2356
    %v2413 = vadd.f32 %v2039, %v2357
    %v2414 = vadd.f32 %v2040, %v2358
    %v2415 = vadd.f32 %v2041, %v2359
    %v2416 = vadd.f32 %v2042, %v2360
    %v2417 = vadd.f32 %v2043, %v2361
    %v2418 = vadd.f32 %v2044, %v2362
    %v2419 = vadd.f32 %v2045, %v2363
    %v2420 = vadd.f32 %v2046, %v2364
    %v2421 = vadd.f32 %v2047, %v2365
    %v2422 = vadd.f32 %v2048, %v2366
    %v2423 = vadd.f32 %v2049, %v2367
    %v2424 = vadd.f32 %v2050, %v2368
    %v2425 = vadd.f32 %v2051, %v2369
    %v2426 = vadd.f32 %v2052, %v2370
    %v2427 = vadd.f32 %v2053, %v2371
    %v2428 = vadd.f32 %v2054, %v2372
    %v2429 = vadd.f32 %v2055, %v2373
    %v2430 = vadd.f32 %v2056, %v2374
    %v2431 = vadd.f32 %v2057, %v2375
    %v2432 = vadd.f32 %v2058, %v2376
    %v2433 = vadd.f32 %v2059, %v2377
    %v2434 = vadd.f32 %v2060, %v2378
    %v2435 = vadd.f32 %v2061, %v2379
    %v2436 = vadd.f32 %v2062, %v2380
    %v2437 = vadd.f32 %v2063, %v2381
    %v2438 = vadd.f32 %v2064, %v2382
    %v2439 = vadd.f32 %v2065, %v2383
    %v2440 = vadd.f32 %v2066, %v2384
    %v2441 = vadd.f32 %v2067, %v2385
    %v2442 = vadd.f32 %v2068, %v2386
    %v2443 = vadd.f32 %v2069, %v2387
    %v2444 = vadd.f32 %v2070, %v2388
    %v2445 = vadd.f32 %v2071, %v2389
    %v2446 = vadd.f32 %v2072, %v2390
    %v2447 = vadd.f32 %v2073, %v2391
    %2448 = vst [vmem:[#allocation2] sm:$0xff] %v2392
    %2449 = vst [vmem:[#allocation2 + $0x8] sm:$0xff] %v2393
    %2450 = vst [vmem:[#allocation2 + $0x10] sm:$0xff] %v2394
    %2451 = vst.msk [vmem:[#allocation2 + $0x18] sm:$0xff] %vm1469, %v2395
    %2452 = vst [vmem:[#allocation2 + $0x20] sm:$0xff] %v2396
    %2453 = vst [vmem:[#allocation2 + $0x28] sm:$0xff] %v2397
    %2454 = vst [vmem:[#allocation2 + $0x30] sm:$0xff] %v2398
    %2455 = vst.msk [vmem:[#allocation2 + $0x38] sm:$0xff] %vm1469, %v2399
    %2456 = vst [vmem:[#allocation2 + $0x40] sm:$0xff] %v2400
    %2457 = vst [vmem:[#allocation2 + $0x48] sm:$0xff] %v2401
    %2458 = vst [vmem:[#allocation2 + $0x50] sm:$0xff] %v2402
    %2459 = vst.msk [vmem:[#allocation2 + $0x58] sm:$0xff] %vm1469, %v2403
    %2460 = vst [vmem:[#allocation2 + $0x60] sm:$0xff] %v2404
    %2461 = vst [vmem:[#allocation2 + $0x68] sm:$0xff] %v2405
    %2462 = vst [vmem:[#allocation2 + $0x70] sm:$0xff] %v2406
    %2463 = vst.msk [vmem:[#allocation2 + $0x78] sm:$0xff] %vm1469, %v2407
    %2464 = vst [vmem:[#allocation2 + $0x80] sm:$0xff] %v2408
    %2465 = vst [vmem:[#allocation2 + $0x88] sm:$0xff] %v2409
    %2466 = vst [vmem:[#allocation2 + $0x90] sm:$0xff] %v2410
    %2467 = vst.msk [vmem:[#allocation2 + $0x98] sm:$0xff] %vm1469, %v2411
    %2468 = vst [vmem:[#allocation2 + $0xa0] sm:$0xff] %v2412
    %2469 = vst [vmem:[#allocation2 + $0xa8] sm:$0xff] %v2413
    %2470 = vst [vmem:[#allocation2 + $0xb0] sm:$0xff] %v2414
    %2471 = vst.msk [vmem:[#allocation2 + $0xb8] sm:$0xff] %vm1469, %v2415
    %2472 = vst [vmem:[#allocation2 + $0xc0] sm:$0xff] %v2416
    %2473 = vst [vmem:[#allocation2 + $0xc8] sm:$0xff] %v2417
    %2474 = vst [vmem:[#allocation2 + $0xd0] sm:$0xff] %v2418
    %2475 = vst.msk [vmem:[#allocation2 + $0xd8] sm:$0xff] %vm1469, %v2419
    %2476 = vst [vmem:[#allocation2 + $0x100] sm:$0xff] %v2420
    %2477 = vst [vmem:[#allocation2 + $0x108] sm:$0xff] %v2421
    %2478 = vst [vmem:[#allocation2 + $0x110] sm:$0xff] %v2422
    %2479 = vst.msk [vmem:[#allocation2 + $0x118] sm:$0xff] %vm1469, %v2423
    %2480 = vst [vmem:[#allocation2 + $0x120] sm:$0xff] %v2424
    %2481 = vst [vmem:[#allocation2 + $0x128] sm:$0xff] %v2425
    %2482 = vst [vmem:[#allocation2 + $0x130] sm:$0xff] %v2426
    %2483 = vst.msk [vmem:[#allocation2 + $0x138] sm:$0xff] %vm1469, %v2427
    %2484 = vst [vmem:[#allocation2 + $0x140] sm:$0xff] %v2428
    %2485 = vst [vmem:[#allocation2 + $0x148] sm:$0xff] %v2429
    %2486 = vst [vmem:[#allocation2 + $0x150] sm:$0xff] %v2430
    %2487 = vst.msk [vmem:[#allocation2 + $0x158] sm:$0xff] %vm1469, %v2431
    %2488 = vst [vmem:[#allocation2 + $0x160] sm:$0xff] %v2432
    %2489 = vst [vmem:[#allocation2 + $0x168] sm:$0xff] %v2433
    %2490 = vst [vmem:[#allocation2 + $0x170] sm:$0xff] %v2434
    %2491 = vst.msk [vmem:[#allocation2 + $0x178] sm:$0xff] %vm1469, %v2435
    %2492 = vst [vmem:[#allocation2 + $0x180] sm:$0xff] %v2436
    %2493 = vst [vmem:[#allocation2 + $0x188] sm:$0xff] %v2437
    %2494 = vst [vmem:[#allocation2 + $0x190] sm:$0xff] %v2438
    %2495 = vst.msk [vmem:[#allocation2 + $0x198] sm:$0xff] %vm1469, %v2439
    %2496 = vst [vmem:[#allocation2 + $0x1a0] sm:$0xff] %v2440
    %2497 = vst [vmem:[#allocation2 + $0x1a8] sm:$0xff] %v2441
    %2498 = vst [vmem:[#allocation2 + $0x1b0] sm:$0xff] %v2442
    %2499 = vst.msk [vmem:[#allocation2 + $0x1b8] sm:$0xff] %vm1469, %v2443
    %2500 = vst [vmem:[#allocation2 + $0x1c0] sm:$0xff] %v2444
    %2501 = vst [vmem:[#allocation2 + $0x1c8] sm:$0xff] %v2445
    %2502 = vst [vmem:[#allocation2 + $0x1d0] sm:$0xff] %v2446
    %2503 = vst.msk [vmem:[#allocation2 + $0x1d8] sm:$0xff] %vm1469, %v2447
    %v2504 = vld [vmem:[#allocation2] sm:$0xff]
    %v2505 = vld [vmem:[#allocation2 + $0x8] sm:$0xff]
    %v2506 = vld [vmem:[#allocation2 + $0x10] sm:$0xff]
    %v2507 = vld [vmem:[#allocation2 + $0x18] sm:$0xff]
    %v2508 = vld [vmem:[#allocation2 + $0x20] sm:$0xff]
    %v2509 = vld [vmem:[#allocation2 + $0x28] sm:$0xff]
    %v2510 = vld [vmem:[#allocation2 + $0x30] sm:$0xff]
    %v2511 = vld [vmem:[#allocation2 + $0x38] sm:$0xff]
    %v2512 = vld [vmem:[#allocation2 + $0x40] sm:$0xff]
    %v2513 = vld [vmem:[#allocation2 + $0x48] sm:$0xff]
    %v2514 = vld [vmem:[#allocation2 + $0x50] sm:$0xff]
    %v2515 = vld [vmem:[#allocation2 + $0x58] sm:$0xff]
    %v2516 = vld [vmem:[#allocation2 + $0x60] sm:$0xff]
    %v2517 = vld [vmem:[#allocation2 + $0x68] sm:$0xff]
    %v2518 = vld [vmem:[#allocation2 + $0x70] sm:$0xff]
    %v2519 = vld [vmem:[#allocation2 + $0x78] sm:$0xff]
    %v2520 = vld [vmem:[#allocation2 + $0x80] sm:$0xff]
    %v2521 = vld [vmem:[#allocation2 + $0x88] sm:$0xff]
    %v2522 = vld [vmem:[#allocation2 + $0x90] sm:$0xff]
    %v2523 = vld [vmem:[#allocation2 + $0x98] sm:$0xff]
    %v2524 = vld [vmem:[#allocation2 + $0xa0] sm:$0xff]
    %v2525 = vld [vmem:[#allocation2 + $0xa8] sm:$0xff]
    %v2526 = vld [vmem:[#allocation2 + $0xb0] sm:$0xff]
    %v2527 = vld [vmem:[#allocation2 + $0xb8] sm:$0xff]
    %v2528 = vld [vmem:[#allocation2 + $0xc0] sm:$0xff]
    %v2529 = vld [vmem:[#allocation2 + $0xc8] sm:$0xff]
    %v2530 = vld [vmem:[#allocation2 + $0xd0] sm:$0xff]
    %v2531 = vld [vmem:[#allocation2 + $0xd8] sm:$0xff]
    %v2532 = vld [vmem:[#allocation2 + $0xe0] sm:$0xff]
    %v2533 = vld [vmem:[#allocation2 + $0xe8] sm:$0xff]
    %v2534 = vld [vmem:[#allocation2 + $0xf0] sm:$0xff]
    %v2535 = vld [vmem:[#allocation2 + $0xf8] sm:$0xff]
    %v2536 = vld [vmem:[#allocation2 + $0x100] sm:$0xff]
    %v2537 = vld [vmem:[#allocation2 + $0x108] sm:$0xff]
    %v2538 = vld [vmem:[#allocation2 + $0x110] sm:$0xff]
    %v2539 = vld [vmem:[#allocation2 + $0x118] sm:$0xff]
    %v2540 = vld [vmem:[#allocation2 + $0x120] sm:$0xff]
    %v2541 = vld [vmem:[#allocation2 + $0x128] sm:$0xff]
    %v2542 = vld [vmem:[#allocation2 + $0x130] sm:$0xff]
    %v2543 = vld [vmem:[#allocation2 + $0x138] sm:$0xff]
    %v2544 = vld [vmem:[#allocation2 + $0x140] sm:$0xff]
    %v2545 = vld [vmem:[#allocation2 + $0x148] sm:$0xff]
    %v2546 = vld [vmem:[#allocation2 + $0x150] sm:$0xff]
    %v2547 = vld [vmem:[#allocation2 + $0x158] sm:$0xff]
    %v2548 = vld [vmem:[#allocation2 + $0x160] sm:$0xff]
    %v2549 = vld [vmem:[#allocation2 + $0x168] sm:$0xff]
    %v2550 = vld [vmem:[#allocation2 + $0x170] sm:$0xff]
    %v2551 = vld [vmem:[#allocation2 + $0x178] sm:$0xff]
    %v2552 = vld [vmem:[#allocation2 + $0x180] sm:$0xff]
    %v2553 = vld [vmem:[#allocation2 + $0x188] sm:$0xff]
    %v2554 = vld [vmem:[#allocation2 + $0x190] sm:$0xff]
    %v2555 = vld [vmem:[#allocation2 + $0x198] sm:$0xff]
    %v2556 = vld [vmem:[#allocation2 + $0x1a0] sm:$0xff]
    %v2557 = vld [vmem:[#allocation2 + $0x1a8] sm:$0xff]
    %v2558 = vld [vmem:[#allocation2 + $0x1b0] sm:$0xff]
    %v2559 = vld [vmem:[#allocation2 + $0x1b8] sm:$0xff]
    %v2560 = vld [vmem:[#allocation2 + $0x1c0] sm:$0xff]
    %v2561 = vld [vmem:[#allocation2 + $0x1c8] sm:$0xff]
    %v2562 = vld [vmem:[#allocation2 + $0x1d0] sm:$0xff]
    %v2563 = vld [vmem:[#allocation2 + $0x1d8] sm:$0xff]
    %v2564 = vld [vmem:[#allocation2 + $0x1e0] sm:$0xff]
    %v2565 = vld [vmem:[#allocation2 + $0x1e8] sm:$0xff]
    %v2566 = vld [vmem:[#allocation2 + $0x1f0] sm:$0xff]
    %v2567 = vld [vmem:[#allocation2 + $0x1f8] sm:$0xff]
    %v2568 = vpack.c.bf16 %v2508, %v2504
    %v2569 = vpack.c.bf16 %v2509, %v2505
    %v2570 = vpack.c.bf16 %v2510, %v2506
    %v2571 = vpack.c.bf16 %v2511, %v2507
    %v2572 = vpack.c.bf16 %v2516, %v2512
    %v2573 = vpack.c.bf16 %v2517, %v2513
    %v2574 = vpack.c.bf16 %v2518, %v2514
    %v2575 = vpack.c.bf16 %v2519, %v2515
    %v2576 = vpack.c.bf16 %v2524, %v2520
    %v2577 = vpack.c.bf16 %v2525, %v2521
    %v2578 = vpack.c.bf16 %v2526, %v2522
    %v2579 = vpack.c.bf16 %v2527, %v2523
    %v2580 = vpack.c.bf16 %v2532, %v2528
    %v2581 = vpack.c.bf16 %v2533, %v2529
    %v2582 = vpack.c.bf16 %v2534, %v2530
    %v2583 = vpack.c.bf16 %v2535, %v2531
    %v2584 = vpack.c.bf16 %v2540, %v2536
    %v2585 = vpack.c.bf16 %v2541, %v2537
    %v2586 = vpack.c.bf16 %v2542, %v2538
    %v2587 = vpack.c.bf16 %v2543, %v2539
    %v2588 = vpack.c.bf16 %v2548, %v2544
    %v2589 = vpack.c.bf16 %v2549, %v2545
    %v2590 = vpack.c.bf16 %v2550, %v2546
    %v2591 = vpack.c.bf16 %v2551, %v2547
    %v2592 = vpack.c.bf16 %v2556, %v2552
    %v2593 = vpack.c.bf16 %v2557, %v2553
    %v2594 = vpack.c.bf16 %v2558, %v2554
    %v2595 = vpack.c.bf16 %v2559, %v2555
    %v2596 = vpack.c.bf16 %v2564, %v2560
    %v2597 = vpack.c.bf16 %v2565, %v2561
    %v2598 = vpack.c.bf16 %v2566, %v2562
    %v2599 = vpack.c.bf16 %v2567, %v2563
    %v2600 = vld [vmem:[#allocation8] sm:$0xff]
    %v2601 = vld [vmem:[#allocation8 + $0x8] sm:$0xff]
    %v2602 = vld [vmem:[#allocation8 + $0x10] sm:$0xff]
    %v2603 = vld [vmem:[#allocation8 + $0x18] sm:$0xff]
    %v2604 = vld [vmem:[#allocation8 + $0x20] sm:$0xff]
    %v2605 = vld [vmem:[#allocation8 + $0x28] sm:$0xff]
    %v2606 = vld [vmem:[#allocation8 + $0x30] sm:$0xff]
    %v2607 = vld [vmem:[#allocation8 + $0x38] sm:$0xff]
    %v2608 = vld [vmem:[#allocation8 + $0x40] sm:$0xff]
    %v2609 = vld [vmem:[#allocation8 + $0x48] sm:$0xff]
    %v2610 = vld [vmem:[#allocation8 + $0x50] sm:$0xff]
    %v2611 = vld [vmem:[#allocation8 + $0x58] sm:$0xff]
    %v2612 = vld [vmem:[#allocation8 + $0x60] sm:$0xff]
    %v2613 = vld [vmem:[#allocation8 + $0x68] sm:$0xff]
    %v2614 = vld [vmem:[#allocation8 + $0x70] sm:$0xff]
    %v2615 = vld [vmem:[#allocation8 + $0x78] sm:$0xff]
    %v2616 = vld [vmem:[#allocation8 + $0x80] sm:$0xff]
    %v2617 = vld [vmem:[#allocation8 + $0x88] sm:$0xff]
    %v2618 = vld [vmem:[#allocation8 + $0x90] sm:$0xff]
    %v2619 = vld [vmem:[#allocation8 + $0x98] sm:$0xff]
    %v2620 = vld [vmem:[#allocation8 + $0xa0] sm:$0xff]
    %v2621 = vld [vmem:[#allocation8 + $0xa8] sm:$0xff]
    %v2622 = vld [vmem:[#allocation8 + $0xb0] sm:$0xff]
    %v2623 = vld [vmem:[#allocation8 + $0xb8] sm:$0xff]
    %v2624 = vld [vmem:[#allocation8 + $0xc0] sm:$0xff]
    %v2625 = vld [vmem:[#allocation8 + $0xc8] sm:$0xff]
    %v2626 = vld [vmem:[#allocation8 + $0xd0] sm:$0xff]
    %v2627 = vld [vmem:[#allocation8 + $0xd8] sm:$0xff]
    %v2628 = vld [vmem:[#allocation8 + $0xe0] sm:$0xff]
    %v2629 = vld [vmem:[#allocation8 + $0xe8] sm:$0xff]
    %v2630 = vld [vmem:[#allocation8 + $0xf0] sm:$0xff]
    %v2631 = vld [vmem:[#allocation8 + $0xf8] sm:$0xff]
    %v2632 = vld [vmem:[#allocation8 + $0x100] sm:$0xff]
    %v2633 = vld [vmem:[#allocation8 + $0x108] sm:$0xff]
    %v2634 = vld [vmem:[#allocation8 + $0x110] sm:$0xff]
    %v2635 = vld [vmem:[#allocation8 + $0x118] sm:$0xff]
    %v2636 = vld [vmem:[#allocation8 + $0x120] sm:$0xff]
    %v2637 = vld [vmem:[#allocation8 + $0x128] sm:$0xff]
    %v2638 = vld [vmem:[#allocation8 + $0x130] sm:$0xff]
    %v2639 = vld [vmem:[#allocation8 + $0x138] sm:$0xff]
    %v2640 = vld [vmem:[#allocation8 + $0x140] sm:$0xff]
    %v2641 = vld [vmem:[#allocation8 + $0x148] sm:$0xff]
    %v2642 = vld [vmem:[#allocation8 + $0x150] sm:$0xff]
    %v2643 = vld [vmem:[#allocation8 + $0x158] sm:$0xff]
    %v2644 = vld [vmem:[#allocation8 + $0x160] sm:$0xff]
    %v2645 = vld [vmem:[#allocation8 + $0x168] sm:$0xff]
    %v2646 = vld [vmem:[#allocation8 + $0x170] sm:$0xff]
    %v2647 = vld [vmem:[#allocation8 + $0x178] sm:$0xff]
    %v2648 = vld [vmem:[#allocation8 + $0x180] sm:$0xff]
    %v2649 = vld [vmem:[#allocation8 + $0x188] sm:$0xff]
    %v2650 = vld [vmem:[#allocation8 + $0x190] sm:$0xff]
    %v2651 = vld [vmem:[#allocation8 + $0x198] sm:$0xff]
    %v2652 = vld [vmem:[#allocation8 + $0x1a0] sm:$0xff]
    %v2653 = vld [vmem:[#allocation8 + $0x1a8] sm:$0xff]
    %v2654 = vld [vmem:[#allocation8 + $0x1b0] sm:$0xff]
    %v2655 = vld [vmem:[#allocation8 + $0x1b8] sm:$0xff]
    %v2656 = vld [vmem:[#allocation8 + $0x1c0] sm:$0xff]
    %v2657 = vld [vmem:[#allocation8 + $0x1c8] sm:$0xff]
    %v2658 = vld [vmem:[#allocation8 + $0x1d0] sm:$0xff]
    %v2659 = vld [vmem:[#allocation8 + $0x1d8] sm:$0xff]
    %v2660 = vld [vmem:[#allocation8 + $0x1e0] sm:$0xff]
    %v2661 = vld [vmem:[#allocation8 + $0x1e8] sm:$0xff]
    %v2662 = vld [vmem:[#allocation8 + $0x1f0] sm:$0xff]
    %v2663 = vld [vmem:[#allocation8 + $0x1f8] sm:$0xff]
    %v2664 = vld [vmem:[#allocation8 + $0x200] sm:$0xff]
    %v2665 = vld [vmem:[#allocation8 + $0x208] sm:$0xff]
    %v2666 = vld [vmem:[#allocation8 + $0x210] sm:$0xff]
    %v2667 = vld [vmem:[#allocation8 + $0x218] sm:$0xff]
    %v2668 = vld [vmem:[#allocation8 + $0x220] sm:$0xff]
    %v2669 = vld [vmem:[#allocation8 + $0x228] sm:$0xff]
    %v2670 = vld [vmem:[#allocation8 + $0x230] sm:$0xff]
    %v2671 = vld [vmem:[#allocation8 + $0x238] sm:$0xff]
    %v2672 = vld [vmem:[#allocation8 + $0x240] sm:$0xff]
    %v2673 = vld [vmem:[#allocation8 + $0x248] sm:$0xff]
    %v2674 = vld [vmem:[#allocation8 + $0x250] sm:$0xff]
    %v2675 = vld [vmem:[#allocation8 + $0x258] sm:$0xff]
    %v2676 = vld [vmem:[#allocation8 + $0x260] sm:$0xff]
    %v2677 = vld [vmem:[#allocation8 + $0x268] sm:$0xff]
    %v2678 = vld [vmem:[#allocation8 + $0x270] sm:$0xff]
    %v2679 = vld [vmem:[#allocation8 + $0x278] sm:$0xff]
    %v2680 = vld [vmem:[#allocation8 + $0x280] sm:$0xff]
    %v2681 = vld [vmem:[#allocation8 + $0x288] sm:$0xff]
    %v2682 = vld [vmem:[#allocation8 + $0x290] sm:$0xff]
    %v2683 = vld [vmem:[#allocation8 + $0x298] sm:$0xff]
    %v2684 = vld [vmem:[#allocation8 + $0x2a0] sm:$0xff]
    %v2685 = vld [vmem:[#allocation8 + $0x2a8] sm:$0xff]
    %v2686 = vld [vmem:[#allocation8 + $0x2b0] sm:$0xff]
    %v2687 = vld [vmem:[#allocation8 + $0x2b8] sm:$0xff]
    %v2688 = vld [vmem:[#allocation8 + $0x2c0] sm:$0xff]
    %v2689 = vld [vmem:[#allocation8 + $0x2c8] sm:$0xff]
    %v2690 = vld [vmem:[#allocation8 + $0x2d0] sm:$0xff]
    %v2691 = vld [vmem:[#allocation8 + $0x2d8] sm:$0xff]
    %v2692 = vld [vmem:[#allocation8 + $0x2e0] sm:$0xff]
    %v2693 = vld [vmem:[#allocation8 + $0x2e8] sm:$0xff]
    %v2694 = vld [vmem:[#allocation8 + $0x2f0] sm:$0xff]
    %v2695 = vld [vmem:[#allocation8 + $0x2f8] sm:$0xff]
    %v2696 = vld [vmem:[#allocation8 + $0x300] sm:$0xff]
    %v2697 = vld [vmem:[#allocation8 + $0x308] sm:$0xff]
    %v2698 = vld [vmem:[#allocation8 + $0x310] sm:$0xff]
    %v2699 = vld [vmem:[#allocation8 + $0x318] sm:$0xff]
    %v2700 = vld [vmem:[#allocation8 + $0x320] sm:$0xff]
    %v2701 = vld [vmem:[#allocation8 + $0x328] sm:$0xff]
    %v2702 = vld [vmem:[#allocation8 + $0x330] sm:$0xff]
    %v2703 = vld [vmem:[#allocation8 + $0x338] sm:$0xff]
    %v2704 = vld [vmem:[#allocation8 + $0x340] sm:$0xff]
    %v2705 = vld [vmem:[#allocation8 + $0x348] sm:$0xff]
    %v2706 = vld [vmem:[#allocation8 + $0x350] sm:$0xff]
    %v2707 = vld [vmem:[#allocation8 + $0x358] sm:$0xff]
    %v2708 = vld [vmem:[#allocation8 + $0x360] sm:$0xff]
    %v2709 = vld [vmem:[#allocation8 + $0x368] sm:$0xff]
    %v2710 = vld [vmem:[#allocation8 + $0x370] sm:$0xff]
    %v2711 = vld [vmem:[#allocation8 + $0x378] sm:$0xff]
    %v2712 = vld [vmem:[#allocation9] sm:$0xf]
    %v2714 = vperm.slane %v2712, 0
    %v2715 = vperm.slane %v2712, 1
    %v2716 = vperm.slane %v2712, 2
    %v2717 = vperm.slane %v2712, 3
    %v2834 = vunpack.c.l.b16 %v2600
    %v2835 = vunpack.c.h.b16 %v2600
    %v2836 = vunpack.c.l.b16 %v2601
    %v2837 = vunpack.c.h.b16 %v2601
    %v2838 = vunpack.c.l.b16 %v2602
    %v2839 = vunpack.c.h.b16 %v2602
    %v2840 = vunpack.c.l.b16 %v2603
    %v2841 = vunpack.c.h.b16 %v2603
    %v2842 = vunpack.c.l.b16 %v2604
    %v2843 = vunpack.c.h.b16 %v2604
    %v2844 = vunpack.c.l.b16 %v2605
    %v2845 = vunpack.c.h.b16 %v2605
    %v2846 = vunpack.c.l.b16 %v2606
    %v2847 = vunpack.c.h.b16 %v2606
    %v2848 = vunpack.c.l.b16 %v2607
    %v2849 = vunpack.c.h.b16 %v2607
    %v2850 = vunpack.c.l.b16 %v2608
    %v2851 = vunpack.c.h.b16 %v2608
    %v2852 = vunpack.c.l.b16 %v2609
    %v2853 = vunpack.c.h.b16 %v2609
    %v2854 = vunpack.c.l.b16 %v2610
    %v2855 = vunpack.c.h.b16 %v2610
    %v2856 = vunpack.c.l.b16 %v2611
    %v2857 = vunpack.c.h.b16 %v2611
    %v2858 = vunpack.c.l.b16 %v2612
    %v2859 = vunpack.c.h.b16 %v2612
    %v2860 = vunpack.c.l.b16 %v2613
    %v2861 = vunpack.c.h.b16 %v2613
    %v2862 = vunpack.c.l.b16 %v2614
    %v2863 = vunpack.c.h.b16 %v2614
    %v2864 = vunpack.c.l.b16 %v2615
    %v2865 = vunpack.c.h.b16 %v2615
    %v2866 = vunpack.c.l.b16 %v2616
    %v2867 = vunpack.c.h.b16 %v2616
    %v2868 = vunpack.c.l.b16 %v2617
    %v2869 = vunpack.c.h.b16 %v2617
    %v2870 = vunpack.c.l.b16 %v2618
    %v2871 = vunpack.c.h.b16 %v2618
    %v2872 = vunpack.c.l.b16 %v2619
    %v2873 = vunpack.c.h.b16 %v2619
    %v2874 = vunpack.c.l.b16 %v2620
    %v2875 = vunpack.c.h.b16 %v2620
    %v2876 = vunpack.c.l.b16 %v2621
    %v2877 = vunpack.c.h.b16 %v2621
    %v2878 = vunpack.c.l.b16 %v2622
    %v2879 = vunpack.c.h.b16 %v2622
    %v2880 = vunpack.c.l.b16 %v2623
    %v2881 = vunpack.c.h.b16 %v2623
    %v2882 = vunpack.c.l.b16 %v2624
    %v2883 = vunpack.c.h.b16 %v2624
    %v2884 = vunpack.c.l.b16 %v2625
    %v2885 = vunpack.c.h.b16 %v2625
    %v2886 = vunpack.c.l.b16 %v2626
    %v2887 = vunpack.c.h.b16 %v2626
    %v2888 = vunpack.c.l.b16 %v2627
    %v2889 = vunpack.c.h.b16 %v2627
    %v2890 = vunpack.c.l.b16 %v2628
    %v2891 = vunpack.c.h.b16 %v2628
    %v2892 = vunpack.c.l.b16 %v2629
    %v2893 = vunpack.c.h.b16 %v2629
    %v2894 = vunpack.c.l.b16 %v2630
    %v2895 = vunpack.c.h.b16 %v2630
    %v2896 = vunpack.c.l.b16 %v2631
    %v2897 = vunpack.c.h.b16 %v2631
    %v2898 = vunpack.c.l.b16 %v2632
    %v2899 = vunpack.c.h.b16 %v2632
    %v2900 = vunpack.c.l.b16 %v2633
    %v2901 = vunpack.c.h.b16 %v2633
    %v2902 = vunpack.c.l.b16 %v2634
    %v2903 = vunpack.c.h.b16 %v2634
    %v2904 = vunpack.c.l.b16 %v2635
    %v2905 = vunpack.c.h.b16 %v2635
    %v2906 = vunpack.c.l.b16 %v2636
    %v2907 = vunpack.c.h.b16 %v2636
    %v2908 = vunpack.c.l.b16 %v2637
    %v2909 = vunpack.c.h.b16 %v2637
    %v2910 = vunpack.c.l.b16 %v2638
    %v2911 = vunpack.c.h.b16 %v2638
    %v2912 = vunpack.c.l.b16 %v2639
    %v2913 = vunpack.c.h.b16 %v2639
    %v2914 = vunpack.c.l.b16 %v2640
    %v2915 = vunpack.c.h.b16 %v2640
    %v2916 = vunpack.c.l.b16 %v2641
    %v2917 = vunpack.c.h.b16 %v2641
    %v2918 = vunpack.c.l.b16 %v2642
    %v2919 = vunpack.c.h.b16 %v2642
    %v2920 = vunpack.c.l.b16 %v2643
    %v2921 = vunpack.c.h.b16 %v2643
    %v2922 = vunpack.c.l.b16 %v2644
    %v2923 = vunpack.c.h.b16 %v2644
    %v2924 = vunpack.c.l.b16 %v2645
    %v2925 = vunpack.c.h.b16 %v2645
    %v2926 = vunpack.c.l.b16 %v2646
    %v2927 = vunpack.c.h.b16 %v2646
    %v2928 = vunpack.c.l.b16 %v2647
    %v2929 = vunpack.c.h.b16 %v2647
    %v2930 = vunpack.c.l.b16 %v2648
    %v2931 = vunpack.c.h.b16 %v2648
    %v2932 = vunpack.c.l.b16 %v2649
    %v2933 = vunpack.c.h.b16 %v2649
    %v2934 = vunpack.c.l.b16 %v2650
    %v2935 = vunpack.c.h.b16 %v2650
    %v2936 = vunpack.c.l.b16 %v2651
    %v2937 = vunpack.c.h.b16 %v2651
    %v2938 = vunpack.c.l.b16 %v2652
    %v2939 = vunpack.c.h.b16 %v2652
    %v2940 = vunpack.c.l.b16 %v2653
    %v2941 = vunpack.c.h.b16 %v2653
    %v2942 = vunpack.c.l.b16 %v2654
    %v2943 = vunpack.c.h.b16 %v2654
    %v2944 = vunpack.c.l.b16 %v2655
    %v2945 = vunpack.c.h.b16 %v2655
    %v2946 = vunpack.c.l.b16 %v2656
    %v2947 = vunpack.c.h.b16 %v2656
    %v2948 = vunpack.c.l.b16 %v2657
    %v2949 = vunpack.c.h.b16 %v2657
    %v2950 = vunpack.c.l.b16 %v2658
    %v2951 = vunpack.c.h.b16 %v2658
    %v2952 = vunpack.c.l.b16 %v2659
    %v2953 = vunpack.c.h.b16 %v2659
    %v2954 = vunpack.c.l.b16 %v2660
    %v2955 = vunpack.c.h.b16 %v2660
    %v2956 = vunpack.c.l.b16 %v2661
    %v2957 = vunpack.c.h.b16 %v2661
    %v2958 = vunpack.c.l.b16 %v2662
    %v2959 = vunpack.c.h.b16 %v2662
    %v2960 = vunpack.c.l.b16 %v2663
    %v2961 = vunpack.c.h.b16 %v2663
    %v2962 = vunpack.c.l.b16 %v2664
    %v2963 = vunpack.c.h.b16 %v2664
    %v2964 = vunpack.c.l.b16 %v2665
    %v2965 = vunpack.c.h.b16 %v2665
    %v2966 = vunpack.c.l.b16 %v2666
    %v2967 = vunpack.c.h.b16 %v2666
    %v2968 = vunpack.c.l.b16 %v2667
    %v2969 = vunpack.c.h.b16 %v2667
    %v2970 = vunpack.c.l.b16 %v2668
    %v2971 = vunpack.c.h.b16 %v2668
    %v2972 = vunpack.c.l.b16 %v2669
    %v2973 = vunpack.c.h.b16 %v2669
    %v2974 = vunpack.c.l.b16 %v2670
    %v2975 = vunpack.c.h.b16 %v2670
    %v2976 = vunpack.c.l.b16 %v2671
    %v2977 = vunpack.c.h.b16 %v2671
    %v2978 = vunpack.c.l.b16 %v2672
    %v2979 = vunpack.c.h.b16 %v2672
    %v2980 = vunpack.c.l.b16 %v2673
    %v2981 = vunpack.c.h.b16 %v2673
    %v2982 = vunpack.c.l.b16 %v2674
    %v2983 = vunpack.c.h.b16 %v2674
    %v2984 = vunpack.c.l.b16 %v2675
    %v2985 = vunpack.c.h.b16 %v2675
    %v2986 = vunpack.c.l.b16 %v2676
    %v2987 = vunpack.c.h.b16 %v2676
    %v2988 = vunpack.c.l.b16 %v2677
    %v2989 = vunpack.c.h.b16 %v2677
    %v2990 = vunpack.c.l.b16 %v2678
    %v2991 = vunpack.c.h.b16 %v2678
    %v2992 = vunpack.c.l.b16 %v2679
    %v2993 = vunpack.c.h.b16 %v2679
    %v2994 = vunpack.c.l.b16 %v2680
    %v2995 = vunpack.c.h.b16 %v2680
    %v2996 = vunpack.c.l.b16 %v2681
    %v2997 = vunpack.c.h.b16 %v2681
    %v2998 = vunpack.c.l.b16 %v2682
    %v2999 = vunpack.c.h.b16 %v2682
    %v3000 = vunpack.c.l.b16 %v2683
    %v3001 = vunpack.c.h.b16 %v2683
    %v3002 = vunpack.c.l.b16 %v2684
    %v3003 = vunpack.c.h.b16 %v2684
    %v3004 = vunpack.c.l.b16 %v2685
    %v3005 = vunpack.c.h.b16 %v2685
    %v3006 = vunpack.c.l.b16 %v2686
    %v3007 = vunpack.c.h.b16 %v2686
    %v3008 = vunpack.c.l.b16 %v2687
    %v3009 = vunpack.c.h.b16 %v2687
    %v3010 = vunpack.c.l.b16 %v2688
    %v3011 = vunpack.c.h.b16 %v2688
    %v3012 = vunpack.c.l.b16 %v2689
    %v3013 = vunpack.c.h.b16 %v2689
    %v3014 = vunpack.c.l.b16 %v2690
    %v3015 = vunpack.c.h.b16 %v2690
    %v3016 = vunpack.c.l.b16 %v2691
    %v3017 = vunpack.c.h.b16 %v2691
    %v3018 = vunpack.c.l.b16 %v2692
    %v3019 = vunpack.c.h.b16 %v2692
    %v3020 = vunpack.c.l.b16 %v2693
    %v3021 = vunpack.c.h.b16 %v2693
    %v3022 = vunpack.c.l.b16 %v2694
    %v3023 = vunpack.c.h.b16 %v2694
    %v3024 = vunpack.c.l.b16 %v2695
    %v3025 = vunpack.c.h.b16 %v2695
    %v3026 = vunpack.c.l.b16 %v2696
    %v3027 = vunpack.c.h.b16 %v2696
    %v3028 = vunpack.c.l.b16 %v2697
    %v3029 = vunpack.c.h.b16 %v2697
    %v3030 = vunpack.c.l.b16 %v2698
    %v3031 = vunpack.c.h.b16 %v2698
    %v3032 = vunpack.c.l.b16 %v2699
    %v3033 = vunpack.c.h.b16 %v2699
    %v3034 = vunpack.c.l.b16 %v2700
    %v3035 = vunpack.c.h.b16 %v2700
    %v3036 = vunpack.c.l.b16 %v2701
    %v3037 = vunpack.c.h.b16 %v2701
    %v3038 = vunpack.c.l.b16 %v2702
    %v3039 = vunpack.c.h.b16 %v2702
    %v3040 = vunpack.c.l.b16 %v2703
    %v3041 = vunpack.c.h.b16 %v2703
    %v3042 = vunpack.c.l.b16 %v2704
    %v3043 = vunpack.c.h.b16 %v2704
    %v3044 = vunpack.c.l.b16 %v2705
    %v3045 = vunpack.c.h.b16 %v2705
    %v3046 = vunpack.c.l.b16 %v2706
    %v3047 = vunpack.c.h.b16 %v2706
    %v3048 = vunpack.c.l.b16 %v2707
    %v3049 = vunpack.c.h.b16 %v2707
    %v3050 = vunpack.c.l.b16 %v2708
    %v3051 = vunpack.c.h.b16 %v2708
    %v3052 = vunpack.c.l.b16 %v2709
    %v3053 = vunpack.c.h.b16 %v2709
    %v3054 = vunpack.c.l.b16 %v2710
    %v3055 = vunpack.c.h.b16 %v2710
    %v3056 = vunpack.c.l.b16 %v2711
    %v3057 = vunpack.c.h.b16 %v2711
    %v3058 = vpack.c.b16 %v2838, %v2834
    %v3059 = vpack.c.b16 %v2839, %v2835
    %v3060 = vpack.c.b16 %v2840, %v2836
    %v3061 = vpack.c.b16 %v2841, %v2837
    %v3062 = vpack.c.b16 %v2846, %v2842
    %v3063 = vpack.c.b16 %v2847, %v2843
    %v3064 = vpack.c.b16 %v2848, %v2844
    %v3065 = vpack.c.b16 %v2849, %v2845
    %v3066 = vpack.c.b16 %v2854, %v2850
    %v3067 = vpack.c.b16 %v2855, %v2851
    %v3068 = vpack.c.b16 %v2856, %v2852
    %v3069 = vpack.c.b16 %v2857, %v2853
    %v3070 = vpack.c.b16 %v2862, %v2858
    %v3071 = vpack.c.b16 %v2863, %v2859
    %v3072 = vpack.c.b16 %v2864, %v2860
    %v3073 = vpack.c.b16 %v2865, %v2861
    %v3074 = vpack.c.b16 %v2870, %v2866
    %v3075 = vpack.c.b16 %v2871, %v2867
    %v3076 = vpack.c.b16 %v2872, %v2868
    %v3077 = vpack.c.b16 %v2873, %v2869
    %v3078 = vpack.c.b16 %v2878, %v2874
    %v3079 = vpack.c.b16 %v2879, %v2875
    %v3080 = vpack.c.b16 %v2880, %v2876
    %v3081 = vpack.c.b16 %v2881, %v2877
    %v3082 = vpack.c.b16 %v2886, %v2882
    %v3083 = vpack.c.b16 %v2887, %v2883
    %v3084 = vpack.c.b16 %v2888, %v2884
    %v3085 = vpack.c.b16 %v2889, %v2885
    %v3086 = vpack.c.b16 %v2894, %v2890
    %v3087 = vpack.c.b16 %v2895, %v2891
    %v3088 = vpack.c.b16 %v2896, %v2892
    %v3089 = vpack.c.b16 %v2897, %v2893
    %v3090 = vpack.c.b16 %v2902, %v2898
    %v3091 = vpack.c.b16 %v2903, %v2899
    %v3092 = vpack.c.b16 %v2904, %v2900
    %v3093 = vpack.c.b16 %v2905, %v2901
    %v3094 = vpack.c.b16 %v2910, %v2906
    %v3095 = vpack.c.b16 %v2911, %v2907
    %v3096 = vpack.c.b16 %v2912, %v2908
    %v3097 = vpack.c.b16 %v2913, %v2909
    %v3098 = vpack.c.b16 %v2918, %v2914
    %v3099 = vpack.c.b16 %v2919, %v2915
    %v3100 = vpack.c.b16 %v2920, %v2916
    %v3101 = vpack.c.b16 %v2921, %v2917
    %v3102 = vpack.c.b16 %v2926, %v2922
    %v3103 = vpack.c.b16 %v2927, %v2923
    %v3104 = vpack.c.b16 %v2928, %v2924
    %v3105 = vpack.c.b16 %v2929, %v2925
    %v3106 = vpack.c.b16 %v2934, %v2930
    %v3107 = vpack.c.b16 %v2935, %v2931
    %v3108 = vpack.c.b16 %v2936, %v2932
    %v3109 = vpack.c.b16 %v2937, %v2933
    %v3110 = vpack.c.b16 %v2942, %v2938
    %v3111 = vpack.c.b16 %v2943, %v2939
    %v3112 = vpack.c.b16 %v2944, %v2940
    %v3113 = vpack.c.b16 %v2945, %v2941
    %v3114 = vpack.c.b16 %v2950, %v2946
    %v3115 = vpack.c.b16 %v2951, %v2947
    %v3116 = vpack.c.b16 %v2952, %v2948
    %v3117 = vpack.c.b16 %v2953, %v2949
    %v3118 = vpack.c.b16 %v2958, %v2954
    %v3119 = vpack.c.b16 %v2959, %v2955
    %v3120 = vpack.c.b16 %v2960, %v2956
    %v3121 = vpack.c.b16 %v2961, %v2957
    %v3122 = vpack.c.b16 %v2966, %v2962
    %v3123 = vpack.c.b16 %v2967, %v2963
    %v3124 = vpack.c.b16 %v2968, %v2964
    %v3125 = vpack.c.b16 %v2969, %v2965
    %v3126 = vpack.c.b16 %v2974, %v2970
    %v3127 = vpack.c.b16 %v2975, %v2971
    %v3128 = vpack.c.b16 %v2976, %v2972
    %v3129 = vpack.c.b16 %v2977, %v2973
    %v3130 = vpack.c.b16 %v2982, %v2978
    %v3131 = vpack.c.b16 %v2983, %v2979
    %v3132 = vpack.c.b16 %v2984, %v2980
    %v3133 = vpack.c.b16 %v2985, %v2981
    %v3134 = vpack.c.b16 %v2990, %v2986
    %v3135 = vpack.c.b16 %v2991, %v2987
    %v3136 = vpack.c.b16 %v2992, %v2988
    %v3137 = vpack.c.b16 %v2993, %v2989
    %v3138 = vpack.c.b16 %v2998, %v2994
    %v3139 = vpack.c.b16 %v2999, %v2995
    %v3140 = vpack.c.b16 %v3000, %v2996
    %v3141 = vpack.c.b16 %v3001, %v2997
    %v3142 = vpack.c.b16 %v3006, %v3002
    %v3143 = vpack.c.b16 %v3007, %v3003
    %v3144 = vpack.c.b16 %v3008, %v3004
    %v3145 = vpack.c.b16 %v3009, %v3005
    %v3146 = vpack.c.b16 %v3014, %v3010
    %v3147 = vpack.c.b16 %v3015, %v3011
    %v3148 = vpack.c.b16 %v3016, %v3012
    %v3149 = vpack.c.b16 %v3017, %v3013
    %v3150 = vpack.c.b16 %v3022, %v3018
    %v3151 = vpack.c.b16 %v3023, %v3019
    %v3152 = vpack.c.b16 %v3024, %v3020
    %v3153 = vpack.c.b16 %v3025, %v3021
    %v3154 = vpack.c.b16 %v3030, %v3026
    %v3155 = vpack.c.b16 %v3031, %v3027
    %v3156 = vpack.c.b16 %v3032, %v3028
    %v3157 = vpack.c.b16 %v3033, %v3029
    %v3158 = vpack.c.b16 %v3038, %v3034
    %v3159 = vpack.c.b16 %v3039, %v3035
    %v3160 = vpack.c.b16 %v3040, %v3036
    %v3161 = vpack.c.b16 %v3041, %v3037
    %v3162 = vpack.c.b16 %v3046, %v3042
    %v3163 = vpack.c.b16 %v3047, %v3043
    %v3164 = vpack.c.b16 %v3048, %v3044
    %v3165 = vpack.c.b16 %v3049, %v3045
    %v3166 = vpack.c.b16 %v3054, %v3050
    %v3167 = vpack.c.b16 %v3055, %v3051
    %v3168 = vpack.c.b16 %v3056, %v3052
    %v3169 = vpack.c.b16 %v3057, %v3053
    %v3283 = vsel %vm1469, %v2571, 0
    %v3286 = vsel %vm1469, %v2575, 0
    %v3289 = vsel %vm1469, %v2579, 0
    %v3292 = vsel %vm1469, %v2583, 0
    %v3295 = vsel %vm1469, %v2587, 0
    %v3298 = vsel %vm1469, %v2591, 0
    %v3301 = vsel %vm1469, %v2595, 0
    %v3304 = vsel %vm1469, %v2599, 0
    %3306 = vmatpush.bf16.msra.mxu0 %v3086
    %3307 = vmatpush.bf16.msra.mxu0 %v3082
    %3308 = vmatpush.bf16.msra.mxu0 %v3078
    %3309 = vmatpush.bf16.msra.mxu0 %v3074
    %3310 = vmatpush.bf16.msra.mxu0 %v3070
    %3311 = vmatpush.bf16.msra.mxu0 %v3066
    %3312 = vmatpush.bf16.msra.mxu0 %v3062
    %3313 = vmatpush.bf16.msra.mxu0 %v3058
    %3314 = vmatmul.bf16.gmra.mxu0 %v2568
    %v3315 = vpop.f32.mrf.mxu0
    %v3316 = vadd.f32 %v2714, %v3315
    %v3317 = vpop.f32.mrf.mxu0
    %v3318 = vadd.f32 %v2714, %v3317
    %3319 = vmatmul.bf16.gmra.mxu0 %v2572
    %v3320 = vpop.f32.mrf.mxu0
    %v3321 = vadd.f32 %v2714, %v3320
    %v3322 = vpop.f32.mrf.mxu0
    %v3323 = vadd.f32 %v2714, %v3322
    %3324 = vmatmul.bf16.gmra.mxu0 %v2576
    %v3325 = vpop.f32.mrf.mxu0
    %v3326 = vadd.f32 %v2714, %v3325
    %v3327 = vpop.f32.mrf.mxu0
    %v3328 = vadd.f32 %v2714, %v3327
    %3329 = vmatmul.bf16.gmra.mxu0 %v2580
    %v3330 = vpop.f32.mrf.mxu0
    %v3331 = vadd.f32 %v2714, %v3330
    %v3332 = vpop.f32.mrf.mxu0
    %v3333 = vadd.f32 %v2714, %v3332
    %3334 = vmatmul.bf16.gmra.mxu0 %v2584
    %v3335 = vpop.f32.mrf.mxu0
    %v3336 = vadd.f32 %v2714, %v3335
    %v3337 = vpop.f32.mrf.mxu0
    %v3338 = vadd.f32 %v2714, %v3337
    %3339 = vmatmul.bf16.gmra.mxu0 %v2588
    %v3340 = vpop.f32.mrf.mxu0
    %v3341 = vadd.f32 %v2714, %v3340
    %v3342 = vpop.f32.mrf.mxu0
    %v3343 = vadd.f32 %v2714, %v3342
    %3344 = vmatmul.bf16.gmra.mxu0 %v2592
    %v3345 = vpop.f32.mrf.mxu0
    %v3346 = vadd.f32 %v2714, %v3345
    %v3347 = vpop.f32.mrf.mxu0
    %v3348 = vadd.f32 %v2714, %v3347
    %3349 = vmatmul.bf16.gmra.mxu0 %v2596
    %v3350 = vpop.f32.mrf.mxu0
    %v3351 = vadd.f32 %v2714, %v3350
    %v3352 = vpop.f32.mrf.mxu0
    %v3353 = vadd.f32 %v2714, %v3352
    %3354 = vdwg.mxu0
    %3355 = vmatpush.bf16.msra.mxu0 %v3118
    %3356 = vmatpush.bf16.msra.mxu0 %v3114
    %3357 = vmatpush.bf16.msra.mxu0 %v3110
    %3358 = vmatpush.bf16.msra.mxu0 %v3106
    %3359 = vmatpush.bf16.msra.mxu0 %v3102
    %3360 = vmatpush.bf16.msra.mxu0 %v3098
    %3361 = vmatpush.bf16.msra.mxu0 %v3094
    %3362 = vmatpush.bf16.msra.mxu0 %v3090
    %3363 = vmatmul.bf16.gmra.mxu0 %v2569
    %v3364 = vpop.f32.mrf.mxu0
    %v3365 = vadd.f32 %v3316, %v3364
    %v3366 = vpop.f32.mrf.mxu0
    %v3367 = vadd.f32 %v3318, %v3366
    %3368 = vmatmul.bf16.gmra.mxu0 %v2573
    %v3369 = vpop.f32.mrf.mxu0
    %v3370 = vadd.f32 %v3321, %v3369
    %v3371 = vpop.f32.mrf.mxu0
    %v3372 = vadd.f32 %v3323, %v3371
    %3373 = vmatmul.bf16.gmra.mxu0 %v2577
    %v3374 = vpop.f32.mrf.mxu0
    %v3375 = vadd.f32 %v3326, %v3374
    %v3376 = vpop.f32.mrf.mxu0
    %v3377 = vadd.f32 %v3328, %v3376
    %3378 = vmatmul.bf16.gmra.mxu0 %v2581
    %v3379 = vpop.f32.mrf.mxu0
    %v3380 = vadd.f32 %v3331, %v3379
    %v3381 = vpop.f32.mrf.mxu0
    %v3382 = vadd.f32 %v3333, %v3381
    %3383 = vmatmul.bf16.gmra.mxu0 %v2585
    %v3384 = vpop.f32.mrf.mxu0
    %v3385 = vadd.f32 %v3336, %v3384
    %v3386 = vpop.f32.mrf.mxu0
    %v3387 = vadd.f32 %v3338, %v3386
    %3388 = vmatmul.bf16.gmra.mxu0 %v2589
    %v3389 = vpop.f32.mrf.mxu0
    %v3390 = vadd.f32 %v3341, %v3389
    %v3391 = vpop.f32.mrf.mxu0
    %v3392 = vadd.f32 %v3343, %v3391
    %3393 = vmatmul.bf16.gmra.mxu0 %v2593
    %v3394 = vpop.f32.mrf.mxu0
    %v3395 = vadd.f32 %v3346, %v3394
    %v3396 = vpop.f32.mrf.mxu0
    %v3397 = vadd.f32 %v3348, %v3396
    %3398 = vmatmul.bf16.gmra.mxu0 %v2597
    %v3399 = vpop.f32.mrf.mxu0
    %v3400 = vadd.f32 %v3351, %v3399
    %v3401 = vpop.f32.mrf.mxu0
    %v3402 = vadd.f32 %v3353, %v3401
    %3403 = vdwg.mxu0
    %3404 = vmatpush.bf16.msra.mxu0 %v3150
    %3405 = vmatpush.bf16.msra.mxu0 %v3146
    %3406 = vmatpush.bf16.msra.mxu0 %v3142
    %3407 = vmatpush.bf16.msra.mxu0 %v3138
    %3408 = vmatpush.bf16.msra.mxu0 %v3134
    %3409 = vmatpush.bf16.msra.mxu0 %v3130
    %3410 = vmatpush.bf16.msra.mxu0 %v3126
    %3411 = vmatpush.bf16.msra.mxu0 %v3122
    %3412 = vmatmul.bf16.gmra.mxu0 %v2570
    %v3413 = vpop.f32.mrf.mxu0
    %v3414 = vadd.f32 %v3365, %v3413
    %v3415 = vpop.f32.mrf.mxu0
    %v3416 = vadd.f32 %v3367, %v3415
    %3417 = vmatmul.bf16.gmra.mxu0 %v2574
    %v3418 = vpop.f32.mrf.mxu0
    %v3419 = vadd.f32 %v3370, %v3418
    %v3420 = vpop.f32.mrf.mxu0
    %v3421 = vadd.f32 %v3372, %v3420
    %3422 = vmatmul.bf16.gmra.mxu0 %v2578
    %v3423 = vpop.f32.mrf.mxu0
    %v3424 = vadd.f32 %v3375, %v3423
    %v3425 = vpop.f32.mrf.mxu0
    %v3426 = vadd.f32 %v3377, %v3425
    %3427 = vmatmul.bf16.gmra.mxu0 %v2582
    %v3428 = vpop.f32.mrf.mxu0
    %v3429 = vadd.f32 %v3380, %v3428
    %v3430 = vpop.f32.mrf.mxu0
    %v3431 = vadd.f32 %v3382, %v3430
    %3432 = vmatmul.bf16.gmra.mxu0 %v2586
    %v3433 = vpop.f32.mrf.mxu0
    %v3434 = vadd.f32 %v3385, %v3433
    %v3435 = vpop.f32.mrf.mxu0
    %v3436 = vadd.f32 %v3387, %v3435
    %3437 = vmatmul.bf16.gmra.mxu0 %v2590
    %v3438 = vpop.f32.mrf.mxu0
    %v3439 = vadd.f32 %v3390, %v3438
    %v3440 = vpop.f32.mrf.mxu0
    %v3441 = vadd.f32 %v3392, %v3440
    %3442 = vmatmul.bf16.gmra.mxu0 %v2594
    %v3443 = vpop.f32.mrf.mxu0
    %v3444 = vadd.f32 %v3395, %v3443
    %v3445 = vpop.f32.mrf.mxu0
    %v3446 = vadd.f32 %v3397, %v3445
    %3447 = vmatmul.bf16.gmra.mxu0 %v2598
    %v3448 = vpop.f32.mrf.mxu0
    %v3449 = vadd.f32 %v3400, %v3448
    %v3450 = vpop.f32.mrf.mxu0
    %v3451 = vadd.f32 %v3402, %v3450
    %3452 = vdwg.mxu0
    %3453 = vmatpush.bf16.msra.mxu0 0
    %3454 = vmatpush.bf16.msra.mxu0 0
    %3455 = vmatpush.bf16.msra.mxu0 0
    %3456 = vmatpush.bf16.msra.mxu0 0
    %3457 = vmatpush.bf16.msra.mxu0 %v3166
    %3458 = vmatpush.bf16.msra.mxu0 %v3162
    %3459 = vmatpush.bf16.msra.mxu0 %v3158
    %3460 = vmatpush.bf16.msra.mxu0 %v3154
    %3461 = vmatmul.bf16.gmra.mxu0 %v3283
    %v3462 = vpop.f32.mrf.mxu0
    %v3463 = vadd.f32 %v3414, %v3462
    %v3464 = vpop.f32.mrf.mxu0
    %v3465 = vadd.f32 %v3416, %v3464
    %3466 = vmatmul.bf16.gmra.mxu0 %v3286
    %v3467 = vpop.f32.mrf.mxu0
    %v3468 = vadd.f32 %v3419, %v3467
    %v3469 = vpop.f32.mrf.mxu0
    %v3470 = vadd.f32 %v3421, %v3469
    %3471 = vmatmul.bf16.gmra.mxu0 %v3289
    %v3472 = vpop.f32.mrf.mxu0
    %v3473 = vadd.f32 %v3424, %v3472
    %v3474 = vpop.f32.mrf.mxu0
    %v3475 = vadd.f32 %v3426, %v3474
    %3476 = vmatmul.bf16.gmra.mxu0 %v3292
    %v3477 = vpop.f32.mrf.mxu0
    %v3478 = vadd.f32 %v3429, %v3477
    %v3479 = vpop.f32.mrf.mxu0
    %v3480 = vadd.f32 %v3431, %v3479
    %3481 = vmatmul.bf16.gmra.mxu0 %v3295
    %v3482 = vpop.f32.mrf.mxu0
    %v3483 = vadd.f32 %v3434, %v3482
    %v3484 = vpop.f32.mrf.mxu0
    %v3485 = vadd.f32 %v3436, %v3484
    %3486 = vmatmul.bf16.gmra.mxu0 %v3298
    %v3487 = vpop.f32.mrf.mxu0
    %v3488 = vadd.f32 %v3439, %v3487
    %v3489 = vpop.f32.mrf.mxu0
    %v3490 = vadd.f32 %v3441, %v3489
    %3491 = vmatmul.bf16.gmra.mxu0 %v3301
    %v3492 = vpop.f32.mrf.mxu0
    %v3493 = vadd.f32 %v3444, %v3492
    %v3494 = vpop.f32.mrf.mxu0
    %v3495 = vadd.f32 %v3446, %v3494
    %3496 = vmatmul.bf16.gmra.mxu0 %v3304
    %v3497 = vpop.f32.mrf.mxu0
    %v3498 = vadd.f32 %v3449, %v3497
    %v3499 = vpop.f32.mrf.mxu0
    %v3500 = vadd.f32 %v3451, %v3499
    %3501 = vdwg.mxu0
    %3502 = vmatpush.bf16.msra.mxu0 %v3087
    %3503 = vmatpush.bf16.msra.mxu0 %v3083
    %3504 = vmatpush.bf16.msra.mxu0 %v3079
    %3505 = vmatpush.bf16.msra.mxu0 %v3075
    %3506 = vmatpush.bf16.msra.mxu0 %v3071
    %3507 = vmatpush.bf16.msra.mxu0 %v3067
    %3508 = vmatpush.bf16.msra.mxu0 %v3063
    %3509 = vmatpush.bf16.msra.mxu0 %v3059
    %3510 = vmatmul.bf16.gmra.mxu0 %v2568
    %v3511 = vpop.f32.mrf.mxu0
    %v3512 = vadd.f32 %v2715, %v3511
    %v3513 = vpop.f32.mrf.mxu0
    %v3514 = vadd.f32 %v2715, %v3513
    %3515 = vmatmul.bf16.gmra.mxu0 %v2572
    %v3516 = vpop.f32.mrf.mxu0
    %v3517 = vadd.f32 %v2715, %v3516
    %v3518 = vpop.f32.mrf.mxu0
    %v3519 = vadd.f32 %v2715, %v3518
    %3520 = vmatmul.bf16.gmra.mxu0 %v2576
    %v3521 = vpop.f32.mrf.mxu0
    %v3522 = vadd.f32 %v2715, %v3521
    %v3523 = vpop.f32.mrf.mxu0
    %v3524 = vadd.f32 %v2715, %v3523
    %3525 = vmatmul.bf16.gmra.mxu0 %v2580
    %v3526 = vpop.f32.mrf.mxu0
    %v3527 = vadd.f32 %v2715, %v3526
    %v3528 = vpop.f32.mrf.mxu0
    %v3529 = vadd.f32 %v2715, %v3528
    %3530 = vmatmul.bf16.gmra.mxu0 %v2584
    %v3531 = vpop.f32.mrf.mxu0
    %v3532 = vadd.f32 %v2715, %v3531
    %v3533 = vpop.f32.mrf.mxu0
    %v3534 = vadd.f32 %v2715, %v3533
    %3535 = vmatmul.bf16.gmra.mxu0 %v2588
    %v3536 = vpop.f32.mrf.mxu0
    %v3537 = vadd.f32 %v2715, %v3536
    %v3538 = vpop.f32.mrf.mxu0
    %v3539 = vadd.f32 %v2715, %v3538
    %3540 = vmatmul.bf16.gmra.mxu0 %v2592
    %v3541 = vpop.f32.mrf.mxu0
    %v3542 = vadd.f32 %v2715, %v3541
    %v3543 = vpop.f32.mrf.mxu0
    %v3544 = vadd.f32 %v2715, %v3543
    %3545 = vmatmul.bf16.gmra.mxu0 %v2596
    %v3546 = vpop.f32.mrf.mxu0
    %v3547 = vadd.f32 %v2715, %v3546
    %v3548 = vpop.f32.mrf.mxu0
    %v3549 = vadd.f32 %v2715, %v3548
    %3550 = vdwg.mxu0
    %3551 = vmatpush.bf16.msra.mxu0 %v3119
    %3552 = vmatpush.bf16.msra.mxu0 %v3115
    %3553 = vmatpush.bf16.msra.mxu0 %v3111
    %3554 = vmatpush.bf16.msra.mxu0 %v3107
    %3555 = vmatpush.bf16.msra.mxu0 %v3103
    %3556 = vmatpush.bf16.msra.mxu0 %v3099
    %3557 = vmatpush.bf16.msra.mxu0 %v3095
    %3558 = vmatpush.bf16.msra.mxu0 %v3091
    %3559 = vmatmul.bf16.gmra.mxu0 %v2569
    %v3560 = vpop.f32.mrf.mxu0
    %v3561 = vadd.f32 %v3512, %v3560
    %v3562 = vpop.f32.mrf.mxu0
    %v3563 = vadd.f32 %v3514, %v3562
    %3564 = vmatmul.bf16.gmra.mxu0 %v2573
    %v3565 = vpop.f32.mrf.mxu0
    %v3566 = vadd.f32 %v3517, %v3565
    %v3567 = vpop.f32.mrf.mxu0
    %v3568 = vadd.f32 %v3519, %v3567
    %3569 = vmatmul.bf16.gmra.mxu0 %v2577
    %v3570 = vpop.f32.mrf.mxu0
    %v3571 = vadd.f32 %v3522, %v3570
    %v3572 = vpop.f32.mrf.mxu0
    %v3573 = vadd.f32 %v3524, %v3572
    %3574 = vmatmul.bf16.gmra.mxu0 %v2581
    %v3575 = vpop.f32.mrf.mxu0
    %v3576 = vadd.f32 %v3527, %v3575
    %v3577 = vpop.f32.mrf.mxu0
    %v3578 = vadd.f32 %v3529, %v3577
    %3579 = vmatmul.bf16.gmra.mxu0 %v2585
    %v3580 = vpop.f32.mrf.mxu0
    %v3581 = vadd.f32 %v3532, %v3580
    %v3582 = vpop.f32.mrf.mxu0
    %v3583 = vadd.f32 %v3534, %v3582
    %3584 = vmatmul.bf16.gmra.mxu0 %v2589
    %v3585 = vpop.f32.mrf.mxu0
    %v3586 = vadd.f32 %v3537, %v3585
    %v3587 = vpop.f32.mrf.mxu0
    %v3588 = vadd.f32 %v3539, %v3587
    %3589 = vmatmul.bf16.gmra.mxu0 %v2593
    %v3590 = vpop.f32.mrf.mxu0
    %v3591 = vadd.f32 %v3542, %v3590
    %v3592 = vpop.f32.mrf.mxu0
    %v3593 = vadd.f32 %v3544, %v3592
    %3594 = vmatmul.bf16.gmra.mxu0 %v2597
    %v3595 = vpop.f32.mrf.mxu0
    %v3596 = vadd.f32 %v3547, %v3595
    %v3597 = vpop.f32.mrf.mxu0
    %v3598 = vadd.f32 %v3549, %v3597
    %3599 = vdwg.mxu0
    %3600 = vmatpush.bf16.msra.mxu0 %v3151
    %3601 = vmatpush.bf16.msra.mxu0 %v3147
    %3602 = vmatpush.bf16.msra.mxu0 %v3143
    %3603 = vmatpush.bf16.msra.mxu0 %v3139
    %3604 = vmatpush.bf16.msra.mxu0 %v3135
    %3605 = vmatpush.bf16.msra.mxu0 %v3131
    %3606 = vmatpush.bf16.msra.mxu0 %v3127
    %3607 = vmatpush.bf16.msra.mxu0 %v3123
    %3608 = vmatmul.bf16.gmra.mxu0 %v2570
    %v3609 = vpop.f32.mrf.mxu0
    %v3610 = vadd.f32 %v3561, %v3609
    %v3611 = vpop.f32.mrf.mxu0
    %v3612 = vadd.f32 %v3563, %v3611
    %3613 = vmatmul.bf16.gmra.mxu0 %v2574
    %v3614 = vpop.f32.mrf.mxu0
    %v3615 = vadd.f32 %v3566, %v3614
    %v3616 = vpop.f32.mrf.mxu0
    %v3617 = vadd.f32 %v3568, %v3616
    %3618 = vmatmul.bf16.gmra.mxu0 %v2578
    %v3619 = vpop.f32.mrf.mxu0
    %v3620 = vadd.f32 %v3571, %v3619
    %v3621 = vpop.f32.mrf.mxu0
    %v3622 = vadd.f32 %v3573, %v3621
    %3623 = vmatmul.bf16.gmra.mxu0 %v2582
    %v3624 = vpop.f32.mrf.mxu0
    %v3625 = vadd.f32 %v3576, %v3624
    %v3626 = vpop.f32.mrf.mxu0
    %v3627 = vadd.f32 %v3578, %v3626
    %3628 = vmatmul.bf16.gmra.mxu0 %v2586
    %v3629 = vpop.f32.mrf.mxu0
    %v3630 = vadd.f32 %v3581, %v3629
    %v3631 = vpop.f32.mrf.mxu0
    %v3632 = vadd.f32 %v3583, %v3631
    %3633 = vmatmul.bf16.gmra.mxu0 %v2590
    %v3634 = vpop.f32.mrf.mxu0
    %v3635 = vadd.f32 %v3586, %v3634
    %v3636 = vpop.f32.mrf.mxu0
    %v3637 = vadd.f32 %v3588, %v3636
    %3638 = vmatmul.bf16.gmra.mxu0 %v2594
    %v3639 = vpop.f32.mrf.mxu0
    %v3640 = vadd.f32 %v3591, %v3639
    %v3641 = vpop.f32.mrf.mxu0
    %v3642 = vadd.f32 %v3593, %v3641
    %3643 = vmatmul.bf16.gmra.mxu0 %v2598
    %v3644 = vpop.f32.mrf.mxu0
    %v3645 = vadd.f32 %v3596, %v3644
    %v3646 = vpop.f32.mrf.mxu0
    %v3647 = vadd.f32 %v3598, %v3646
    %3648 = vdwg.mxu0
    %3649 = vmatpush.bf16.msra.mxu0 0
    %3650 = vmatpush.bf16.msra.mxu0 0
    %3651 = vmatpush.bf16.msra.mxu0 0
    %3652 = vmatpush.bf16.msra.mxu0 0
    %3653 = vmatpush.bf16.msra.mxu0 %v3167
    %3654 = vmatpush.bf16.msra.mxu0 %v3163
    %3655 = vmatpush.bf16.msra.mxu0 %v3159
    %3656 = vmatpush.bf16.msra.mxu0 %v3155
    %3657 = vmatmul.bf16.gmra.mxu0 %v3283
    %v3658 = vpop.f32.mrf.mxu0
    %v3659 = vadd.f32 %v3610, %v3658
    %v3660 = vpop.f32.mrf.mxu0
    %v3661 = vadd.f32 %v3612, %v3660
    %3662 = vmatmul.bf16.gmra.mxu0 %v3286
    %v3663 = vpop.f32.mrf.mxu0
    %v3664 = vadd.f32 %v3615, %v3663
    %v3665 = vpop.f32.mrf.mxu0
    %v3666 = vadd.f32 %v3617, %v3665
    %3667 = vmatmul.bf16.gmra.mxu0 %v3289
    %v3668 = vpop.f32.mrf.mxu0
    %v3669 = vadd.f32 %v3620, %v3668
    %v3670 = vpop.f32.mrf.mxu0
    %v3671 = vadd.f32 %v3622, %v3670
    %3672 = vmatmul.bf16.gmra.mxu0 %v3292
    %v3673 = vpop.f32.mrf.mxu0
    %v3674 = vadd.f32 %v3625, %v3673
    %v3675 = vpop.f32.mrf.mxu0
    %v3676 = vadd.f32 %v3627, %v3675
    %3677 = vmatmul.bf16.gmra.mxu0 %v3295
    %v3678 = vpop.f32.mrf.mxu0
    %v3679 = vadd.f32 %v3630, %v3678
    %v3680 = vpop.f32.mrf.mxu0
    %v3681 = vadd.f32 %v3632, %v3680
    %3682 = vmatmul.bf16.gmra.mxu0 %v3298
    %v3683 = vpop.f32.mrf.mxu0
    %v3684 = vadd.f32 %v3635, %v3683
    %v3685 = vpop.f32.mrf.mxu0
    %v3686 = vadd.f32 %v3637, %v3685
    %3687 = vmatmul.bf16.gmra.mxu0 %v3301
    %v3688 = vpop.f32.mrf.mxu0
    %v3689 = vadd.f32 %v3640, %v3688
    %v3690 = vpop.f32.mrf.mxu0
    %v3691 = vadd.f32 %v3642, %v3690
    %3692 = vmatmul.bf16.gmra.mxu0 %v3304
    %v3693 = vpop.f32.mrf.mxu0
    %v3694 = vadd.f32 %v3645, %v3693
    %v3695 = vpop.f32.mrf.mxu0
    %v3696 = vadd.f32 %v3647, %v3695
    %3697 = vdwg.mxu0
    %3698 = vmatpush.bf16.msra.mxu0 %v3088
    %3699 = vmatpush.bf16.msra.mxu0 %v3084
    %3700 = vmatpush.bf16.msra.mxu0 %v3080
    %3701 = vmatpush.bf16.msra.mxu0 %v3076
    %3702 = vmatpush.bf16.msra.mxu0 %v3072
    %3703 = vmatpush.bf16.msra.mxu0 %v3068
    %3704 = vmatpush.bf16.msra.mxu0 %v3064
    %3705 = vmatpush.bf16.msra.mxu0 %v3060
    %3706 = vmatmul.bf16.gmra.mxu0 %v2568
    %v3707 = vpop.f32.mrf.mxu0
    %v3708 = vadd.f32 %v2716, %v3707
    %v3709 = vpop.f32.mrf.mxu0
    %v3710 = vadd.f32 %v2716, %v3709
    %3711 = vmatmul.bf16.gmra.mxu0 %v2572
    %v3712 = vpop.f32.mrf.mxu0
    %v3713 = vadd.f32 %v2716, %v3712
    %v3714 = vpop.f32.mrf.mxu0
    %v3715 = vadd.f32 %v2716, %v3714
    %3716 = vmatmul.bf16.gmra.mxu0 %v2576
    %v3717 = vpop.f32.mrf.mxu0
    %v3718 = vadd.f32 %v2716, %v3717
    %v3719 = vpop.f32.mrf.mxu0
    %v3720 = vadd.f32 %v2716, %v3719
    %3721 = vmatmul.bf16.gmra.mxu0 %v2580
    %v3722 = vpop.f32.mrf.mxu0
    %v3723 = vadd.f32 %v2716, %v3722
    %v3724 = vpop.f32.mrf.mxu0
    %v3725 = vadd.f32 %v2716, %v3724
    %3726 = vmatmul.bf16.gmra.mxu0 %v2584
    %v3727 = vpop.f32.mrf.mxu0
    %v3728 = vadd.f32 %v2716, %v3727
    %v3729 = vpop.f32.mrf.mxu0
    %v3730 = vadd.f32 %v2716, %v3729
    %3731 = vmatmul.bf16.gmra.mxu0 %v2588
    %v3732 = vpop.f32.mrf.mxu0
    %v3733 = vadd.f32 %v2716, %v3732
    %v3734 = vpop.f32.mrf.mxu0
    %v3735 = vadd.f32 %v2716, %v3734
    %3736 = vmatmul.bf16.gmra.mxu0 %v2592
    %v3737 = vpop.f32.mrf.mxu0
    %v3738 = vadd.f32 %v2716, %v3737
    %v3739 = vpop.f32.mrf.mxu0
    %v3740 = vadd.f32 %v2716, %v3739
    %3741 = vmatmul.bf16.gmra.mxu0 %v2596
    %v3742 = vpop.f32.mrf.mxu0
    %v3743 = vadd.f32 %v2716, %v3742
    %v3744 = vpop.f32.mrf.mxu0
    %v3745 = vadd.f32 %v2716, %v3744
    %3746 = vdwg.mxu0
    %3747 = vmatpush.bf16.msra.mxu0 %v3120
    %3748 = vmatpush.bf16.msra.mxu0 %v3116
    %3749 = vmatpush.bf16.msra.mxu0 %v3112
    %3750 = vmatpush.bf16.msra.mxu0 %v3108
    %3751 = vmatpush.bf16.msra.mxu0 %v3104
    %3752 = vmatpush.bf16.msra.mxu0 %v3100
    %3753 = vmatpush.bf16.msra.mxu0 %v3096
    %3754 = vmatpush.bf16.msra.mxu0 %v3092
    %3755 = vmatmul.bf16.gmra.mxu0 %v2569
    %v3756 = vpop.f32.mrf.mxu0
    %v3757 = vadd.f32 %v3708, %v3756
    %v3758 = vpop.f32.mrf.mxu0
    %v3759 = vadd.f32 %v3710, %v3758
    %3760 = vmatmul.bf16.gmra.mxu0 %v2573
    %v3761 = vpop.f32.mrf.mxu0
    %v3762 = vadd.f32 %v3713, %v3761
    %v3763 = vpop.f32.mrf.mxu0
    %v3764 = vadd.f32 %v3715, %v3763
    %3765 = vmatmul.bf16.gmra.mxu0 %v2577
    %v3766 = vpop.f32.mrf.mxu0
    %v3767 = vadd.f32 %v3718, %v3766
    %v3768 = vpop.f32.mrf.mxu0
    %v3769 = vadd.f32 %v3720, %v3768
    %3770 = vmatmul.bf16.gmra.mxu0 %v2581
    %v3771 = vpop.f32.mrf.mxu0
    %v3772 = vadd.f32 %v3723, %v3771
    %v3773 = vpop.f32.mrf.mxu0
    %v3774 = vadd.f32 %v3725, %v3773
    %3775 = vmatmul.bf16.gmra.mxu0 %v2585
    %v3776 = vpop.f32.mrf.mxu0
    %v3777 = vadd.f32 %v3728, %v3776
    %v3778 = vpop.f32.mrf.mxu0
    %v3779 = vadd.f32 %v3730, %v3778
    %3780 = vmatmul.bf16.gmra.mxu0 %v2589
    %v3781 = vpop.f32.mrf.mxu0
    %v3782 = vadd.f32 %v3733, %v3781
    %v3783 = vpop.f32.mrf.mxu0
    %v3784 = vadd.f32 %v3735, %v3783
    %3785 = vmatmul.bf16.gmra.mxu0 %v2593
    %v3786 = vpop.f32.mrf.mxu0
    %v3787 = vadd.f32 %v3738, %v3786
    %v3788 = vpop.f32.mrf.mxu0
    %v3789 = vadd.f32 %v3740, %v3788
    %3790 = vmatmul.bf16.gmra.mxu0 %v2597
    %v3791 = vpop.f32.mrf.mxu0
    %v3792 = vadd.f32 %v3743, %v3791
    %v3793 = vpop.f32.mrf.mxu0
    %v3794 = vadd.f32 %v3745, %v3793
    %3795 = vdwg.mxu0
    %3796 = vmatpush.bf16.msra.mxu0 %v3152
    %3797 = vmatpush.bf16.msra.mxu0 %v3148
    %3798 = vmatpush.bf16.msra.mxu0 %v3144
    %3799 = vmatpush.bf16.msra.mxu0 %v3140
    %3800 = vmatpush.bf16.msra.mxu0 %v3136
    %3801 = vmatpush.bf16.msra.mxu0 %v3132
    %3802 = vmatpush.bf16.msra.mxu0 %v3128
    %3803 = vmatpush.bf16.msra.mxu0 %v3124
    %3804 = vmatmul.bf16.gmra.mxu0 %v2570
    %v3805 = vpop.f32.mrf.mxu0
    %v3806 = vadd.f32 %v3757, %v3805
    %v3807 = vpop.f32.mrf.mxu0
    %v3808 = vadd.f32 %v3759, %v3807
    %3809 = vmatmul.bf16.gmra.mxu0 %v2574
    %v3810 = vpop.f32.mrf.mxu0
    %v3811 = vadd.f32 %v3762, %v3810
    %v3812 = vpop.f32.mrf.mxu0
    %v3813 = vadd.f32 %v3764, %v3812
    %3814 = vmatmul.bf16.gmra.mxu0 %v2578
    %v3815 = vpop.f32.mrf.mxu0
    %v3816 = vadd.f32 %v3767, %v3815
    %v3817 = vpop.f32.mrf.mxu0
    %v3818 = vadd.f32 %v3769, %v3817
    %3819 = vmatmul.bf16.gmra.mxu0 %v2582
    %v3820 = vpop.f32.mrf.mxu0
    %v3821 = vadd.f32 %v3772, %v3820
    %v3822 = vpop.f32.mrf.mxu0
    %v3823 = vadd.f32 %v3774, %v3822
    %3824 = vmatmul.bf16.gmra.mxu0 %v2586
    %v3825 = vpop.f32.mrf.mxu0
    %v3826 = vadd.f32 %v3777, %v3825
    %v3827 = vpop.f32.mrf.mxu0
    %v3828 = vadd.f32 %v3779, %v3827
    %3829 = vmatmul.bf16.gmra.mxu0 %v2590
    %v3830 = vpop.f32.mrf.mxu0
    %v3831 = vadd.f32 %v3782, %v3830
    %v3832 = vpop.f32.mrf.mxu0
    %v3833 = vadd.f32 %v3784, %v3832
    %3834 = vmatmul.bf16.gmra.mxu0 %v2594
    %v3835 = vpop.f32.mrf.mxu0
    %v3836 = vadd.f32 %v3787, %v3835
    %v3837 = vpop.f32.mrf.mxu0
    %v3838 = vadd.f32 %v3789, %v3837
    %3839 = vmatmul.bf16.gmra.mxu0 %v2598
    %v3840 = vpop.f32.mrf.mxu0
    %v3841 = vadd.f32 %v3792, %v3840
    %v3842 = vpop.f32.mrf.mxu0
    %v3843 = vadd.f32 %v3794, %v3842
    %3844 = vdwg.mxu0
    %3845 = vmatpush.bf16.msra.mxu0 0
    %3846 = vmatpush.bf16.msra.mxu0 0
    %3847 = vmatpush.bf16.msra.mxu0 0
    %3848 = vmatpush.bf16.msra.mxu0 0
    %3849 = vmatpush.bf16.msra.mxu0 %v3168
    %3850 = vmatpush.bf16.msra.mxu0 %v3164
    %3851 = vmatpush.bf16.msra.mxu0 %v3160
    %3852 = vmatpush.bf16.msra.mxu0 %v3156
    %3853 = vmatmul.bf16.gmra.mxu0 %v3283
    %v3854 = vpop.f32.mrf.mxu0
    %v3855 = vadd.f32 %v3806, %v3854
    %v3856 = vpop.f32.mrf.mxu0
    %v3857 = vadd.f32 %v3808, %v3856
    %3858 = vmatmul.bf16.gmra.mxu0 %v3286
    %v3859 = vpop.f32.mrf.mxu0
    %v3860 = vadd.f32 %v3811, %v3859
    %v3861 = vpop.f32.mrf.mxu0
    %v3862 = vadd.f32 %v3813, %v3861
    %3863 = vmatmul.bf16.gmra.mxu0 %v3289
    %v3864 = vpop.f32.mrf.mxu0
    %v3865 = vadd.f32 %v3816, %v3864
    %v3866 = vpop.f32.mrf.mxu0
    %v3867 = vadd.f32 %v3818, %v3866
    %3868 = vmatmul.bf16.gmra.mxu0 %v3292
    %v3869 = vpop.f32.mrf.mxu0
    %v3870 = vadd.f32 %v3821, %v3869
    %v3871 = vpop.f32.mrf.mxu0
    %v3872 = vadd.f32 %v3823, %v3871
    %3873 = vmatmul.bf16.gmra.mxu0 %v3295
    %v3874 = vpop.f32.mrf.mxu0
    %v3875 = vadd.f32 %v3826, %v3874
    %v3876 = vpop.f32.mrf.mxu0
    %v3877 = vadd.f32 %v3828, %v3876
    %3878 = vmatmul.bf16.gmra.mxu0 %v3298
    %v3879 = vpop.f32.mrf.mxu0
    %v3880 = vadd.f32 %v3831, %v3879
    %v3881 = vpop.f32.mrf.mxu0
    %v3882 = vadd.f32 %v3833, %v3881
    %3883 = vmatmul.bf16.gmra.mxu0 %v3301
    %v3884 = vpop.f32.mrf.mxu0
    %v3885 = vadd.f32 %v3836, %v3884
    %v3886 = vpop.f32.mrf.mxu0
    %v3887 = vadd.f32 %v3838, %v3886
    %3888 = vmatmul.bf16.gmra.mxu0 %v3304
    %v3889 = vpop.f32.mrf.mxu0
    %v3890 = vadd.f32 %v3841, %v3889
    %v3891 = vpop.f32.mrf.mxu0
    %v3892 = vadd.f32 %v3843, %v3891
    %3893 = vdwg.mxu0
    %3894 = vmatpush.bf16.msra.mxu0 %v3089
    %3895 = vmatpush.bf16.msra.mxu0 %v3085
    %3896 = vmatpush.bf16.msra.mxu0 %v3081
    %3897 = vmatpush.bf16.msra.mxu0 %v3077
    %3898 = vmatpush.bf16.msra.mxu0 %v3073
    %3899 = vmatpush.bf16.msra.mxu0 %v3069
    %3900 = vmatpush.bf16.msra.mxu0 %v3065
    %3901 = vmatpush.bf16.msra.mxu0 %v3061
    %3902 = vmatmul.bf16.gmra.mxu0 %v2568
    %v3903 = vpop.f32.mrf.mxu0
    %v3904 = vadd.f32 %v2717, %v3903
    %v3905 = vpop.f32.mrf.mxu0
    %v3906 = vadd.f32 %v2717, %v3905
    %3907 = vmatmul.bf16.gmra.mxu0 %v2572
    %v3908 = vpop.f32.mrf.mxu0
    %v3909 = vadd.f32 %v2717, %v3908
    %v3910 = vpop.f32.mrf.mxu0
    %v3911 = vadd.f32 %v2717, %v3910
    %3912 = vmatmul.bf16.gmra.mxu0 %v2576
    %v3913 = vpop.f32.mrf.mxu0
    %v3914 = vadd.f32 %v2717, %v3913
    %v3915 = vpop.f32.mrf.mxu0
    %v3916 = vadd.f32 %v2717, %v3915
    %3917 = vmatmul.bf16.gmra.mxu0 %v2580
    %v3918 = vpop.f32.mrf.mxu0
    %v3919 = vadd.f32 %v2717, %v3918
    %v3920 = vpop.f32.mrf.mxu0
    %v3921 = vadd.f32 %v2717, %v3920
    %3922 = vmatmul.bf16.gmra.mxu0 %v2584
    %v3923 = vpop.f32.mrf.mxu0
    %v3924 = vadd.f32 %v2717, %v3923
    %v3925 = vpop.f32.mrf.mxu0
    %v3926 = vadd.f32 %v2717, %v3925
    %3927 = vmatmul.bf16.gmra.mxu0 %v2588
    %v3928 = vpop.f32.mrf.mxu0
    %v3929 = vadd.f32 %v2717, %v3928
    %v3930 = vpop.f32.mrf.mxu0
    %v3931 = vadd.f32 %v2717, %v3930
    %3932 = vmatmul.bf16.gmra.mxu0 %v2592
    %v3933 = vpop.f32.mrf.mxu0
    %v3934 = vadd.f32 %v2717, %v3933
    %v3935 = vpop.f32.mrf.mxu0
    %v3936 = vadd.f32 %v2717, %v3935
    %3937 = vmatmul.bf16.gmra.mxu0 %v2596
    %v3938 = vpop.f32.mrf.mxu0
    %v3939 = vadd.f32 %v2717, %v3938
    %v3940 = vpop.f32.mrf.mxu0
    %v3941 = vadd.f32 %v2717, %v3940
    %3942 = vdwg.mxu0
    %3943 = vmatpush.bf16.msra.mxu0 %v3121
    %3944 = vmatpush.bf16.msra.mxu0 %v3117
    %3945 = vmatpush.bf16.msra.mxu0 %v3113
    %3946 = vmatpush.bf16.msra.mxu0 %v3109
    %3947 = vmatpush.bf16.msra.mxu0 %v3105
    %3948 = vmatpush.bf16.msra.mxu0 %v3101
    %3949 = vmatpush.bf16.msra.mxu0 %v3097
    %3950 = vmatpush.bf16.msra.mxu0 %v3093
    %3951 = vmatmul.bf16.gmra.mxu0 %v2569
    %v3952 = vpop.f32.mrf.mxu0
    %v3953 = vadd.f32 %v3904, %v3952
    %v3954 = vpop.f32.mrf.mxu0
    %v3955 = vadd.f32 %v3906, %v3954
    %3956 = vmatmul.bf16.gmra.mxu0 %v2573
    %v3957 = vpop.f32.mrf.mxu0
    %v3958 = vadd.f32 %v3909, %v3957
    %v3959 = vpop.f32.mrf.mxu0
    %v3960 = vadd.f32 %v3911, %v3959
    %3961 = vmatmul.bf16.gmra.mxu0 %v2577
    %v3962 = vpop.f32.mrf.mxu0
    %v3963 = vadd.f32 %v3914, %v3962
    %v3964 = vpop.f32.mrf.mxu0
    %v3965 = vadd.f32 %v3916, %v3964
    %3966 = vmatmul.bf16.gmra.mxu0 %v2581
    %v3967 = vpop.f32.mrf.mxu0
    %v3968 = vadd.f32 %v3919, %v3967
    %v3969 = vpop.f32.mrf.mxu0
    %v3970 = vadd.f32 %v3921, %v3969
    %3971 = vmatmul.bf16.gmra.mxu0 %v2585
    %v3972 = vpop.f32.mrf.mxu0
    %v3973 = vadd.f32 %v3924, %v3972
    %v3974 = vpop.f32.mrf.mxu0
    %v3975 = vadd.f32 %v3926, %v3974
    %3976 = vmatmul.bf16.gmra.mxu0 %v2589
    %v3977 = vpop.f32.mrf.mxu0
    %v3978 = vadd.f32 %v3929, %v3977
    %v3979 = vpop.f32.mrf.mxu0
    %v3980 = vadd.f32 %v3931, %v3979
    %3981 = vmatmul.bf16.gmra.mxu0 %v2593
    %v3982 = vpop.f32.mrf.mxu0
    %v3983 = vadd.f32 %v3934, %v3982
    %v3984 = vpop.f32.mrf.mxu0
    %v3985 = vadd.f32 %v3936, %v3984
    %3986 = vmatmul.bf16.gmra.mxu0 %v2597
    %v3987 = vpop.f32.mrf.mxu0
    %v3988 = vadd.f32 %v3939, %v3987
    %v3989 = vpop.f32.mrf.mxu0
    %v3990 = vadd.f32 %v3941, %v3989
    %3991 = vdwg.mxu0
    %3992 = vmatpush.bf16.msra.mxu0 %v3153
    %3993 = vmatpush.bf16.msra.mxu0 %v3149
    %3994 = vmatpush.bf16.msra.mxu0 %v3145
    %3995 = vmatpush.bf16.msra.mxu0 %v3141
    %3996 = vmatpush.bf16.msra.mxu0 %v3137
    %3997 = vmatpush.bf16.msra.mxu0 %v3133
    %3998 = vmatpush.bf16.msra.mxu0 %v3129
    %3999 = vmatpush.bf16.msra.mxu0 %v3125
    %4000 = vmatmul.bf16.gmra.mxu0 %v2570
    %v4001 = vpop.f32.mrf.mxu0
    %v4002 = vadd.f32 %v3953, %v4001
    %v4003 = vpop.f32.mrf.mxu0
    %v4004 = vadd.f32 %v3955, %v4003
    %4005 = vmatmul.bf16.gmra.mxu0 %v2574
    %v4006 = vpop.f32.mrf.mxu0
    %v4007 = vadd.f32 %v3958, %v4006
    %v4008 = vpop.f32.mrf.mxu0
    %v4009 = vadd.f32 %v3960, %v4008
    %4010 = vmatmul.bf16.gmra.mxu0 %v2578
    %v4011 = vpop.f32.mrf.mxu0
    %v4012 = vadd.f32 %v3963, %v4011
    %v4013 = vpop.f32.mrf.mxu0
    %v4014 = vadd.f32 %v3965, %v4013
    %4015 = vmatmul.bf16.gmra.mxu0 %v2582
    %v4016 = vpop.f32.mrf.mxu0
    %v4017 = vadd.f32 %v3968, %v4016
    %v4018 = vpop.f32.mrf.mxu0
    %v4019 = vadd.f32 %v3970, %v4018
    %4020 = vmatmul.bf16.gmra.mxu0 %v2586
    %v4021 = vpop.f32.mrf.mxu0
    %v4022 = vadd.f32 %v3973, %v4021
    %v4023 = vpop.f32.mrf.mxu0
    %v4024 = vadd.f32 %v3975, %v4023
    %4025 = vmatmul.bf16.gmra.mxu0 %v2590
    %v4026 = vpop.f32.mrf.mxu0
    %v4027 = vadd.f32 %v3978, %v4026
    %v4028 = vpop.f32.mrf.mxu0
    %v4029 = vadd.f32 %v3980, %v4028
    %4030 = vmatmul.bf16.gmra.mxu0 %v2594
    %v4031 = vpop.f32.mrf.mxu0
    %v4032 = vadd.f32 %v3983, %v4031
    %v4033 = vpop.f32.mrf.mxu0
    %v4034 = vadd.f32 %v3985, %v4033
    %4035 = vmatmul.bf16.gmra.mxu0 %v2598
    %v4036 = vpop.f32.mrf.mxu0
    %v4037 = vadd.f32 %v3988, %v4036
    %v4038 = vpop.f32.mrf.mxu0
    %v4039 = vadd.f32 %v3990, %v4038
    %4040 = vdwg.mxu0
    %4041 = vmatpush.bf16.msra.mxu0 0
    %4042 = vmatpush.bf16.msra.mxu0 0
    %4043 = vmatpush.bf16.msra.mxu0 0
    %4044 = vmatpush.bf16.msra.mxu0 0
    %4045 = vmatpush.bf16.msra.mxu0 %v3169
    %4046 = vmatpush.bf16.msra.mxu0 %v3165
    %4047 = vmatpush.bf16.msra.mxu0 %v3161
    %4048 = vmatpush.bf16.msra.mxu0 %v3157
    %4049 = vmatmul.bf16.gmra.mxu0 %v3283
    %v4050 = vpop.f32.mrf.mxu0
    %v4051 = vadd.f32 %v4002, %v4050
    %v4052 = vpop.f32.mrf.mxu0
    %v4053 = vadd.f32 %v4004, %v4052
    %4054 = vmatmul.bf16.gmra.mxu0 %v3286
    %v4055 = vpop.f32.mrf.mxu0
    %v4056 = vadd.f32 %v4007, %v4055
    %v4057 = vpop.f32.mrf.mxu0
    %v4058 = vadd.f32 %v4009, %v4057
    %4059 = vmatmul.bf16.gmra.mxu0 %v3289
    %v4060 = vpop.f32.mrf.mxu0
    %v4061 = vadd.f32 %v4012, %v4060
    %v4062 = vpop.f32.mrf.mxu0
    %v4063 = vadd.f32 %v4014, %v4062
    %4064 = vmatmul.bf16.gmra.mxu0 %v3292
    %v4065 = vpop.f32.mrf.mxu0
    %v4066 = vadd.f32 %v4017, %v4065
    %v4067 = vpop.f32.mrf.mxu0
    %v4068 = vadd.f32 %v4019, %v4067
    %4069 = vmatmul.bf16.gmra.mxu0 %v3295
    %v4070 = vpop.f32.mrf.mxu0
    %v4071 = vadd.f32 %v4022, %v4070
    %v4072 = vpop.f32.mrf.mxu0
    %v4073 = vadd.f32 %v4024, %v4072
    %4074 = vmatmul.bf16.gmra.mxu0 %v3298
    %v4075 = vpop.f32.mrf.mxu0
    %v4076 = vadd.f32 %v4027, %v4075
    %v4077 = vpop.f32.mrf.mxu0
    %v4078 = vadd.f32 %v4029, %v4077
    %4079 = vmatmul.bf16.gmra.mxu0 %v3301
    %v4080 = vpop.f32.mrf.mxu0
    %v4081 = vadd.f32 %v4032, %v4080
    %v4082 = vpop.f32.mrf.mxu0
    %v4083 = vadd.f32 %v4034, %v4082
    %4084 = vmatmul.bf16.gmra.mxu0 %v3304
    %v4085 = vpop.f32.mrf.mxu0
    %v4086 = vadd.f32 %v4037, %v4085
    %v4087 = vpop.f32.mrf.mxu0
    %v4088 = vadd.f32 %v4039, %v4087
    %4089 = vdwg.mxu0
    %v4090 = vmax.f32 %v3463, 0.0
    %v4091 = vmax.f32 %v3659, 0.0
    %v4092 = vmax.f32 %v3855, 0.0
    %v4093 = vmax.f32 %v4051, 0.0
    %v4094 = vmax.f32 %v3465, 0.0
    %v4095 = vmax.f32 %v3661, 0.0
    %v4096 = vmax.f32 %v3857, 0.0
    %v4097 = vmax.f32 %v4053, 0.0
    %v4098 = vmax.f32 %v3468, 0.0
    %v4099 = vmax.f32 %v3664, 0.0
    %v4100 = vmax.f32 %v3860, 0.0
    %v4101 = vmax.f32 %v4056, 0.0
    %v4102 = vmax.f32 %v3470, 0.0
    %v4103 = vmax.f32 %v3666, 0.0
    %v4104 = vmax.f32 %v3862, 0.0
    %v4105 = vmax.f32 %v4058, 0.0
    %v4106 = vmax.f32 %v3473, 0.0
    %v4107 = vmax.f32 %v3669, 0.0
    %v4108 = vmax.f32 %v3865, 0.0
    %v4109 = vmax.f32 %v4061, 0.0
    %v4110 = vmax.f32 %v3475, 0.0
    %v4111 = vmax.f32 %v3671, 0.0
    %v4112 = vmax.f32 %v3867, 0.0
    %v4113 = vmax.f32 %v4063, 0.0
    %v4114 = vmax.f32 %v3478, 0.0
    %v4115 = vmax.f32 %v3674, 0.0
    %v4116 = vmax.f32 %v3870, 0.0
    %v4117 = vmax.f32 %v4066, 0.0
    %v4118 = vmax.f32 %v3480, 0.0
    %v4119 = vmax.f32 %v3676, 0.0
    %v4120 = vmax.f32 %v3872, 0.0
    %v4121 = vmax.f32 %v4068, 0.0
    %v4122 = vmax.f32 %v3483, 0.0
    %v4123 = vmax.f32 %v3679, 0.0
    %v4124 = vmax.f32 %v3875, 0.0
    %v4125 = vmax.f32 %v4071, 0.0
    %v4126 = vmax.f32 %v3485, 0.0
    %v4127 = vmax.f32 %v3681, 0.0
    %v4128 = vmax.f32 %v3877, 0.0
    %v4129 = vmax.f32 %v4073, 0.0
    %v4130 = vmax.f32 %v3488, 0.0
    %v4131 = vmax.f32 %v3684, 0.0
    %v4132 = vmax.f32 %v3880, 0.0
    %v4133 = vmax.f32 %v4076, 0.0
    %v4134 = vmax.f32 %v3490, 0.0
    %v4135 = vmax.f32 %v3686, 0.0
    %v4136 = vmax.f32 %v3882, 0.0
    %v4137 = vmax.f32 %v4078, 0.0
    %v4138 = vmax.f32 %v3493, 0.0
    %v4139 = vmax.f32 %v3689, 0.0
    %v4140 = vmax.f32 %v3885, 0.0
    %v4141 = vmax.f32 %v4081, 0.0
    %v4142 = vmax.f32 %v3495, 0.0
    %v4143 = vmax.f32 %v3691, 0.0
    %v4144 = vmax.f32 %v3887, 0.0
    %v4145 = vmax.f32 %v4083, 0.0
    %v4146 = vmax.f32 %v3498, 0.0
    %v4147 = vmax.f32 %v3694, 0.0
    %v4148 = vmax.f32 %v3890, 0.0
    %v4149 = vmax.f32 %v4086, 0.0
    %v4150 = vmax.f32 %v3500, 0.0
    %v4151 = vmax.f32 %v3696, 0.0
    %v4152 = vmax.f32 %v3892, 0.0
    %v4153 = vmax.f32 %v4088, 0.0
    %v4154 = vld [vmem:[#allocation11] sm:$0x77]
    %v4155 = vld [vmem:[#allocation11 + $0x8] sm:$0x77]
    %v4156 = vld [vmem:[#allocation11 + $0x10] sm:$0x77]
    %v4157 = vld [vmem:[#allocation11 + $0x18] sm:$0x77]
    %v4158 = vld [vmem:[#allocation11 + $0x20] sm:$0x77]
    %v4159 = vld [vmem:[#allocation11 + $0x28] sm:$0x77]
    %v4160 = vrot.slane %v4090, 7
    %v4161 = vrot.slane %v4091, 7
    %v4162 = vrot.slane %v4092, 7
    %v4163 = vrot.slane %v4093, 7
    %v4164 = vrot.slane %v4094, 7
    %v4165 = vrot.slane %v4095, 7
    %v4166 = vrot.slane %v4096, 7
    %v4167 = vrot.slane %v4097, 7
    %v4168 = vrot.slane %v4098, 7
    %v4169 = vrot.slane %v4099, 7
    %v4170 = vrot.slane %v4100, 7
    %v4171 = vrot.slane %v4101, 7
    %v4172 = vrot.slane %v4102, 7
    %v4173 = vrot.slane %v4103, 7
    %v4174 = vrot.slane %v4104, 7
    %v4175 = vrot.slane %v4105, 7
    %v4176 = vrot.slane %v4106, 7
    %v4177 = vrot.slane %v4107, 7
    %v4178 = vrot.slane %v4108, 7
    %v4179 = vrot.slane %v4109, 7
    %v4180 = vrot.slane %v4110, 7
    %v4181 = vrot.slane %v4111, 7
    %v4182 = vrot.slane %v4112, 7
    %v4183 = vrot.slane %v4113, 7
    %v4184 = vrot.slane %v4114, 7
    %v4185 = vrot.slane %v4115, 7
    %v4186 = vrot.slane %v4116, 7
    %v4187 = vrot.slane %v4117, 7
    %v4188 = vrot.slane %v4118, 7
    %v4189 = vrot.slane %v4119, 7
    %v4190 = vrot.slane %v4120, 7
    %v4191 = vrot.slane %v4121, 7
    %v4192 = vrot.slane %v4122, 7
    %v4193 = vrot.slane %v4123, 7
    %v4194 = vrot.slane %v4124, 7
    %v4195 = vrot.slane %v4125, 7
    %v4196 = vrot.slane %v4126, 7
    %v4197 = vrot.slane %v4127, 7
    %v4198 = vrot.slane %v4128, 7
    %v4199 = vrot.slane %v4129, 7
    %v4200 = vrot.slane %v4130, 7
    %v4201 = vrot.slane %v4131, 7
    %v4202 = vrot.slane %v4132, 7
    %v4203 = vrot.slane %v4133, 7
    %v4204 = vrot.slane %v4134, 7
    %v4205 = vrot.slane %v4135, 7
    %v4206 = vrot.slane %v4136, 7
    %v4207 = vrot.slane %v4137, 7
    %v4208 = vrot.slane %v4138, 7
    %v4209 = vrot.slane %v4139, 7
    %v4210 = vrot.slane %v4140, 7
    %v4211 = vrot.slane %v4141, 7
    %v4212 = vrot.slane %v4142, 7
    %v4213 = vrot.slane %v4143, 7
    %v4214 = vrot.slane %v4144, 7
    %v4215 = vrot.slane %v4145, 7
    %v4216 = vrot.slane %v4146, 7
    %v4217 = vrot.slane %v4147, 7
    %v4218 = vrot.slane %v4148, 7
    %v4219 = vrot.slane %v4149, 7
    %v4220 = vrot.slane %v4150, 7
    %v4221 = vrot.slane %v4151, 7
    %v4222 = vrot.slane %v4152, 7
    %v4223 = vrot.slane %v4153, 7
    %v4224 = vmul.f32 %v4160, %v746
    %v4225 = vmul.f32 %v4161, %v746
    %v4226 = vmul.f32 %v4162, %v746
    %v4227 = vmul.f32 %v4163, %v746
    %v4228 = vmul.f32 %v4164, %v746
    %v4229 = vmul.f32 %v4165, %v746
    %v4230 = vmul.f32 %v4166, %v746
    %v4231 = vmul.f32 %v4167, %v746
    %v4232 = vmul.f32 %v4168, %v746
    %v4233 = vmul.f32 %v4169, %v746
    %v4234 = vmul.f32 %v4170, %v746
    %v4235 = vmul.f32 %v4171, %v746
    %v4236 = vmul.f32 %v4172, %v746
    %v4237 = vmul.f32 %v4173, %v746
    %v4238 = vmul.f32 %v4174, %v746
    %v4239 = vmul.f32 %v4175, %v746
    %v4240 = vmul.f32 %v4176, %v746
    %v4241 = vmul.f32 %v4177, %v746
    %v4242 = vmul.f32 %v4178, %v746
    %v4243 = vmul.f32 %v4179, %v746
    %v4244 = vmul.f32 %v4180, %v746
    %v4245 = vmul.f32 %v4181, %v746
    %v4246 = vmul.f32 %v4182, %v746
    %v4247 = vmul.f32 %v4183, %v746
    %v4248 = vmul.f32 %v4184, %v746
    %v4249 = vmul.f32 %v4185, %v746
    %v4250 = vmul.f32 %v4186, %v746
    %v4251 = vmul.f32 %v4187, %v746
    %v4252 = vmul.f32 %v4188, %v746
    %v4253 = vmul.f32 %v4189, %v746
    %v4254 = vmul.f32 %v4190, %v746
    %v4255 = vmul.f32 %v4191, %v746
    %v4256 = vmul.f32 %v4192, %v746
    %v4257 = vmul.f32 %v4193, %v746
    %v4258 = vmul.f32 %v4194, %v746
    %v4259 = vmul.f32 %v4195, %v746
    %v4260 = vmul.f32 %v4196, %v746
    %v4261 = vmul.f32 %v4197, %v746
    %v4262 = vmul.f32 %v4198, %v746
    %v4263 = vmul.f32 %v4199, %v746
    %v4264 = vmul.f32 %v4200, %v746
    %v4265 = vmul.f32 %v4201, %v746
    %v4266 = vmul.f32 %v4202, %v746
    %v4267 = vmul.f32 %v4203, %v746
    %v4268 = vmul.f32 %v4204, %v746
    %v4269 = vmul.f32 %v4205, %v746
    %v4270 = vmul.f32 %v4206, %v746
    %v4271 = vmul.f32 %v4207, %v746
    %v4272 = vmul.f32 %v4208, %v746
    %v4273 = vmul.f32 %v4209, %v746
    %v4274 = vmul.f32 %v4210, %v746
    %v4275 = vmul.f32 %v4211, %v746
    %v4276 = vmul.f32 %v4212, %v746
    %v4277 = vmul.f32 %v4213, %v746
    %v4278 = vmul.f32 %v4214, %v746
    %v4279 = vmul.f32 %v4215, %v746
    %v4280 = vmul.f32 %v4216, %v746
    %v4281 = vmul.f32 %v4217, %v746
    %v4282 = vmul.f32 %v4218, %v746
    %v4283 = vmul.f32 %v4219, %v746
    %v4284 = vmul.f32 %v4220, %v746
    %v4285 = vmul.f32 %v4221, %v746
    %v4286 = vmul.f32 %v4222, %v746
    %v4287 = vmul.f32 %v4223, %v746
    %v4288 = vrot.slane %v4090, 1
    %v4289 = vrot.slane %v4091, 1
    %v4290 = vrot.slane %v4092, 1
    %v4291 = vrot.slane %v4093, 1
    %v4292 = vrot.slane %v4094, 1
    %v4293 = vrot.slane %v4095, 1
    %v4294 = vrot.slane %v4096, 1
    %v4295 = vrot.slane %v4097, 1
    %v4296 = vrot.slane %v4098, 1
    %v4297 = vrot.slane %v4099, 1
    %v4298 = vrot.slane %v4100, 1
    %v4299 = vrot.slane %v4101, 1
    %v4300 = vrot.slane %v4102, 1
    %v4301 = vrot.slane %v4103, 1
    %v4302 = vrot.slane %v4104, 1
    %v4303 = vrot.slane %v4105, 1
    %v4304 = vrot.slane %v4106, 1
    %v4305 = vrot.slane %v4107, 1
    %v4306 = vrot.slane %v4108, 1
    %v4307 = vrot.slane %v4109, 1
    %v4308 = vrot.slane %v4110, 1
    %v4309 = vrot.slane %v4111, 1
    %v4310 = vrot.slane %v4112, 1
    %v4311 = vrot.slane %v4113, 1
    %v4312 = vrot.slane %v4114, 1
    %v4313 = vrot.slane %v4115, 1
    %v4314 = vrot.slane %v4116, 1
    %v4315 = vrot.slane %v4117, 1
    %v4316 = vrot.slane %v4118, 1
    %v4317 = vrot.slane %v4119, 1
    %v4318 = vrot.slane %v4120, 1
    %v4319 = vrot.slane %v4121, 1
    %v4320 = vrot.slane %v4122, 1
    %v4321 = vrot.slane %v4123, 1
    %v4322 = vrot.slane %v4124, 1
    %v4323 = vrot.slane %v4125, 1
    %v4324 = vrot.slane %v4126, 1
    %v4325 = vrot.slane %v4127, 1
    %v4326 = vrot.slane %v4128, 1
    %v4327 = vrot.slane %v4129, 1
    %v4328 = vrot.slane %v4130, 1
    %v4329 = vrot.slane %v4131, 1
    %v4330 = vrot.slane %v4132, 1
    %v4331 = vrot.slane %v4133, 1
    %v4332 = vrot.slane %v4134, 1
    %v4333 = vrot.slane %v4135, 1
    %v4334 = vrot.slane %v4136, 1
    %v4335 = vrot.slane %v4137, 1
    %v4336 = vrot.slane %v4138, 1
    %v4337 = vrot.slane %v4139, 1
    %v4338 = vrot.slane %v4140, 1
    %v4339 = vrot.slane %v4141, 1
    %v4340 = vrot.slane %v4142, 1
    %v4341 = vrot.slane %v4143, 1
    %v4342 = vrot.slane %v4144, 1
    %v4343 = vrot.slane %v4145, 1
    %v4344 = vrot.slane %v4146, 1
    %v4345 = vrot.slane %v4147, 1
    %v4346 = vrot.slane %v4148, 1
    %v4347 = vrot.slane %v4149, 1
    %v4348 = vrot.slane %v4150, 1
    %v4349 = vrot.slane %v4151, 1
    %v4350 = vrot.slane %v4152, 1
    %v4351 = vrot.slane %v4153, 1
    %v4352 = vmul.f32 %v4288, %v749
    %v4353 = vmul.f32 %v4289, %v749
    %v4354 = vmul.f32 %v4290, %v749
    %v4355 = vmul.f32 %v4291, %v749
    %v4356 = vmul.f32 %v4292, %v749
    %v4357 = vmul.f32 %v4293, %v749
    %v4358 = vmul.f32 %v4294, %v749
    %v4359 = vmul.f32 %v4295, %v749
    %v4360 = vmul.f32 %v4296, %v749
    %v4361 = vmul.f32 %v4297, %v749
    %v4362 = vmul.f32 %v4298, %v749
    %v4363 = vmul.f32 %v4299, %v749
    %v4364 = vmul.f32 %v4300, %v749
    %v4365 = vmul.f32 %v4301, %v749
    %v4366 = vmul.f32 %v4302, %v749
    %v4367 = vmul.f32 %v4303, %v749
    %v4368 = vmul.f32 %v4304, %v749
    %v4369 = vmul.f32 %v4305, %v749
    %v4370 = vmul.f32 %v4306, %v749
    %v4371 = vmul.f32 %v4307, %v749
    %v4372 = vmul.f32 %v4308, %v749
    %v4373 = vmul.f32 %v4309, %v749
    %v4374 = vmul.f32 %v4310, %v749
    %v4375 = vmul.f32 %v4311, %v749
    %v4376 = vmul.f32 %v4312, %v749
    %v4377 = vmul.f32 %v4313, %v749
    %v4378 = vmul.f32 %v4314, %v749
    %v4379 = vmul.f32 %v4315, %v749
    %v4380 = vmul.f32 %v4316, %v749
    %v4381 = vmul.f32 %v4317, %v749
    %v4382 = vmul.f32 %v4318, %v749
    %v4383 = vmul.f32 %v4319, %v749
    %v4384 = vmul.f32 %v4320, %v749
    %v4385 = vmul.f32 %v4321, %v749
    %v4386 = vmul.f32 %v4322, %v749
    %v4387 = vmul.f32 %v4323, %v749
    %v4388 = vmul.f32 %v4324, %v749
    %v4389 = vmul.f32 %v4325, %v749
    %v4390 = vmul.f32 %v4326, %v749
    %v4391 = vmul.f32 %v4327, %v749
    %v4392 = vmul.f32 %v4328, %v749
    %v4393 = vmul.f32 %v4329, %v749
    %v4394 = vmul.f32 %v4330, %v749
    %v4395 = vmul.f32 %v4331, %v749
    %v4396 = vmul.f32 %v4332, %v749
    %v4397 = vmul.f32 %v4333, %v749
    %v4398 = vmul.f32 %v4334, %v749
    %v4399 = vmul.f32 %v4335, %v749
    %v4400 = vmul.f32 %v4336, %v749
    %v4401 = vmul.f32 %v4337, %v749
    %v4402 = vmul.f32 %v4338, %v749
    %v4403 = vmul.f32 %v4339, %v749
    %v4404 = vmul.f32 %v4340, %v749
    %v4405 = vmul.f32 %v4341, %v749
    %v4406 = vmul.f32 %v4342, %v749
    %v4407 = vmul.f32 %v4343, %v749
    %v4408 = vmul.f32 %v4344, %v749
    %v4409 = vmul.f32 %v4345, %v749
    %v4410 = vmul.f32 %v4346, %v749
    %v4411 = vmul.f32 %v4347, %v749
    %v4412 = vmul.f32 %v4348, %v749
    %v4413 = vmul.f32 %v4349, %v749
    %v4414 = vmul.f32 %v4350, %v749
    %v4415 = vmul.f32 %v4351, %v749
    %v4418 = vperm.slane %v4156, 0
    %v4419 = vperm.slane %v4156, 4
    %v4420 = vperm.slane %v4157, 0
    %v4421 = vperm.slane %v4157, 4
    %v4426 = vperm.slane %v4418, 0
    %v4427 = vperm.slane %v4419, 0
    %v4428 = vperm.slane %v4420, 0
    %v4429 = vperm.slane %v4421, 0
    %v4430 = vmul.f32 %v4224, %v4426
    %v4431 = vmul.f32 %v4225, %v4427
    %v4432 = vmul.f32 %v4226, %v4428
    %v4433 = vmul.f32 %v4227, %v4429
    %v4434 = vmul.f32 %v4228, %v4426
    %v4435 = vmul.f32 %v4229, %v4427
    %v4436 = vmul.f32 %v4230, %v4428
    %v4437 = vmul.f32 %v4231, %v4429
    %v4438 = vmul.f32 %v4232, %v4426
    %v4439 = vmul.f32 %v4233, %v4427
    %v4440 = vmul.f32 %v4234, %v4428
    %v4441 = vmul.f32 %v4235, %v4429
    %v4442 = vmul.f32 %v4236, %v4426
    %v4443 = vmul.f32 %v4237, %v4427
    %v4444 = vmul.f32 %v4238, %v4428
    %v4445 = vmul.f32 %v4239, %v4429
    %v4446 = vmul.f32 %v4240, %v4426
    %v4447 = vmul.f32 %v4241, %v4427
    %v4448 = vmul.f32 %v4242, %v4428
    %v4449 = vmul.f32 %v4243, %v4429
    %v4450 = vmul.f32 %v4244, %v4426
    %v4451 = vmul.f32 %v4245, %v4427
    %v4452 = vmul.f32 %v4246, %v4428
    %v4453 = vmul.f32 %v4247, %v4429
    %v4454 = vmul.f32 %v4248, %v4426
    %v4455 = vmul.f32 %v4249, %v4427
    %v4456 = vmul.f32 %v4250, %v4428
    %v4457 = vmul.f32 %v4251, %v4429
    %v4458 = vmul.f32 %v4252, %v4426
    %v4459 = vmul.f32 %v4253, %v4427
    %v4460 = vmul.f32 %v4254, %v4428
    %v4461 = vmul.f32 %v4255, %v4429
    %v4462 = vmul.f32 %v4256, %v4426
    %v4463 = vmul.f32 %v4257, %v4427
    %v4464 = vmul.f32 %v4258, %v4428
    %v4465 = vmul.f32 %v4259, %v4429
    %v4466 = vmul.f32 %v4260, %v4426
    %v4467 = vmul.f32 %v4261, %v4427
    %v4468 = vmul.f32 %v4262, %v4428
    %v4469 = vmul.f32 %v4263, %v4429
    %v4470 = vmul.f32 %v4264, %v4426
    %v4471 = vmul.f32 %v4265, %v4427
    %v4472 = vmul.f32 %v4266, %v4428
    %v4473 = vmul.f32 %v4267, %v4429
    %v4474 = vmul.f32 %v4268, %v4426
    %v4475 = vmul.f32 %v4269, %v4427
    %v4476 = vmul.f32 %v4270, %v4428
    %v4477 = vmul.f32 %v4271, %v4429
    %v4478 = vmul.f32 %v4272, %v4426
    %v4479 = vmul.f32 %v4273, %v4427
    %v4480 = vmul.f32 %v4274, %v4428
    %v4481 = vmul.f32 %v4275, %v4429
    %v4482 = vmul.f32 %v4276, %v4426
    %v4483 = vmul.f32 %v4277, %v4427
    %v4484 = vmul.f32 %v4278, %v4428
    %v4485 = vmul.f32 %v4279, %v4429
    %v4486 = vmul.f32 %v4280, %v4426
    %v4487 = vmul.f32 %v4281, %v4427
    %v4488 = vmul.f32 %v4282, %v4428
    %v4489 = vmul.f32 %v4283, %v4429
    %v4490 = vmul.f32 %v4284, %v4426
    %v4491 = vmul.f32 %v4285, %v4427
    %v4492 = vmul.f32 %v4286, %v4428
    %v4493 = vmul.f32 %v4287, %v4429
    %v4494 = vperm.slane %v4156, 1
    %v4495 = vperm.slane %v4156, 5
    %v4496 = vperm.slane %v4157, 1
    %v4497 = vperm.slane %v4157, 5
    %v4502 = vperm.slane %v4494, 1
    %v4503 = vperm.slane %v4495, 1
    %v4504 = vperm.slane %v4496, 1
    %v4505 = vperm.slane %v4497, 1
    %v4506 = vmul.f32 %v4090, %v4502
    %v4507 = vmul.f32 %v4091, %v4503
    %v4508 = vmul.f32 %v4092, %v4504
    %v4509 = vmul.f32 %v4093, %v4505
    %v4510 = vmul.f32 %v4094, %v4502
    %v4511 = vmul.f32 %v4095, %v4503
    %v4512 = vmul.f32 %v4096, %v4504
    %v4513 = vmul.f32 %v4097, %v4505
    %v4514 = vmul.f32 %v4098, %v4502
    %v4515 = vmul.f32 %v4099, %v4503
    %v4516 = vmul.f32 %v4100, %v4504
    %v4517 = vmul.f32 %v4101, %v4505
    %v4518 = vmul.f32 %v4102, %v4502
    %v4519 = vmul.f32 %v4103, %v4503
    %v4520 = vmul.f32 %v4104, %v4504
    %v4521 = vmul.f32 %v4105, %v4505
    %v4522 = vmul.f32 %v4106, %v4502
    %v4523 = vmul.f32 %v4107, %v4503
    %v4524 = vmul.f32 %v4108, %v4504
    %v4525 = vmul.f32 %v4109, %v4505
    %v4526 = vmul.f32 %v4110, %v4502
    %v4527 = vmul.f32 %v4111, %v4503
    %v4528 = vmul.f32 %v4112, %v4504
    %v4529 = vmul.f32 %v4113, %v4505
    %v4530 = vmul.f32 %v4114, %v4502
    %v4531 = vmul.f32 %v4115, %v4503
    %v4532 = vmul.f32 %v4116, %v4504
    %v4533 = vmul.f32 %v4117, %v4505
    %v4534 = vmul.f32 %v4118, %v4502
    %v4535 = vmul.f32 %v4119, %v4503
    %v4536 = vmul.f32 %v4120, %v4504
    %v4537 = vmul.f32 %v4121, %v4505
    %v4538 = vmul.f32 %v4122, %v4502
    %v4539 = vmul.f32 %v4123, %v4503
    %v4540 = vmul.f32 %v4124, %v4504
    %v4541 = vmul.f32 %v4125, %v4505
    %v4542 = vmul.f32 %v4126, %v4502
    %v4543 = vmul.f32 %v4127, %v4503
    %v4544 = vmul.f32 %v4128, %v4504
    %v4545 = vmul.f32 %v4129, %v4505
    %v4546 = vmul.f32 %v4130, %v4502
    %v4547 = vmul.f32 %v4131, %v4503
    %v4548 = vmul.f32 %v4132, %v4504
    %v4549 = vmul.f32 %v4133, %v4505
    %v4550 = vmul.f32 %v4134, %v4502
    %v4551 = vmul.f32 %v4135, %v4503
    %v4552 = vmul.f32 %v4136, %v4504
    %v4553 = vmul.f32 %v4137, %v4505
    %v4554 = vmul.f32 %v4138, %v4502
    %v4555 = vmul.f32 %v4139, %v4503
    %v4556 = vmul.f32 %v4140, %v4504
    %v4557 = vmul.f32 %v4141, %v4505
    %v4558 = vmul.f32 %v4142, %v4502
    %v4559 = vmul.f32 %v4143, %v4503
    %v4560 = vmul.f32 %v4144, %v4504
    %v4561 = vmul.f32 %v4145, %v4505
    %v4562 = vmul.f32 %v4146, %v4502
    %v4563 = vmul.f32 %v4147, %v4503
    %v4564 = vmul.f32 %v4148, %v4504
    %v4565 = vmul.f32 %v4149, %v4505
    %v4566 = vmul.f32 %v4150, %v4502
    %v4567 = vmul.f32 %v4151, %v4503
    %v4568 = vmul.f32 %v4152, %v4504
    %v4569 = vmul.f32 %v4153, %v4505
    %v4570 = vadd.f32 %v4430, %v4506
    %v4571 = vadd.f32 %v4431, %v4507
    %v4572 = vadd.f32 %v4432, %v4508
    %v4573 = vadd.f32 %v4433, %v4509
    %v4574 = vadd.f32 %v4434, %v4510
    %v4575 = vadd.f32 %v4435, %v4511
    %v4576 = vadd.f32 %v4436, %v4512
    %v4577 = vadd.f32 %v4437, %v4513
    %v4578 = vadd.f32 %v4438, %v4514
    %v4579 = vadd.f32 %v4439, %v4515
    %v4580 = vadd.f32 %v4440, %v4516
    %v4581 = vadd.f32 %v4441, %v4517
    %v4582 = vadd.f32 %v4442, %v4518
    %v4583 = vadd.f32 %v4443, %v4519
    %v4584 = vadd.f32 %v4444, %v4520
    %v4585 = vadd.f32 %v4445, %v4521
    %v4586 = vadd.f32 %v4446, %v4522
    %v4587 = vadd.f32 %v4447, %v4523
    %v4588 = vadd.f32 %v4448, %v4524
    %v4589 = vadd.f32 %v4449, %v4525
    %v4590 = vadd.f32 %v4450, %v4526
    %v4591 = vadd.f32 %v4451, %v4527
    %v4592 = vadd.f32 %v4452, %v4528
    %v4593 = vadd.f32 %v4453, %v4529
    %v4594 = vadd.f32 %v4454, %v4530
    %v4595 = vadd.f32 %v4455, %v4531
    %v4596 = vadd.f32 %v4456, %v4532
    %v4597 = vadd.f32 %v4457, %v4533
    %v4598 = vadd.f32 %v4458, %v4534
    %v4599 = vadd.f32 %v4459, %v4535
    %v4600 = vadd.f32 %v4460, %v4536
    %v4601 = vadd.f32 %v4461, %v4537
    %v4602 = vadd.f32 %v4462, %v4538
    %v4603 = vadd.f32 %v4463, %v4539
    %v4604 = vadd.f32 %v4464, %v4540
    %v4605 = vadd.f32 %v4465, %v4541
    %v4606 = vadd.f32 %v4466, %v4542
    %v4607 = vadd.f32 %v4467, %v4543
    %v4608 = vadd.f32 %v4468, %v4544
    %v4609 = vadd.f32 %v4469, %v4545
    %v4610 = vadd.f32 %v4470, %v4546
    %v4611 = vadd.f32 %v4471, %v4547
    %v4612 = vadd.f32 %v4472, %v4548
    %v4613 = vadd.f32 %v4473, %v4549
    %v4614 = vadd.f32 %v4474, %v4550
    %v4615 = vadd.f32 %v4475, %v4551
    %v4616 = vadd.f32 %v4476, %v4552
    %v4617 = vadd.f32 %v4477, %v4553
    %v4618 = vadd.f32 %v4478, %v4554
    %v4619 = vadd.f32 %v4479, %v4555
    %v4620 = vadd.f32 %v4480, %v4556
    %v4621 = vadd.f32 %v4481, %v4557
    %v4622 = vadd.f32 %v4482, %v4558
    %v4623 = vadd.f32 %v4483, %v4559
    %v4624 = vadd.f32 %v4484, %v4560
    %v4625 = vadd.f32 %v4485, %v4561
    %v4626 = vadd.f32 %v4486, %v4562
    %v4627 = vadd.f32 %v4487, %v4563
    %v4628 = vadd.f32 %v4488, %v4564
    %v4629 = vadd.f32 %v4489, %v4565
    %v4630 = vadd.f32 %v4490, %v4566
    %v4631 = vadd.f32 %v4491, %v4567
    %v4632 = vadd.f32 %v4492, %v4568
    %v4633 = vadd.f32 %v4493, %v4569
    %v4634 = vperm.slane %v4156, 2
    %v4635 = vperm.slane %v4156, 6
    %v4636 = vperm.slane %v4157, 2
    %v4637 = vperm.slane %v4157, 6
    %v4642 = vperm.slane %v4634, 2
    %v4643 = vperm.slane %v4635, 2
    %v4644 = vperm.slane %v4636, 2
    %v4645 = vperm.slane %v4637, 2
    %v4646 = vmul.f32 %v4352, %v4642
    %v4647 = vmul.f32 %v4353, %v4643
    %v4648 = vmul.f32 %v4354, %v4644
    %v4649 = vmul.f32 %v4355, %v4645
    %v4650 = vmul.f32 %v4356, %v4642
    %v4651 = vmul.f32 %v4357, %v4643
    %v4652 = vmul.f32 %v4358, %v4644
    %v4653 = vmul.f32 %v4359, %v4645
    %v4654 = vmul.f32 %v4360, %v4642
    %v4655 = vmul.f32 %v4361, %v4643
    %v4656 = vmul.f32 %v4362, %v4644
    %v4657 = vmul.f32 %v4363, %v4645
    %v4658 = vmul.f32 %v4364, %v4642
    %v4659 = vmul.f32 %v4365, %v4643
    %v4660 = vmul.f32 %v4366, %v4644
    %v4661 = vmul.f32 %v4367, %v4645
    %v4662 = vmul.f32 %v4368, %v4642
    %v4663 = vmul.f32 %v4369, %v4643
    %v4664 = vmul.f32 %v4370, %v4644
    %v4665 = vmul.f32 %v4371, %v4645
    %v4666 = vmul.f32 %v4372, %v4642
    %v4667 = vmul.f32 %v4373, %v4643
    %v4668 = vmul.f32 %v4374, %v4644
    %v4669 = vmul.f32 %v4375, %v4645
    %v4670 = vmul.f32 %v4376, %v4642
    %v4671 = vmul.f32 %v4377, %v4643
    %v4672 = vmul.f32 %v4378, %v4644
    %v4673 = vmul.f32 %v4379, %v4645
    %v4674 = vmul.f32 %v4380, %v4642
    %v4675 = vmul.f32 %v4381, %v4643
    %v4676 = vmul.f32 %v4382, %v4644
    %v4677 = vmul.f32 %v4383, %v4645
    %v4678 = vmul.f32 %v4384, %v4642
    %v4679 = vmul.f32 %v4385, %v4643
    %v4680 = vmul.f32 %v4386, %v4644
    %v4681 = vmul.f32 %v4387, %v4645
    %v4682 = vmul.f32 %v4388, %v4642
    %v4683 = vmul.f32 %v4389, %v4643
    %v4684 = vmul.f32 %v4390, %v4644
    %v4685 = vmul.f32 %v4391, %v4645
    %v4686 = vmul.f32 %v4392, %v4642
    %v4687 = vmul.f32 %v4393, %v4643
    %v4688 = vmul.f32 %v4394, %v4644
    %v4689 = vmul.f32 %v4395, %v4645
    %v4690 = vmul.f32 %v4396, %v4642
    %v4691 = vmul.f32 %v4397, %v4643
    %v4692 = vmul.f32 %v4398, %v4644
    %v4693 = vmul.f32 %v4399, %v4645
    %v4694 = vmul.f32 %v4400, %v4642
    %v4695 = vmul.f32 %v4401, %v4643
    %v4696 = vmul.f32 %v4402, %v4644
    %v4697 = vmul.f32 %v4403, %v4645
    %v4698 = vmul.f32 %v4404, %v4642
    %v4699 = vmul.f32 %v4405, %v4643
    %v4700 = vmul.f32 %v4406, %v4644
    %v4701 = vmul.f32 %v4407, %v4645
    %v4702 = vmul.f32 %v4408, %v4642
    %v4703 = vmul.f32 %v4409, %v4643
    %v4704 = vmul.f32 %v4410, %v4644
    %v4705 = vmul.f32 %v4411, %v4645
    %v4706 = vmul.f32 %v4412, %v4642
    %v4707 = vmul.f32 %v4413, %v4643
    %v4708 = vmul.f32 %v4414, %v4644
    %v4709 = vmul.f32 %v4415, %v4645
    %v4710 = vadd.f32 %v4570, %v4646
    %v4711 = vadd.f32 %v4571, %v4647
    %v4712 = vadd.f32 %v4572, %v4648
    %v4713 = vadd.f32 %v4573, %v4649
    %v4714 = vadd.f32 %v4574, %v4650
    %v4715 = vadd.f32 %v4575, %v4651
    %v4716 = vadd.f32 %v4576, %v4652
    %v4717 = vadd.f32 %v4577, %v4653
    %v4718 = vadd.f32 %v4578, %v4654
    %v4719 = vadd.f32 %v4579, %v4655
    %v4720 = vadd.f32 %v4580, %v4656
    %v4721 = vadd.f32 %v4581, %v4657
    %v4722 = vadd.f32 %v4582, %v4658
    %v4723 = vadd.f32 %v4583, %v4659
    %v4724 = vadd.f32 %v4584, %v4660
    %v4725 = vadd.f32 %v4585, %v4661
    %v4726 = vadd.f32 %v4586, %v4662
    %v4727 = vadd.f32 %v4587, %v4663
    %v4728 = vadd.f32 %v4588, %v4664
    %v4729 = vadd.f32 %v4589, %v4665
    %v4730 = vadd.f32 %v4590, %v4666
    %v4731 = vadd.f32 %v4591, %v4667
    %v4732 = vadd.f32 %v4592, %v4668
    %v4733 = vadd.f32 %v4593, %v4669
    %v4734 = vadd.f32 %v4594, %v4670
    %v4735 = vadd.f32 %v4595, %v4671
    %v4736 = vadd.f32 %v4596, %v4672
    %v4737 = vadd.f32 %v4597, %v4673
    %v4738 = vadd.f32 %v4598, %v4674
    %v4739 = vadd.f32 %v4599, %v4675
    %v4740 = vadd.f32 %v4600, %v4676
    %v4741 = vadd.f32 %v4601, %v4677
    %v4742 = vadd.f32 %v4602, %v4678
    %v4743 = vadd.f32 %v4603, %v4679
    %v4744 = vadd.f32 %v4604, %v4680
    %v4745 = vadd.f32 %v4605, %v4681
    %v4746 = vadd.f32 %v4606, %v4682
    %v4747 = vadd.f32 %v4607, %v4683
    %v4748 = vadd.f32 %v4608, %v4684
    %v4749 = vadd.f32 %v4609, %v4685
    %v4750 = vadd.f32 %v4610, %v4686
    %v4751 = vadd.f32 %v4611, %v4687
    %v4752 = vadd.f32 %v4612, %v4688
    %v4753 = vadd.f32 %v4613, %v4689
    %v4754 = vadd.f32 %v4614, %v4690
    %v4755 = vadd.f32 %v4615, %v4691
    %v4756 = vadd.f32 %v4616, %v4692
    %v4757 = vadd.f32 %v4617, %v4693
    %v4758 = vadd.f32 %v4618, %v4694
    %v4759 = vadd.f32 %v4619, %v4695
    %v4760 = vadd.f32 %v4620, %v4696
    %v4761 = vadd.f32 %v4621, %v4697
    %v4762 = vadd.f32 %v4622, %v4698
    %v4763 = vadd.f32 %v4623, %v4699
    %v4764 = vadd.f32 %v4624, %v4700
    %v4765 = vadd.f32 %v4625, %v4701
    %v4766 = vadd.f32 %v4626, %v4702
    %v4767 = vadd.f32 %v4627, %v4703
    %v4768 = vadd.f32 %v4628, %v4704
    %v4769 = vadd.f32 %v4629, %v4705
    %v4770 = vadd.f32 %v4630, %v4706
    %v4771 = vadd.f32 %v4631, %v4707
    %v4772 = vadd.f32 %v4632, %v4708
    %v4773 = vadd.f32 %v4633, %v4709
    %4774 = vst [vmem:[#allocation2] sm:$0xff] %v4710
    %4775 = vst [vmem:[#allocation2 + $0x8] sm:$0xff] %v4711
    %4776 = vst [vmem:[#allocation2 + $0x10] sm:$0xff] %v4712
    %4777 = vst.msk [vmem:[#allocation2 + $0x18] sm:$0xff] %vm1469, %v4713
    %4778 = vst [vmem:[#allocation2 + $0x20] sm:$0xff] %v4714
    %4779 = vst [vmem:[#allocation2 + $0x28] sm:$0xff] %v4715
    %4780 = vst [vmem:[#allocation2 + $0x30] sm:$0xff] %v4716
    %4781 = vst.msk [vmem:[#allocation2 + $0x38] sm:$0xff] %vm1469, %v4717
    %4782 = vst [vmem:[#allocation2 + $0x40] sm:$0xff] %v4718
    %4783 = vst [vmem:[#allocation2 + $0x48] sm:$0xff] %v4719
    %4784 = vst [vmem:[#allocation2 + $0x50] sm:$0xff] %v4720
    %4785 = vst.msk [vmem:[#allocation2 + $0x58] sm:$0xff] %vm1469, %v4721
    %4786 = vst [vmem:[#allocation2 + $0x60] sm:$0xff] %v4722
    %4787 = vst [vmem:[#allocation2 + $0x68] sm:$0xff] %v4723
    %4788 = vst [vmem:[#allocation2 + $0x70] sm:$0xff] %v4724
    %4789 = vst.msk [vmem:[#allocation2 + $0x78] sm:$0xff] %vm1469, %v4725
    %4790 = vst [vmem:[#allocation2 + $0x80] sm:$0xff] %v4726
    %4791 = vst [vmem:[#allocation2 + $0x88] sm:$0xff] %v4727
    %4792 = vst [vmem:[#allocation2 + $0x90] sm:$0xff] %v4728
    %4793 = vst.msk [vmem:[#allocation2 + $0x98] sm:$0xff] %vm1469, %v4729
    %4794 = vst [vmem:[#allocation2 + $0xa0] sm:$0xff] %v4730
    %4795 = vst [vmem:[#allocation2 + $0xa8] sm:$0xff] %v4731
    %4796 = vst [vmem:[#allocation2 + $0xb0] sm:$0xff] %v4732
    %4797 = vst.msk [vmem:[#allocation2 + $0xb8] sm:$0xff] %vm1469, %v4733
    %4798 = vst [vmem:[#allocation2 + $0xc0] sm:$0xff] %v4734
    %4799 = vst [vmem:[#allocation2 + $0xc8] sm:$0xff] %v4735
    %4800 = vst [vmem:[#allocation2 + $0xd0] sm:$0xff] %v4736
    %4801 = vst.msk [vmem:[#allocation2 + $0xd8] sm:$0xff] %vm1469, %v4737
    %4802 = vst [vmem:[#allocation2 + $0xe0] sm:$0xff] %v4738
    %4803 = vst [vmem:[#allocation2 + $0xe8] sm:$0xff] %v4739
    %4804 = vst [vmem:[#allocation2 + $0xf0] sm:$0xff] %v4740
    %4805 = vst.msk [vmem:[#allocation2 + $0xf8] sm:$0xff] %vm1469, %v4741
    %4806 = vst [vmem:[#allocation2 + $0x100] sm:$0xff] %v4742
    %4807 = vst [vmem:[#allocation2 + $0x108] sm:$0xff] %v4743
    %4808 = vst [vmem:[#allocation2 + $0x110] sm:$0xff] %v4744
    %4809 = vst.msk [vmem:[#allocation2 + $0x118] sm:$0xff] %vm1469, %v4745
    %4810 = vst [vmem:[#allocation2 + $0x120] sm:$0xff] %v4746
    %4811 = vst [vmem:[#allocation2 + $0x128] sm:$0xff] %v4747
    %4812 = vst [vmem:[#allocation2 + $0x130] sm:$0xff] %v4748
    %4813 = vst.msk [vmem:[#allocation2 + $0x138] sm:$0xff] %vm1469, %v4749
    %4814 = vst [vmem:[#allocation2 + $0x140] sm:$0xff] %v4750
    %4815 = vst [vmem:[#allocation2 + $0x148] sm:$0xff] %v4751
    %4816 = vst [vmem:[#allocation2 + $0x150] sm:$0xff] %v4752
    %4817 = vst.msk [vmem:[#allocation2 + $0x158] sm:$0xff] %vm1469, %v4753
    %4818 = vst [vmem:[#allocation2 + $0x160] sm:$0xff] %v4754
    %4819 = vst [vmem:[#allocation2 + $0x168] sm:$0xff] %v4755
    %4820 = vst [vmem:[#allocation2 + $0x170] sm:$0xff] %v4756
    %4821 = vst.msk [vmem:[#allocation2 + $0x178] sm:$0xff] %vm1469, %v4757
    %4822 = vst [vmem:[#allocation2 + $0x180] sm:$0xff] %v4758
    %4823 = vst [vmem:[#allocation2 + $0x188] sm:$0xff] %v4759
    %4824 = vst [vmem:[#allocation2 + $0x190] sm:$0xff] %v4760
    %4825 = vst.msk [vmem:[#allocation2 + $0x198] sm:$0xff] %vm1469, %v4761
    %4826 = vst [vmem:[#allocation2 + $0x1a0] sm:$0xff] %v4762
    %4827 = vst [vmem:[#allocation2 + $0x1a8] sm:$0xff] %v4763
    %4828 = vst [vmem:[#allocation2 + $0x1b0] sm:$0xff] %v4764
    %4829 = vst.msk [vmem:[#allocation2 + $0x1b8] sm:$0xff] %vm1469, %v4765
    %4830 = vst [vmem:[#allocation2 + $0x1c0] sm:$0xff] %v4766
    %4831 = vst [vmem:[#allocation2 + $0x1c8] sm:$0xff] %v4767
    %4832 = vst [vmem:[#allocation2 + $0x1d0] sm:$0xff] %v4768
    %4833 = vst.msk [vmem:[#allocation2 + $0x1d8] sm:$0xff] %vm1469, %v4769
    %4834 = vst [vmem:[#allocation2 + $0x1e0] sm:$0xff] %v4770
    %4835 = vst [vmem:[#allocation2 + $0x1e8] sm:$0xff] %v4771
    %4836 = vst [vmem:[#allocation2 + $0x1f0] sm:$0xff] %v4772
    %4837 = vst.msk [vmem:[#allocation2 + $0x1f8] sm:$0xff] %vm1469, %v4773
    %v4838 = vld [vmem:[%s1531] sm:$0xff]
    %v4839 = vld [vmem:[%s1531 + $0x8] sm:$0xff]
    %v4840 = vld [vmem:[%s1531 + $0x10] sm:$0xff]
    %v4841 = vld [vmem:[%s1531 + $0x18] sm:$0xff]
    %v4842 = vld [vmem:[%s1531 + $0x20] sm:$0xff]
    %v4843 = vld [vmem:[%s1531 + $0x28] sm:$0xff]
    %v4844 = vld [vmem:[%s1531 + $0x30] sm:$0xff]
    %v4845 = vld [vmem:[%s1531 + $0x38] sm:$0xff]
    %v4846 = vld [vmem:[%s1531 + $0x40] sm:$0xff]
    %v4847 = vld [vmem:[%s1531 + $0x48] sm:$0xff]
    %v4848 = vld [vmem:[%s1531 + $0x50] sm:$0xff]
    %v4849 = vld [vmem:[%s1531 + $0x58] sm:$0xff]
    %v4850 = vld [vmem:[%s1531 + $0x60] sm:$0xff]
    %v4851 = vld [vmem:[%s1531 + $0x68] sm:$0xff]
    %v4852 = vld [vmem:[%s1531 + $0x70] sm:$0xff]
    %v4853 = vld [vmem:[%s1531 + $0x78] sm:$0xff]
    %v4854 = vld [vmem:[%s1531 + $0x80] sm:$0xff]
    %v4855 = vld [vmem:[%s1531 + $0x88] sm:$0xff]
    %v4856 = vld [vmem:[%s1531 + $0x90] sm:$0xff]
    %v4857 = vld [vmem:[%s1531 + $0x98] sm:$0xff]
    %v4858 = vld [vmem:[%s1531 + $0xa0] sm:$0xff]
    %v4859 = vld [vmem:[%s1531 + $0xa8] sm:$0xff]
    %v4860 = vld [vmem:[%s1531 + $0xb0] sm:$0xff]
    %v4861 = vld [vmem:[%s1531 + $0xb8] sm:$0xff]
    %v4862 = vld [vmem:[%s1531 + $0xc0] sm:$0xff]
    %v4863 = vld [vmem:[%s1531 + $0xc8] sm:$0xff]
    %v4864 = vld [vmem:[%s1531 + $0xd0] sm:$0xff]
    %v4865 = vld [vmem:[%s1531 + $0xd8] sm:$0xff]
    %v4866 = vld [vmem:[%s1531 + $0x100] sm:$0xff]
    %v4867 = vld [vmem:[%s1531 + $0x108] sm:$0xff]
    %v4868 = vld [vmem:[%s1531 + $0x110] sm:$0xff]
    %v4869 = vld [vmem:[%s1531 + $0x118] sm:$0xff]
    %v4870 = vld [vmem:[%s1531 + $0x120] sm:$0xff]
    %v4871 = vld [vmem:[%s1531 + $0x128] sm:$0xff]
    %v4872 = vld [vmem:[%s1531 + $0x130] sm:$0xff]
    %v4873 = vld [vmem:[%s1531 + $0x138] sm:$0xff]
    %v4874 = vld [vmem:[%s1531 + $0x140] sm:$0xff]
    %v4875 = vld [vmem:[%s1531 + $0x148] sm:$0xff]
    %v4876 = vld [vmem:[%s1531 + $0x150] sm:$0xff]
    %v4877 = vld [vmem:[%s1531 + $0x158] sm:$0xff]
    %v4878 = vld [vmem:[%s1531 + $0x160] sm:$0xff]
    %v4879 = vld [vmem:[%s1531 + $0x168] sm:$0xff]
    %v4880 = vld [vmem:[%s1531 + $0x170] sm:$0xff]
    %v4881 = vld [vmem:[%s1531 + $0x178] sm:$0xff]
    %v4882 = vld [vmem:[%s1531 + $0x180] sm:$0xff]
    %v4883 = vld [vmem:[%s1531 + $0x188] sm:$0xff]
    %v4884 = vld [vmem:[%s1531 + $0x190] sm:$0xff]
    %v4885 = vld [vmem:[%s1531 + $0x198] sm:$0xff]
    %v4886 = vld [vmem:[%s1531 + $0x1a0] sm:$0xff]
    %v4887 = vld [vmem:[%s1531 + $0x1a8] sm:$0xff]
    %v4888 = vld [vmem:[%s1531 + $0x1b0] sm:$0xff]
    %v4889 = vld [vmem:[%s1531 + $0x1b8] sm:$0xff]
    %v4890 = vld [vmem:[%s1531 + $0x1c0] sm:$0xff]
    %v4891 = vld [vmem:[%s1531 + $0x1c8] sm:$0xff]
    %v4892 = vld [vmem:[%s1531 + $0x1d0] sm:$0xff]
    %v4893 = vld [vmem:[%s1531 + $0x1d8] sm:$0xff]
    %v4896 = vperm.slane %v4154, 0
    %v4897 = vperm.slane %v4154, 4
    %v4898 = vperm.slane %v4155, 0
    %v4899 = vperm.slane %v4155, 4
    %v4904 = vperm.slane %v4896, 0
    %v4905 = vperm.slane %v4897, 0
    %v4906 = vperm.slane %v4898, 0
    %v4907 = vperm.slane %v4899, 0
    %v4908 = vmul.f32 %v4224, %v4904
    %v4909 = vmul.f32 %v4225, %v4905
    %v4910 = vmul.f32 %v4226, %v4906
    %v4911 = vmul.f32 %v4227, %v4907
    %v4912 = vmul.f32 %v4228, %v4904
    %v4913 = vmul.f32 %v4229, %v4905
    %v4914 = vmul.f32 %v4230, %v4906
    %v4915 = vmul.f32 %v4231, %v4907
    %v4916 = vmul.f32 %v4232, %v4904
    %v4917 = vmul.f32 %v4233, %v4905
    %v4918 = vmul.f32 %v4234, %v4906
    %v4919 = vmul.f32 %v4235, %v4907
    %v4920 = vmul.f32 %v4236, %v4904
    %v4921 = vmul.f32 %v4237, %v4905
    %v4922 = vmul.f32 %v4238, %v4906
    %v4923 = vmul.f32 %v4239, %v4907
    %v4924 = vmul.f32 %v4240, %v4904
    %v4925 = vmul.f32 %v4241, %v4905
    %v4926 = vmul.f32 %v4242, %v4906
    %v4927 = vmul.f32 %v4243, %v4907
    %v4928 = vmul.f32 %v4244, %v4904
    %v4929 = vmul.f32 %v4245, %v4905
    %v4930 = vmul.f32 %v4246, %v4906
    %v4931 = vmul.f32 %v4247, %v4907
    %v4932 = vmul.f32 %v4248, %v4904
    %v4933 = vmul.f32 %v4249, %v4905
    %v4934 = vmul.f32 %v4250, %v4906
    %v4935 = vmul.f32 %v4251, %v4907
    %v4936 = vmul.f32 %v4256, %v4904
    %v4937 = vmul.f32 %v4257, %v4905
    %v4938 = vmul.f32 %v4258, %v4906
    %v4939 = vmul.f32 %v4259, %v4907
    %v4940 = vmul.f32 %v4260, %v4904
    %v4941 = vmul.f32 %v4261, %v4905
    %v4942 = vmul.f32 %v4262, %v4906
    %v4943 = vmul.f32 %v4263, %v4907
    %v4944 = vmul.f32 %v4264, %v4904
    %v4945 = vmul.f32 %v4265, %v4905
    %v4946 = vmul.f32 %v4266, %v4906
    %v4947 = vmul.f32 %v4267, %v4907
    %v4948 = vmul.f32 %v4268, %v4904
    %v4949 = vmul.f32 %v4269, %v4905
    %v4950 = vmul.f32 %v4270, %v4906
    %v4951 = vmul.f32 %v4271, %v4907
    %v4952 = vmul.f32 %v4272, %v4904
    %v4953 = vmul.f32 %v4273, %v4905
    %v4954 = vmul.f32 %v4274, %v4906
    %v4955 = vmul.f32 %v4275, %v4907
    %v4956 = vmul.f32 %v4276, %v4904
    %v4957 = vmul.f32 %v4277, %v4905
    %v4958 = vmul.f32 %v4278, %v4906
    %v4959 = vmul.f32 %v4279, %v4907
    %v4960 = vmul.f32 %v4280, %v4904
    %v4961 = vmul.f32 %v4281, %v4905
    %v4962 = vmul.f32 %v4282, %v4906
    %v4963 = vmul.f32 %v4283, %v4907
    %v4964 = vperm.slane %v4154, 1
    %v4965 = vperm.slane %v4154, 5
    %v4966 = vperm.slane %v4155, 1
    %v4967 = vperm.slane %v4155, 5
    %v4972 = vperm.slane %v4964, 1
    %v4973 = vperm.slane %v4965, 1
    %v4974 = vperm.slane %v4966, 1
    %v4975 = vperm.slane %v4967, 1
    %v4976 = vmul.f32 %v4090, %v4972
    %v4977 = vmul.f32 %v4091, %v4973
    %v4978 = vmul.f32 %v4092, %v4974
    %v4979 = vmul.f32 %v4093, %v4975
    %v4980 = vmul.f32 %v4094, %v4972
    %v4981 = vmul.f32 %v4095, %v4973
    %v4982 = vmul.f32 %v4096, %v4974
    %v4983 = vmul.f32 %v4097, %v4975
    %v4984 = vmul.f32 %v4098, %v4972
    %v4985 = vmul.f32 %v4099, %v4973
    %v4986 = vmul.f32 %v4100, %v4974
    %v4987 = vmul.f32 %v4101, %v4975
    %v4988 = vmul.f32 %v4102, %v4972
    %v4989 = vmul.f32 %v4103, %v4973
    %v4990 = vmul.f32 %v4104, %v4974
    %v4991 = vmul.f32 %v4105, %v4975
    %v4992 = vmul.f32 %v4106, %v4972
    %v4993 = vmul.f32 %v4107, %v4973
    %v4994 = vmul.f32 %v4108, %v4974
    %v4995 = vmul.f32 %v4109, %v4975
    %v4996 = vmul.f32 %v4110, %v4972
    %v4997 = vmul.f32 %v4111, %v4973
    %v4998 = vmul.f32 %v4112, %v4974
    %v4999 = vmul.f32 %v4113, %v4975
    %v5000 = vmul.f32 %v4114, %v4972
    %v5001 = vmul.f32 %v4115, %v4973
    %v5002 = vmul.f32 %v4116, %v4974
    %v5003 = vmul.f32 %v4117, %v4975
    %v5004 = vmul.f32 %v4122, %v4972
    %v5005 = vmul.f32 %v4123, %v4973
    %v5006 = vmul.f32 %v4124, %v4974
    %v5007 = vmul.f32 %v4125, %v4975
    %v5008 = vmul.f32 %v4126, %v4972
    %v5009 = vmul.f32 %v4127, %v4973
    %v5010 = vmul.f32 %v4128, %v4974
    %v5011 = vmul.f32 %v4129, %v4975
    %v5012 = vmul.f32 %v4130, %v4972
    %v5013 = vmul.f32 %v4131, %v4973
    %v5014 = vmul.f32 %v4132, %v4974
    %v5015 = vmul.f32 %v4133, %v4975
    %v5016 = vmul.f32 %v4134, %v4972
    %v5017 = vmul.f32 %v4135, %v4973
    %v5018 = vmul.f32 %v4136, %v4974
    %v5019 = vmul.f32 %v4137, %v4975
    %v5020 = vmul.f32 %v4138, %v4972
    %v5021 = vmul.f32 %v4139, %v4973
    %v5022 = vmul.f32 %v4140, %v4974
    %v5023 = vmul.f32 %v4141, %v4975
    %v5024 = vmul.f32 %v4142, %v4972
    %v5025 = vmul.f32 %v4143, %v4973
    %v5026 = vmul.f32 %v4144, %v4974
    %v5027 = vmul.f32 %v4145, %v4975
    %v5028 = vmul.f32 %v4146, %v4972
    %v5029 = vmul.f32 %v4147, %v4973
    %v5030 = vmul.f32 %v4148, %v4974
    %v5031 = vmul.f32 %v4149, %v4975
    %v5032 = vadd.f32 %v4908, %v4976
    %v5033 = vadd.f32 %v4909, %v4977
    %v5034 = vadd.f32 %v4910, %v4978
    %v5035 = vadd.f32 %v4911, %v4979
    %v5036 = vadd.f32 %v4912, %v4980
    %v5037 = vadd.f32 %v4913, %v4981
    %v5038 = vadd.f32 %v4914, %v4982
    %v5039 = vadd.f32 %v4915, %v4983
    %v5040 = vadd.f32 %v4916, %v4984
    %v5041 = vadd.f32 %v4917, %v4985
    %v5042 = vadd.f32 %v4918, %v4986
    %v5043 = vadd.f32 %v4919, %v4987
    %v5044 = vadd.f32 %v4920, %v4988
    %v5045 = vadd.f32 %v4921, %v4989
    %v5046 = vadd.f32 %v4922, %v4990
    %v5047 = vadd.f32 %v4923, %v4991
    %v5048 = vadd.f32 %v4924, %v4992
    %v5049 = vadd.f32 %v4925, %v4993
    %v5050 = vadd.f32 %v4926, %v4994
    %v5051 = vadd.f32 %v4927, %v4995
    %v5052 = vadd.f32 %v4928, %v4996
    %v5053 = vadd.f32 %v4929, %v4997
    %v5054 = vadd.f32 %v4930, %v4998
    %v5055 = vadd.f32 %v4931, %v4999
    %v5056 = vadd.f32 %v4932, %v5000
    %v5057 = vadd.f32 %v4933, %v5001
    %v5058 = vadd.f32 %v4934, %v5002
    %v5059 = vadd.f32 %v4935, %v5003
    %v5060 = vadd.f32 %v4936, %v5004
    %v5061 = vadd.f32 %v4937, %v5005
    %v5062 = vadd.f32 %v4938, %v5006
    %v5063 = vadd.f32 %v4939, %v5007
    %v5064 = vadd.f32 %v4940, %v5008
    %v5065 = vadd.f32 %v4941, %v5009
    %v5066 = vadd.f32 %v4942, %v5010
    %v5067 = vadd.f32 %v4943, %v5011
    %v5068 = vadd.f32 %v4944, %v5012
    %v5069 = vadd.f32 %v4945, %v5013
    %v5070 = vadd.f32 %v4946, %v5014
    %v5071 = vadd.f32 %v4947, %v5015
    %v5072 = vadd.f32 %v4948, %v5016
    %v5073 = vadd.f32 %v4949, %v5017
    %v5074 = vadd.f32 %v4950, %v5018
    %v5075 = vadd.f32 %v4951, %v5019
    %v5076 = vadd.f32 %v4952, %v5020
    %v5077 = vadd.f32 %v4953, %v5021
    %v5078 = vadd.f32 %v4954, %v5022
    %v5079 = vadd.f32 %v4955, %v5023
    %v5080 = vadd.f32 %v4956, %v5024
    %v5081 = vadd.f32 %v4957, %v5025
    %v5082 = vadd.f32 %v4958, %v5026
    %v5083 = vadd.f32 %v4959, %v5027
    %v5084 = vadd.f32 %v4960, %v5028
    %v5085 = vadd.f32 %v4961, %v5029
    %v5086 = vadd.f32 %v4962, %v5030
    %v5087 = vadd.f32 %v4963, %v5031
    %v5088 = vperm.slane %v4154, 2
    %v5089 = vperm.slane %v4154, 6
    %v5090 = vperm.slane %v4155, 2
    %v5091 = vperm.slane %v4155, 6
    %v5096 = vperm.slane %v5088, 2
    %v5097 = vperm.slane %v5089, 2
    %v5098 = vperm.slane %v5090, 2
    %v5099 = vperm.slane %v5091, 2
    %v5100 = vmul.f32 %v4352, %v5096
    %v5101 = vmul.f32 %v4353, %v5097
    %v5102 = vmul.f32 %v4354, %v5098
    %v5103 = vmul.f32 %v4355, %v5099
    %v5104 = vmul.f32 %v4356, %v5096
    %v5105 = vmul.f32 %v4357, %v5097
    %v5106 = vmul.f32 %v4358, %v5098
    %v5107 = vmul.f32 %v4359, %v5099
    %v5108 = vmul.f32 %v4360, %v5096
    %v5109 = vmul.f32 %v4361, %v5097
    %v5110 = vmul.f32 %v4362, %v5098
    %v5111 = vmul.f32 %v4363, %v5099
    %v5112 = vmul.f32 %v4364, %v5096
    %v5113 = vmul.f32 %v4365, %v5097
    %v5114 = vmul.f32 %v4366, %v5098
    %v5115 = vmul.f32 %v4367, %v5099
    %v5116 = vmul.f32 %v4368, %v5096
    %v5117 = vmul.f32 %v4369, %v5097
    %v5118 = vmul.f32 %v4370, %v5098
    %v5119 = vmul.f32 %v4371, %v5099
    %v5120 = vmul.f32 %v4372, %v5096
    %v5121 = vmul.f32 %v4373, %v5097
    %v5122 = vmul.f32 %v4374, %v5098
    %v5123 = vmul.f32 %v4375, %v5099
    %v5124 = vmul.f32 %v4376, %v5096
    %v5125 = vmul.f32 %v4377, %v5097
    %v5126 = vmul.f32 %v4378, %v5098
    %v5127 = vmul.f32 %v4379, %v5099
    %v5128 = vmul.f32 %v4384, %v5096
    %v5129 = vmul.f32 %v4385, %v5097
    %v5130 = vmul.f32 %v4386, %v5098
    %v5131 = vmul.f32 %v4387, %v5099
    %v5132 = vmul.f32 %v4388, %v5096
    %v5133 = vmul.f32 %v4389, %v5097
    %v5134 = vmul.f32 %v4390, %v5098
    %v5135 = vmul.f32 %v4391, %v5099
    %v5136 = vmul.f32 %v4392, %v5096
    %v5137 = vmul.f32 %v4393, %v5097
    %v5138 = vmul.f32 %v4394, %v5098
    %v5139 = vmul.f32 %v4395, %v5099
    %v5140 = vmul.f32 %v4396, %v5096
    %v5141 = vmul.f32 %v4397, %v5097
    %v5142 = vmul.f32 %v4398, %v5098
    %v5143 = vmul.f32 %v4399, %v5099
    %v5144 = vmul.f32 %v4400, %v5096
    %v5145 = vmul.f32 %v4401, %v5097
    %v5146 = vmul.f32 %v4402, %v5098
    %v5147 = vmul.f32 %v4403, %v5099
    %v5148 = vmul.f32 %v4404, %v5096
    %v5149 = vmul.f32 %v4405, %v5097
    %v5150 = vmul.f32 %v4406, %v5098
    %v5151 = vmul.f32 %v4407, %v5099
    %v5152 = vmul.f32 %v4408, %v5096
    %v5153 = vmul.f32 %v4409, %v5097
    %v5154 = vmul.f32 %v4410, %v5098
    %v5155 = vmul.f32 %v4411, %v5099
    %v5156 = vadd.f32 %v5032, %v5100
    %v5157 = vadd.f32 %v5033, %v5101
    %v5158 = vadd.f32 %v5034, %v5102
    %v5159 = vadd.f32 %v5035, %v5103
    %v5160 = vadd.f32 %v5036, %v5104
    %v5161 = vadd.f32 %v5037, %v5105
    %v5162 = vadd.f32 %v5038, %v5106
    %v5163 = vadd.f32 %v5039, %v5107
    %v5164 = vadd.f32 %v5040, %v5108
    %v5165 = vadd.f32 %v5041, %v5109
    %v5166 = vadd.f32 %v5042, %v5110
    %v5167 = vadd.f32 %v5043, %v5111
    %v5168 = vadd.f32 %v5044, %v5112
    %v5169 = vadd.f32 %v5045, %v5113
    %v5170 = vadd.f32 %v5046, %v5114
    %v5171 = vadd.f32 %v5047, %v5115
    %v5172 = vadd.f32 %v5048, %v5116
    %v5173 = vadd.f32 %v5049, %v5117
    %v5174 = vadd.f32 %v5050, %v5118
    %v5175 = vadd.f32 %v5051, %v5119
    %v5176 = vadd.f32 %v5052, %v5120
    %v5177 = vadd.f32 %v5053, %v5121
    %v5178 = vadd.f32 %v5054, %v5122
    %v5179 = vadd.f32 %v5055, %v5123
    %v5180 = vadd.f32 %v5056, %v5124
    %v5181 = vadd.f32 %v5057, %v5125
    %v5182 = vadd.f32 %v5058, %v5126
    %v5183 = vadd.f32 %v5059, %v5127
    %v5184 = vadd.f32 %v5060, %v5128
    %v5185 = vadd.f32 %v5061, %v5129
    %v5186 = vadd.f32 %v5062, %v5130
    %v5187 = vadd.f32 %v5063, %v5131
    %v5188 = vadd.f32 %v5064, %v5132
    %v5189 = vadd.f32 %v5065, %v5133
    %v5190 = vadd.f32 %v5066, %v5134
    %v5191 = vadd.f32 %v5067, %v5135
    %v5192 = vadd.f32 %v5068, %v5136
    %v5193 = vadd.f32 %v5069, %v5137
    %v5194 = vadd.f32 %v5070, %v5138
    %v5195 = vadd.f32 %v5071, %v5139
    %v5196 = vadd.f32 %v5072, %v5140
    %v5197 = vadd.f32 %v5073, %v5141
    %v5198 = vadd.f32 %v5074, %v5142
    %v5199 = vadd.f32 %v5075, %v5143
    %v5200 = vadd.f32 %v5076, %v5144
    %v5201 = vadd.f32 %v5077, %v5145
    %v5202 = vadd.f32 %v5078, %v5146
    %v5203 = vadd.f32 %v5079, %v5147
    %v5204 = vadd.f32 %v5080, %v5148
    %v5205 = vadd.f32 %v5081, %v5149
    %v5206 = vadd.f32 %v5082, %v5150
    %v5207 = vadd.f32 %v5083, %v5151
    %v5208 = vadd.f32 %v5084, %v5152
    %v5209 = vadd.f32 %v5085, %v5153
    %v5210 = vadd.f32 %v5086, %v5154
    %v5211 = vadd.f32 %v5087, %v5155
    %v5212 = vadd.f32 %v4838, %v5156
    %v5213 = vadd.f32 %v4839, %v5157
    %v5214 = vadd.f32 %v4840, %v5158
    %v5215 = vadd.f32 %v4841, %v5159
    %v5216 = vadd.f32 %v4842, %v5160
    %v5217 = vadd.f32 %v4843, %v5161
    %v5218 = vadd.f32 %v4844, %v5162
    %v5219 = vadd.f32 %v4845, %v5163
    %v5220 = vadd.f32 %v4846, %v5164
    %v5221 = vadd.f32 %v4847, %v5165
    %v5222 = vadd.f32 %v4848, %v5166
    %v5223 = vadd.f32 %v4849, %v5167
    %v5224 = vadd.f32 %v4850, %v5168
    %v5225 = vadd.f32 %v4851, %v5169
    %v5226 = vadd.f32 %v4852, %v5170
    %v5227 = vadd.f32 %v4853, %v5171
    %v5228 = vadd.f32 %v4854, %v5172
    %v5229 = vadd.f32 %v4855, %v5173
    %v5230 = vadd.f32 %v4856, %v5174
    %v5231 = vadd.f32 %v4857, %v5175
    %v5232 = vadd.f32 %v4858, %v5176
    %v5233 = vadd.f32 %v4859, %v5177
    %v5234 = vadd.f32 %v4860, %v5178
    %v5235 = vadd.f32 %v4861, %v5179
    %v5236 = vadd.f32 %v4862, %v5180
    %v5237 = vadd.f32 %v4863, %v5181
    %v5238 = vadd.f32 %v4864, %v5182
    %v5239 = vadd.f32 %v4865, %v5183
    %v5240 = vadd.f32 %v4866, %v5184
    %v5241 = vadd.f32 %v4867, %v5185
    %v5242 = vadd.f32 %v4868, %v5186
    %v5243 = vadd.f32 %v4869, %v5187
    %v5244 = vadd.f32 %v4870, %v5188
    %v5245 = vadd.f32 %v4871, %v5189
    %v5246 = vadd.f32 %v4872, %v5190
    %v5247 = vadd.f32 %v4873, %v5191
    %v5248 = vadd.f32 %v4874, %v5192
    %v5249 = vadd.f32 %v4875, %v5193
    %v5250 = vadd.f32 %v4876, %v5194
    %v5251 = vadd.f32 %v4877, %v5195
    %v5252 = vadd.f32 %v4878, %v5196
    %v5253 = vadd.f32 %v4879, %v5197
    %v5254 = vadd.f32 %v4880, %v5198
    %v5255 = vadd.f32 %v4881, %v5199
    %v5256 = vadd.f32 %v4882, %v5200
    %v5257 = vadd.f32 %v4883, %v5201
    %v5258 = vadd.f32 %v4884, %v5202
    %v5259 = vadd.f32 %v4885, %v5203
    %v5260 = vadd.f32 %v4886, %v5204
    %v5261 = vadd.f32 %v4887, %v5205
    %v5262 = vadd.f32 %v4888, %v5206
    %v5263 = vadd.f32 %v4889, %v5207
    %v5264 = vadd.f32 %v4890, %v5208
    %v5265 = vadd.f32 %v4891, %v5209
    %v5266 = vadd.f32 %v4892, %v5210
    %v5267 = vadd.f32 %v4893, %v5211
    %5268 = vst [vmem:[%s1531] sm:$0xff] %v5212
    %5269 = vst [vmem:[%s1531 + $0x8] sm:$0xff] %v5213
    %5270 = vst [vmem:[%s1531 + $0x10] sm:$0xff] %v5214
    %5271 = vst.msk [vmem:[%s1531 + $0x18] sm:$0xff] %vm1469, %v5215
    %5272 = vst [vmem:[%s1531 + $0x20] sm:$0xff] %v5216
    %5273 = vst [vmem:[%s1531 + $0x28] sm:$0xff] %v5217
    %5274 = vst [vmem:[%s1531 + $0x30] sm:$0xff] %v5218
    %5275 = vst.msk [vmem:[%s1531 + $0x38] sm:$0xff] %vm1469, %v5219
    %5276 = vst [vmem:[%s1531 + $0x40] sm:$0xff] %v5220
    %5277 = vst [vmem:[%s1531 + $0x48] sm:$0xff] %v5221
    %5278 = vst [vmem:[%s1531 + $0x50] sm:$0xff] %v5222
    %5279 = vst.msk [vmem:[%s1531 + $0x58] sm:$0xff] %vm1469, %v5223
    %5280 = vst [vmem:[%s1531 + $0x60] sm:$0xff] %v5224
    %5281 = vst [vmem:[%s1531 + $0x68] sm:$0xff] %v5225
    %5282 = vst [vmem:[%s1531 + $0x70] sm:$0xff] %v5226
    %5283 = vst.msk [vmem:[%s1531 + $0x78] sm:$0xff] %vm1469, %v5227
    %5284 = vst [vmem:[%s1531 + $0x80] sm:$0xff] %v5228
    %5285 = vst [vmem:[%s1531 + $0x88] sm:$0xff] %v5229
    %5286 = vst [vmem:[%s1531 + $0x90] sm:$0xff] %v5230
    %5287 = vst.msk [vmem:[%s1531 + $0x98] sm:$0xff] %vm1469, %v5231
    %5288 = vst [vmem:[%s1531 + $0xa0] sm:$0xff] %v5232
    %5289 = vst [vmem:[%s1531 + $0xa8] sm:$0xff] %v5233
    %5290 = vst [vmem:[%s1531 + $0xb0] sm:$0xff] %v5234
    %5291 = vst.msk [vmem:[%s1531 + $0xb8] sm:$0xff] %vm1469, %v5235
    %5292 = vst [vmem:[%s1531 + $0xc0] sm:$0xff] %v5236
    %5293 = vst [vmem:[%s1531 + $0xc8] sm:$0xff] %v5237
    %5294 = vst [vmem:[%s1531 + $0xd0] sm:$0xff] %v5238
    %5295 = vst.msk [vmem:[%s1531 + $0xd8] sm:$0xff] %vm1469, %v5239
    %5296 = vst [vmem:[%s1531 + $0x100] sm:$0xff] %v5240
    %5297 = vst [vmem:[%s1531 + $0x108] sm:$0xff] %v5241
    %5298 = vst [vmem:[%s1531 + $0x110] sm:$0xff] %v5242
    %5299 = vst.msk [vmem:[%s1531 + $0x118] sm:$0xff] %vm1469, %v5243
    %5300 = vst [vmem:[%s1531 + $0x120] sm:$0xff] %v5244
    %5301 = vst [vmem:[%s1531 + $0x128] sm:$0xff] %v5245
    %5302 = vst [vmem:[%s1531 + $0x130] sm:$0xff] %v5246
    %5303 = vst.msk [vmem:[%s1531 + $0x138] sm:$0xff] %vm1469, %v5247
    %5304 = vst [vmem:[%s1531 + $0x140] sm:$0xff] %v5248
    %5305 = vst [vmem:[%s1531 + $0x148] sm:$0xff] %v5249
    %5306 = vst [vmem:[%s1531 + $0x150] sm:$0xff] %v5250
    %5307 = vst.msk [vmem:[%s1531 + $0x158] sm:$0xff] %vm1469, %v5251
    %5308 = vst [vmem:[%s1531 + $0x160] sm:$0xff] %v5252
    %5309 = vst [vmem:[%s1531 + $0x168] sm:$0xff] %v5253
    %5310 = vst [vmem:[%s1531 + $0x170] sm:$0xff] %v5254
    %5311 = vst.msk [vmem:[%s1531 + $0x178] sm:$0xff] %vm1469, %v5255
    %5312 = vst [vmem:[%s1531 + $0x180] sm:$0xff] %v5256
    %5313 = vst [vmem:[%s1531 + $0x188] sm:$0xff] %v5257
    %5314 = vst [vmem:[%s1531 + $0x190] sm:$0xff] %v5258
    %5315 = vst.msk [vmem:[%s1531 + $0x198] sm:$0xff] %vm1469, %v5259
    %5316 = vst [vmem:[%s1531 + $0x1a0] sm:$0xff] %v5260
    %5317 = vst [vmem:[%s1531 + $0x1a8] sm:$0xff] %v5261
    %5318 = vst [vmem:[%s1531 + $0x1b0] sm:$0xff] %v5262
    %5319 = vst.msk [vmem:[%s1531 + $0x1b8] sm:$0xff] %vm1469, %v5263
    %5320 = vst [vmem:[%s1531 + $0x1c0] sm:$0xff] %v5264
    %5321 = vst [vmem:[%s1531 + $0x1c8] sm:$0xff] %v5265
    %5322 = vst [vmem:[%s1531 + $0x1d0] sm:$0xff] %v5266
    %5323 = vst.msk [vmem:[%s1531 + $0x1d8] sm:$0xff] %vm1469, %v5267
    %v5324 = vld [vmem:[#allocation2] sm:$0xff]
    %v5325 = vld [vmem:[#allocation2 + $0x8] sm:$0xff]
    %v5326 = vld [vmem:[#allocation2 + $0x10] sm:$0xff]
    %v5327 = vld [vmem:[#allocation2 + $0x18] sm:$0xff]
    %v5328 = vld [vmem:[#allocation2 + $0x20] sm:$0xff]
    %v5329 = vld [vmem:[#allocation2 + $0x28] sm:$0xff]
    %v5330 = vld [vmem:[#allocation2 + $0x30] sm:$0xff]
    %v5331 = vld [vmem:[#allocation2 + $0x38] sm:$0xff]
    %v5332 = vld [vmem:[#allocation2 + $0x40] sm:$0xff]
    %v5333 = vld [vmem:[#allocation2 + $0x48] sm:$0xff]
    %v5334 = vld [vmem:[#allocation2 + $0x50] sm:$0xff]
    %v5335 = vld [vmem:[#allocation2 + $0x58] sm:$0xff]
    %v5336 = vld [vmem:[#allocation2 + $0x60] sm:$0xff]
    %v5337 = vld [vmem:[#allocation2 + $0x68] sm:$0xff]
    %v5338 = vld [vmem:[#allocation2 + $0x70] sm:$0xff]
    %v5339 = vld [vmem:[#allocation2 + $0x78] sm:$0xff]
    %v5340 = vld [vmem:[#allocation2 + $0x80] sm:$0xff]
    %v5341 = vld [vmem:[#allocation2 + $0x88] sm:$0xff]
    %v5342 = vld [vmem:[#allocation2 + $0x90] sm:$0xff]
    %v5343 = vld [vmem:[#allocation2 + $0x98] sm:$0xff]
    %v5344 = vld [vmem:[#allocation2 + $0xa0] sm:$0xff]
    %v5345 = vld [vmem:[#allocation2 + $0xa8] sm:$0xff]
    %v5346 = vld [vmem:[#allocation2 + $0xb0] sm:$0xff]
    %v5347 = vld [vmem:[#allocation2 + $0xb8] sm:$0xff]
    %v5348 = vld [vmem:[#allocation2 + $0xc0] sm:$0xff]
    %v5349 = vld [vmem:[#allocation2 + $0xc8] sm:$0xff]
    %v5350 = vld [vmem:[#allocation2 + $0xd0] sm:$0xff]
    %v5351 = vld [vmem:[#allocation2 + $0xd8] sm:$0xff]
    %v5352 = vld [vmem:[#allocation2 + $0x100] sm:$0xff]
    %v5353 = vld [vmem:[#allocation2 + $0x108] sm:$0xff]
    %v5354 = vld [vmem:[#allocation2 + $0x110] sm:$0xff]
    %v5355 = vld [vmem:[#allocation2 + $0x118] sm:$0xff]
    %v5356 = vld [vmem:[#allocation2 + $0x120] sm:$0xff]
    %v5357 = vld [vmem:[#allocation2 + $0x128] sm:$0xff]
    %v5358 = vld [vmem:[#allocation2 + $0x130] sm:$0xff]
    %v5359 = vld [vmem:[#allocation2 + $0x138] sm:$0xff]
    %v5360 = vld [vmem:[#allocation2 + $0x140] sm:$0xff]
    %v5361 = vld [vmem:[#allocation2 + $0x148] sm:$0xff]
    %v5362 = vld [vmem:[#allocation2 + $0x150] sm:$0xff]
    %v5363 = vld [vmem:[#allocation2 + $0x158] sm:$0xff]
    %v5364 = vld [vmem:[#allocation2 + $0x160] sm:$0xff]
    %v5365 = vld [vmem:[#allocation2 + $0x168] sm:$0xff]
    %v5366 = vld [vmem:[#allocation2 + $0x170] sm:$0xff]
    %v5367 = vld [vmem:[#allocation2 + $0x178] sm:$0xff]
    %v5368 = vld [vmem:[#allocation2 + $0x180] sm:$0xff]
    %v5369 = vld [vmem:[#allocation2 + $0x188] sm:$0xff]
    %v5370 = vld [vmem:[#allocation2 + $0x190] sm:$0xff]
    %v5371 = vld [vmem:[#allocation2 + $0x198] sm:$0xff]
    %v5372 = vld [vmem:[#allocation2 + $0x1a0] sm:$0xff]
    %v5373 = vld [vmem:[#allocation2 + $0x1a8] sm:$0xff]
    %v5374 = vld [vmem:[#allocation2 + $0x1b0] sm:$0xff]
    %v5375 = vld [vmem:[#allocation2 + $0x1b8] sm:$0xff]
    %v5376 = vld [vmem:[#allocation2 + $0x1c0] sm:$0xff]
    %v5377 = vld [vmem:[#allocation2 + $0x1c8] sm:$0xff]
    %v5378 = vld [vmem:[#allocation2 + $0x1d0] sm:$0xff]
    %v5379 = vld [vmem:[#allocation2 + $0x1d8] sm:$0xff]
    %v5382 = vperm.slane %v4158, 0
    %v5383 = vperm.slane %v4158, 4
    %v5384 = vperm.slane %v4159, 0
    %v5385 = vperm.slane %v4159, 4
    %v5390 = vperm.slane %v5382, 0
    %v5391 = vperm.slane %v5383, 0
    %v5392 = vperm.slane %v5384, 0
    %v5393 = vperm.slane %v5385, 0
    %v5394 = vmul.f32 %v4228, %v5390
    %v5395 = vmul.f32 %v4229, %v5391
    %v5396 = vmul.f32 %v4230, %v5392
    %v5397 = vmul.f32 %v4231, %v5393
    %v5398 = vmul.f32 %v4232, %v5390
    %v5399 = vmul.f32 %v4233, %v5391
    %v5400 = vmul.f32 %v4234, %v5392
    %v5401 = vmul.f32 %v4235, %v5393
    %v5402 = vmul.f32 %v4236, %v5390
    %v5403 = vmul.f32 %v4237, %v5391
    %v5404 = vmul.f32 %v4238, %v5392
    %v5405 = vmul.f32 %v4239, %v5393
    %v5406 = vmul.f32 %v4240, %v5390
    %v5407 = vmul.f32 %v4241, %v5391
    %v5408 = vmul.f32 %v4242, %v5392
    %v5409 = vmul.f32 %v4243, %v5393
    %v5410 = vmul.f32 %v4244, %v5390
    %v5411 = vmul.f32 %v4245, %v5391
    %v5412 = vmul.f32 %v4246, %v5392
    %v5413 = vmul.f32 %v4247, %v5393
    %v5414 = vmul.f32 %v4248, %v5390
    %v5415 = vmul.f32 %v4249, %v5391
    %v5416 = vmul.f32 %v4250, %v5392
    %v5417 = vmul.f32 %v4251, %v5393
    %v5418 = vmul.f32 %v4252, %v5390
    %v5419 = vmul.f32 %v4253, %v5391
    %v5420 = vmul.f32 %v4254, %v5392
    %v5421 = vmul.f32 %v4255, %v5393
    %v5422 = vmul.f32 %v4260, %v5390
    %v5423 = vmul.f32 %v4261, %v5391
    %v5424 = vmul.f32 %v4262, %v5392
    %v5425 = vmul.f32 %v4263, %v5393
    %v5426 = vmul.f32 %v4264, %v5390
    %v5427 = vmul.f32 %v4265, %v5391
    %v5428 = vmul.f32 %v4266, %v5392
    %v5429 = vmul.f32 %v4267, %v5393
    %v5430 = vmul.f32 %v4268, %v5390
    %v5431 = vmul.f32 %v4269, %v5391
    %v5432 = vmul.f32 %v4270, %v5392
    %v5433 = vmul.f32 %v4271, %v5393
    %v5434 = vmul.f32 %v4272, %v5390
    %v5435 = vmul.f32 %v4273, %v5391
    %v5436 = vmul.f32 %v4274, %v5392
    %v5437 = vmul.f32 %v4275, %v5393
    %v5438 = vmul.f32 %v4276, %v5390
    %v5439 = vmul.f32 %v4277, %v5391
    %v5440 = vmul.f32 %v4278, %v5392
    %v5441 = vmul.f32 %v4279, %v5393
    %v5442 = vmul.f32 %v4280, %v5390
    %v5443 = vmul.f32 %v4281, %v5391
    %v5444 = vmul.f32 %v4282, %v5392
    %v5445 = vmul.f32 %v4283, %v5393
    %v5446 = vmul.f32 %v4284, %v5390
    %v5447 = vmul.f32 %v4285, %v5391
    %v5448 = vmul.f32 %v4286, %v5392
    %v5449 = vmul.f32 %v4287, %v5393
    %v5450 = vperm.slane %v4158, 1
    %v5451 = vperm.slane %v4158, 5
    %v5452 = vperm.slane %v4159, 1
    %v5453 = vperm.slane %v4159, 5
    %v5458 = vperm.slane %v5450, 1
    %v5459 = vperm.slane %v5451, 1
    %v5460 = vperm.slane %v5452, 1
    %v5461 = vperm.slane %v5453, 1
    %v5462 = vmul.f32 %v4094, %v5458
    %v5463 = vmul.f32 %v4095, %v5459
    %v5464 = vmul.f32 %v4096, %v5460
    %v5465 = vmul.f32 %v4097, %v5461
    %v5466 = vmul.f32 %v4098, %v5458
    %v5467 = vmul.f32 %v4099, %v5459
    %v5468 = vmul.f32 %v4100, %v5460
    %v5469 = vmul.f32 %v4101, %v5461
    %v5470 = vmul.f32 %v4102, %v5458
    %v5471 = vmul.f32 %v4103, %v5459
    %v5472 = vmul.f32 %v4104, %v5460
    %v5473 = vmul.f32 %v4105, %v5461
    %v5474 = vmul.f32 %v4106, %v5458
    %v5475 = vmul.f32 %v4107, %v5459
    %v5476 = vmul.f32 %v4108, %v5460
    %v5477 = vmul.f32 %v4109, %v5461
    %v5478 = vmul.f32 %v4110, %v5458
    %v5479 = vmul.f32 %v4111, %v5459
    %v5480 = vmul.f32 %v4112, %v5460
    %v5481 = vmul.f32 %v4113, %v5461
    %v5482 = vmul.f32 %v4114, %v5458
    %v5483 = vmul.f32 %v4115, %v5459
    %v5484 = vmul.f32 %v4116, %v5460
    %v5485 = vmul.f32 %v4117, %v5461
    %v5486 = vmul.f32 %v4118, %v5458
    %v5487 = vmul.f32 %v4119, %v5459
    %v5488 = vmul.f32 %v4120, %v5460
    %v5489 = vmul.f32 %v4121, %v5461
    %v5490 = vmul.f32 %v4126, %v5458
    %v5491 = vmul.f32 %v4127, %v5459
    %v5492 = vmul.f32 %v4128, %v5460
    %v5493 = vmul.f32 %v4129, %v5461
    %v5494 = vmul.f32 %v4130, %v5458
    %v5495 = vmul.f32 %v4131, %v5459
    %v5496 = vmul.f32 %v4132, %v5460
    %v5497 = vmul.f32 %v4133, %v5461
    %v5498 = vmul.f32 %v4134, %v5458
    %v5499 = vmul.f32 %v4135, %v5459
    %v5500 = vmul.f32 %v4136, %v5460
    %v5501 = vmul.f32 %v4137, %v5461
    %v5502 = vmul.f32 %v4138, %v5458
    %v5503 = vmul.f32 %v4139, %v5459
    %v5504 = vmul.f32 %v4140, %v5460
    %v5505 = vmul.f32 %v4141, %v5461
    %v5506 = vmul.f32 %v4142, %v5458
    %v5507 = vmul.f32 %v4143, %v5459
    %v5508 = vmul.f32 %v4144, %v5460
    %v5509 = vmul.f32 %v4145, %v5461
    %v5510 = vmul.f32 %v4146, %v5458
    %v5511 = vmul.f32 %v4147, %v5459
    %v5512 = vmul.f32 %v4148, %v5460
    %v5513 = vmul.f32 %v4149, %v5461
    %v5514 = vmul.f32 %v4150, %v5458
    %v5515 = vmul.f32 %v4151, %v5459
    %v5516 = vmul.f32 %v4152, %v5460
    %v5517 = vmul.f32 %v4153, %v5461
    %v5518 = vadd.f32 %v5394, %v5462
    %v5519 = vadd.f32 %v5395, %v5463
    %v5520 = vadd.f32 %v5396, %v5464
    %v5521 = vadd.f32 %v5397, %v5465
    %v5522 = vadd.f32 %v5398, %v5466
    %v5523 = vadd.f32 %v5399, %v5467
    %v5524 = vadd.f32 %v5400, %v5468
    %v5525 = vadd.f32 %v5401, %v5469
    %v5526 = vadd.f32 %v5402, %v5470
    %v5527 = vadd.f32 %v5403, %v5471
    %v5528 = vadd.f32 %v5404, %v5472
    %v5529 = vadd.f32 %v5405, %v5473
    %v5530 = vadd.f32 %v5406, %v5474
    %v5531 = vadd.f32 %v5407, %v5475
    %v5532 = vadd.f32 %v5408, %v5476
    %v5533 = vadd.f32 %v5409, %v5477
    %v5534 = vadd.f32 %v5410, %v5478
    %v5535 = vadd.f32 %v5411, %v5479
    %v5536 = vadd.f32 %v5412, %v5480
    %v5537 = vadd.f32 %v5413, %v5481
    %v5538 = vadd.f32 %v5414, %v5482
    %v5539 = vadd.f32 %v5415, %v5483
    %v5540 = vadd.f32 %v5416, %v5484
    %v5541 = vadd.f32 %v5417, %v5485
    %v5542 = vadd.f32 %v5418, %v5486
    %v5543 = vadd.f32 %v5419, %v5487
    %v5544 = vadd.f32 %v5420, %v5488
    %v5545 = vadd.f32 %v5421, %v5489
    %v5546 = vadd.f32 %v5422, %v5490
    %v5547 = vadd.f32 %v5423, %v5491
    %v5548 = vadd.f32 %v5424, %v5492
    %v5549 = vadd.f32 %v5425, %v5493
    %v5550 = vadd.f32 %v5426, %v5494
    %v5551 = vadd.f32 %v5427, %v5495
    %v5552 = vadd.f32 %v5428, %v5496
    %v5553 = vadd.f32 %v5429, %v5497
    %v5554 = vadd.f32 %v5430, %v5498
    %v5555 = vadd.f32 %v5431, %v5499
    %v5556 = vadd.f32 %v5432, %v5500
    %v5557 = vadd.f32 %v5433, %v5501
    %v5558 = vadd.f32 %v5434, %v5502
    %v5559 = vadd.f32 %v5435, %v5503
    %v5560 = vadd.f32 %v5436, %v5504
    %v5561 = vadd.f32 %v5437, %v5505
    %v5562 = vadd.f32 %v5438, %v5506
    %v5563 = vadd.f32 %v5439, %v5507
    %v5564 = vadd.f32 %v5440, %v5508
    %v5565 = vadd.f32 %v5441, %v5509
    %v5566 = vadd.f32 %v5442, %v5510
    %v5567 = vadd.f32 %v5443, %v5511
    %v5568 = vadd.f32 %v5444, %v5512
    %v5569 = vadd.f32 %v5445, %v5513
    %v5570 = vadd.f32 %v5446, %v5514
    %v5571 = vadd.f32 %v5447, %v5515
    %v5572 = vadd.f32 %v5448, %v5516
    %v5573 = vadd.f32 %v5449, %v5517
    %v5574 = vperm.slane %v4158, 2
    %v5575 = vperm.slane %v4158, 6
    %v5576 = vperm.slane %v4159, 2
    %v5577 = vperm.slane %v4159, 6
    %v5582 = vperm.slane %v5574, 2
    %v5583 = vperm.slane %v5575, 2
    %v5584 = vperm.slane %v5576, 2
    %v5585 = vperm.slane %v5577, 2
    %v5586 = vmul.f32 %v4356, %v5582
    %v5587 = vmul.f32 %v4357, %v5583
    %v5588 = vmul.f32 %v4358, %v5584
    %v5589 = vmul.f32 %v4359, %v5585
    %v5590 = vmul.f32 %v4360, %v5582
    %v5591 = vmul.f32 %v4361, %v5583
    %v5592 = vmul.f32 %v4362, %v5584
    %v5593 = vmul.f32 %v4363, %v5585
    %v5594 = vmul.f32 %v4364, %v5582
    %v5595 = vmul.f32 %v4365, %v5583
    %v5596 = vmul.f32 %v4366, %v5584
    %v5597 = vmul.f32 %v4367, %v5585
    %v5598 = vmul.f32 %v4368, %v5582
    %v5599 = vmul.f32 %v4369, %v5583
    %v5600 = vmul.f32 %v4370, %v5584
    %v5601 = vmul.f32 %v4371, %v5585
    %v5602 = vmul.f32 %v4372, %v5582
    %v5603 = vmul.f32 %v4373, %v5583
    %v5604 = vmul.f32 %v4374, %v5584
    %v5605 = vmul.f32 %v4375, %v5585
    %v5606 = vmul.f32 %v4376, %v5582
    %v5607 = vmul.f32 %v4377, %v5583
    %v5608 = vmul.f32 %v4378, %v5584
    %v5609 = vmul.f32 %v4379, %v5585
    %v5610 = vmul.f32 %v4380, %v5582
    %v5611 = vmul.f32 %v4381, %v5583
    %v5612 = vmul.f32 %v4382, %v5584
    %v5613 = vmul.f32 %v4383, %v5585
    %v5614 = vmul.f32 %v4388, %v5582
    %v5615 = vmul.f32 %v4389, %v5583
    %v5616 = vmul.f32 %v4390, %v5584
    %v5617 = vmul.f32 %v4391, %v5585
    %v5618 = vmul.f32 %v4392, %v5582
    %v5619 = vmul.f32 %v4393, %v5583
    %v5620 = vmul.f32 %v4394, %v5584
    %v5621 = vmul.f32 %v4395, %v5585
    %v5622 = vmul.f32 %v4396, %v5582
    %v5623 = vmul.f32 %v4397, %v5583
    %v5624 = vmul.f32 %v4398, %v5584
    %v5625 = vmul.f32 %v4399, %v5585
    %v5626 = vmul.f32 %v4400, %v5582
    %v5627 = vmul.f32 %v4401, %v5583
    %v5628 = vmul.f32 %v4402, %v5584
    %v5629 = vmul.f32 %v4403, %v5585
    %v5630 = vmul.f32 %v4404, %v5582
    %v5631 = vmul.f32 %v4405, %v5583
    %v5632 = vmul.f32 %v4406, %v5584
    %v5633 = vmul.f32 %v4407, %v5585
    %v5634 = vmul.f32 %v4408, %v5582
    %v5635 = vmul.f32 %v4409, %v5583
    %v5636 = vmul.f32 %v4410, %v5584
    %v5637 = vmul.f32 %v4411, %v5585
    %v5638 = vmul.f32 %v4412, %v5582
    %v5639 = vmul.f32 %v4413, %v5583
    %v5640 = vmul.f32 %v4414, %v5584
    %v5641 = vmul.f32 %v4415, %v5585
    %v5642 = vadd.f32 %v5518, %v5586
    %v5643 = vadd.f32 %v5519, %v5587
    %v5644 = vadd.f32 %v5520, %v5588
    %v5645 = vadd.f32 %v5521, %v5589
    %v5646 = vadd.f32 %v5522, %v5590
    %v5647 = vadd.f32 %v5523, %v5591
    %v5648 = vadd.f32 %v5524, %v5592
    %v5649 = vadd.f32 %v5525, %v5593
    %v5650 = vadd.f32 %v5526, %v5594
    %v5651 = vadd.f32 %v5527, %v5595
    %v5652 = vadd.f32 %v5528, %v5596
    %v5653 = vadd.f32 %v5529, %v5597
    %v5654 = vadd.f32 %v5530, %v5598
    %v5655 = vadd.f32 %v5531, %v5599
    %v5656 = vadd.f32 %v5532, %v5600
    %v5657 = vadd.f32 %v5533, %v5601
    %v5658 = vadd.f32 %v5534, %v5602
    %v5659 = vadd.f32 %v5535, %v5603
    %v5660 = vadd.f32 %v5536, %v5604
    %v5661 = vadd.f32 %v5537, %v5605
    %v5662 = vadd.f32 %v5538, %v5606
    %v5663 = vadd.f32 %v5539, %v5607
    %v5664 = vadd.f32 %v5540, %v5608
    %v5665 = vadd.f32 %v5541, %v5609
    %v5666 = vadd.f32 %v5542, %v5610
    %v5667 = vadd.f32 %v5543, %v5611
    %v5668 = vadd.f32 %v5544, %v5612
    %v5669 = vadd.f32 %v5545, %v5613
    %v5670 = vadd.f32 %v5546, %v5614
    %v5671 = vadd.f32 %v5547, %v5615
    %v5672 = vadd.f32 %v5548, %v5616
    %v5673 = vadd.f32 %v5549, %v5617
    %v5674 = vadd.f32 %v5550, %v5618
    %v5675 = vadd.f32 %v5551, %v5619
    %v5676 = vadd.f32 %v5552, %v5620
    %v5677 = vadd.f32 %v5553, %v5621
    %v5678 = vadd.f32 %v5554, %v5622
    %v5679 = vadd.f32 %v5555, %v5623
    %v5680 = vadd.f32 %v5556, %v5624
    %v5681 = vadd.f32 %v5557, %v5625
    %v5682 = vadd.f32 %v5558, %v5626
    %v5683 = vadd.f32 %v5559, %v5627
    %v5684 = vadd.f32 %v5560, %v5628
    %v5685 = vadd.f32 %v5561, %v5629
    %v5686 = vadd.f32 %v5562, %v5630
    %v5687 = vadd.f32 %v5563, %v5631
    %v5688 = vadd.f32 %v5564, %v5632
    %v5689 = vadd.f32 %v5565, %v5633
    %v5690 = vadd.f32 %v5566, %v5634
    %v5691 = vadd.f32 %v5567, %v5635
    %v5692 = vadd.f32 %v5568, %v5636
    %v5693 = vadd.f32 %v5569, %v5637
    %v5694 = vadd.f32 %v5570, %v5638
    %v5695 = vadd.f32 %v5571, %v5639
    %v5696 = vadd.f32 %v5572, %v5640
    %v5697 = vadd.f32 %v5573, %v5641
    %v5698 = vadd.f32 %v5324, %v5642
    %v5699 = vadd.f32 %v5325, %v5643
    %v5700 = vadd.f32 %v5326, %v5644
    %v5701 = vadd.f32 %v5327, %v5645
    %v5702 = vadd.f32 %v5328, %v5646
    %v5703 = vadd.f32 %v5329, %v5647
    %v5704 = vadd.f32 %v5330, %v5648
    %v5705 = vadd.f32 %v5331, %v5649
    %v5706 = vadd.f32 %v5332, %v5650
    %v5707 = vadd.f32 %v5333, %v5651
    %v5708 = vadd.f32 %v5334, %v5652
    %v5709 = vadd.f32 %v5335, %v5653
    %v5710 = vadd.f32 %v5336, %v5654
    %v5711 = vadd.f32 %v5337, %v5655
    %v5712 = vadd.f32 %v5338, %v5656
    %v5713 = vadd.f32 %v5339, %v5657
    %v5714 = vadd.f32 %v5340, %v5658
    %v5715 = vadd.f32 %v5341, %v5659
    %v5716 = vadd.f32 %v5342, %v5660
    %v5717 = vadd.f32 %v5343, %v5661
    %v5718 = vadd.f32 %v5344, %v5662
    %v5719 = vadd.f32 %v5345, %v5663
    %v5720 = vadd.f32 %v5346, %v5664
    %v5721 = vadd.f32 %v5347, %v5665
    %v5722 = vadd.f32 %v5348, %v5666
    %v5723 = vadd.f32 %v5349, %v5667
    %v5724 = vadd.f32 %v5350, %v5668
    %v5725 = vadd.f32 %v5351, %v5669
    %v5726 = vadd.f32 %v5352, %v5670
    %v5727 = vadd.f32 %v5353, %v5671
    %v5728 = vadd.f32 %v5354, %v5672
    %v5729 = vadd.f32 %v5355, %v5673
    %v5730 = vadd.f32 %v5356, %v5674
    %v5731 = vadd.f32 %v5357, %v5675
    %v5732 = vadd.f32 %v5358, %v5676
    %v5733 = vadd.f32 %v5359, %v5677
    %v5734 = vadd.f32 %v5360, %v5678
    %v5735 = vadd.f32 %v5361, %v5679
    %v5736 = vadd.f32 %v5362, %v5680
    %v5737 = vadd.f32 %v5363, %v5681
    %v5738 = vadd.f32 %v5364, %v5682
    %v5739 = vadd.f32 %v5365, %v5683
    %v5740 = vadd.f32 %v5366, %v5684
    %v5741 = vadd.f32 %v5367, %v5685
    %v5742 = vadd.f32 %v5368, %v5686
    %v5743 = vadd.f32 %v5369, %v5687
    %v5744 = vadd.f32 %v5370, %v5688
    %v5745 = vadd.f32 %v5371, %v5689
    %v5746 = vadd.f32 %v5372, %v5690
    %v5747 = vadd.f32 %v5373, %v5691
    %v5748 = vadd.f32 %v5374, %v5692
    %v5749 = vadd.f32 %v5375, %v5693
    %v5750 = vadd.f32 %v5376, %v5694
    %v5751 = vadd.f32 %v5377, %v5695
    %v5752 = vadd.f32 %v5378, %v5696
    %v5753 = vadd.f32 %v5379, %v5697
    %5754 = vst [vmem:[#allocation2] sm:$0xff] %v5698
    %5755 = vst [vmem:[#allocation2 + $0x8] sm:$0xff] %v5699
    %5756 = vst [vmem:[#allocation2 + $0x10] sm:$0xff] %v5700
    %5757 = vst.msk [vmem:[#allocation2 + $0x18] sm:$0xff] %vm1469, %v5701
    %5758 = vst [vmem:[#allocation2 + $0x20] sm:$0xff] %v5702
    %5759 = vst [vmem:[#allocation2 + $0x28] sm:$0xff] %v5703
    %5760 = vst [vmem:[#allocation2 + $0x30] sm:$0xff] %v5704
    %5761 = vst.msk [vmem:[#allocation2 + $0x38] sm:$0xff] %vm1469, %v5705
    %5762 = vst [vmem:[#allocation2 + $0x40] sm:$0xff] %v5706
    %5763 = vst [vmem:[#allocation2 + $0x48] sm:$0xff] %v5707
    %5764 = vst [vmem:[#allocation2 + $0x50] sm:$0xff] %v5708
    %5765 = vst.msk [vmem:[#allocation2 + $0x58] sm:$0xff] %vm1469, %v5709
    %5766 = vst [vmem:[#allocation2 + $0x60] sm:$0xff] %v5710
    %5767 = vst [vmem:[#allocation2 + $0x68] sm:$0xff] %v5711
    %5768 = vst [vmem:[#allocation2 + $0x70] sm:$0xff] %v5712
    %5769 = vst.msk [vmem:[#allocation2 + $0x78] sm:$0xff] %vm1469, %v5713
    %5770 = vst [vmem:[#allocation2 + $0x80] sm:$0xff] %v5714
    %5771 = vst [vmem:[#allocation2 + $0x88] sm:$0xff] %v5715
    %5772 = vst [vmem:[#allocation2 + $0x90] sm:$0xff] %v5716
    %5773 = vst.msk [vmem:[#allocation2 + $0x98] sm:$0xff] %vm1469, %v5717
    %5774 = vst [vmem:[#allocation2 + $0xa0] sm:$0xff] %v5718
    %5775 = vst [vmem:[#allocation2 + $0xa8] sm:$0xff] %v5719
    %5776 = vst [vmem:[#allocation2 + $0xb0] sm:$0xff] %v5720
    %5777 = vst.msk [vmem:[#allocation2 + $0xb8] sm:$0xff] %vm1469, %v5721
    %5778 = vst [vmem:[#allocation2 + $0xc0] sm:$0xff] %v5722
    %5779 = vst [vmem:[#allocation2 + $0xc8] sm:$0xff] %v5723
    %5780 = vst [vmem:[#allocation2 + $0xd0] sm:$0xff] %v5724
    %5781 = vst.msk [vmem:[#allocation2 + $0xd8] sm:$0xff] %vm1469, %v5725
    %5782 = vst [vmem:[#allocation2 + $0x100] sm:$0xff] %v5726
    %5783 = vst [vmem:[#allocation2 + $0x108] sm:$0xff] %v5727
    %5784 = vst [vmem:[#allocation2 + $0x110] sm:$0xff] %v5728
    %5785 = vst.msk [vmem:[#allocation2 + $0x118] sm:$0xff] %vm1469, %v5729
    %5786 = vst [vmem:[#allocation2 + $0x120] sm:$0xff] %v5730
    %5787 = vst [vmem:[#allocation2 + $0x128] sm:$0xff] %v5731
    %5788 = vst [vmem:[#allocation2 + $0x130] sm:$0xff] %v5732
    %5789 = vst.msk [vmem:[#allocation2 + $0x138] sm:$0xff] %vm1469, %v5733
    %5790 = vst [vmem:[#allocation2 + $0x140] sm:$0xff] %v5734
    %5791 = vst [vmem:[#allocation2 + $0x148] sm:$0xff] %v5735
    %5792 = vst [vmem:[#allocation2 + $0x150] sm:$0xff] %v5736
    %5793 = vst.msk [vmem:[#allocation2 + $0x158] sm:$0xff] %vm1469, %v5737
    %5794 = vst [vmem:[#allocation2 + $0x160] sm:$0xff] %v5738
    %5795 = vst [vmem:[#allocation2 + $0x168] sm:$0xff] %v5739
    %5796 = vst [vmem:[#allocation2 + $0x170] sm:$0xff] %v5740
    %5797 = vst.msk [vmem:[#allocation2 + $0x178] sm:$0xff] %vm1469, %v5741
    %5798 = vst [vmem:[#allocation2 + $0x180] sm:$0xff] %v5742
    %5799 = vst [vmem:[#allocation2 + $0x188] sm:$0xff] %v5743
    %5800 = vst [vmem:[#allocation2 + $0x190] sm:$0xff] %v5744
    %5801 = vst.msk [vmem:[#allocation2 + $0x198] sm:$0xff] %vm1469, %v5745
    %5802 = vst [vmem:[#allocation2 + $0x1a0] sm:$0xff] %v5746
    %5803 = vst [vmem:[#allocation2 + $0x1a8] sm:$0xff] %v5747
    %5804 = vst [vmem:[#allocation2 + $0x1b0] sm:$0xff] %v5748
    %5805 = vst.msk [vmem:[#allocation2 + $0x1b8] sm:$0xff] %vm1469, %v5749
    %5806 = vst [vmem:[#allocation2 + $0x1c0] sm:$0xff] %v5750
    %5807 = vst [vmem:[#allocation2 + $0x1c8] sm:$0xff] %v5751
    %5808 = vst [vmem:[#allocation2 + $0x1d0] sm:$0xff] %v5752
    %5809 = vst.msk [vmem:[#allocation2 + $0x1d8] sm:$0xff] %vm1469, %v5753
    %v5810 = vld [vmem:[#allocation2] sm:$0xff]
    %v5811 = vld [vmem:[#allocation2 + $0x8] sm:$0xff]
    %v5812 = vld [vmem:[#allocation2 + $0x10] sm:$0xff]
    %v5813 = vld [vmem:[#allocation2 + $0x18] sm:$0xff]
    %v5814 = vld [vmem:[#allocation2 + $0x20] sm:$0xff]
    %v5815 = vld [vmem:[#allocation2 + $0x28] sm:$0xff]
    %v5816 = vld [vmem:[#allocation2 + $0x30] sm:$0xff]
    %v5817 = vld [vmem:[#allocation2 + $0x38] sm:$0xff]
    %v5818 = vld [vmem:[#allocation2 + $0x40] sm:$0xff]
    %v5819 = vld [vmem:[#allocation2 + $0x48] sm:$0xff]
    %v5820 = vld [vmem:[#allocation2 + $0x50] sm:$0xff]
    %v5821 = vld [vmem:[#allocation2 + $0x58] sm:$0xff]
    %v5822 = vld [vmem:[#allocation2 + $0x60] sm:$0xff]
    %v5823 = vld [vmem:[#allocation2 + $0x68] sm:$0xff]
    %v5824 = vld [vmem:[#allocation2 + $0x70] sm:$0xff]
    %v5825 = vld [vmem:[#allocation2 + $0x78] sm:$0xff]
    %v5826 = vld [vmem:[#allocation2 + $0x80] sm:$0xff]
    %v5827 = vld [vmem:[#allocation2 + $0x88] sm:$0xff]
    %v5828 = vld [vmem:[#allocation2 + $0x90] sm:$0xff]
    %v5829 = vld [vmem:[#allocation2 + $0x98] sm:$0xff]
    %v5830 = vld [vmem:[#allocation2 + $0xa0] sm:$0xff]
    %v5831 = vld [vmem:[#allocation2 + $0xa8] sm:$0xff]
    %v5832 = vld [vmem:[#allocation2 + $0xb0] sm:$0xff]
    %v5833 = vld [vmem:[#allocation2 + $0xb8] sm:$0xff]
    %v5834 = vld [vmem:[#allocation2 + $0xc0] sm:$0xff]
    %v5835 = vld [vmem:[#allocation2 + $0xc8] sm:$0xff]
    %v5836 = vld [vmem:[#allocation2 + $0xd0] sm:$0xff]
    %v5837 = vld [vmem:[#allocation2 + $0xd8] sm:$0xff]
    %v5838 = vld [vmem:[#allocation2 + $0xe0] sm:$0xff]
    %v5839 = vld [vmem:[#allocation2 + $0xe8] sm:$0xff]
    %v5840 = vld [vmem:[#allocation2 + $0xf0] sm:$0xff]
    %v5841 = vld [vmem:[#allocation2 + $0xf8] sm:$0xff]
    %v5842 = vld [vmem:[#allocation2 + $0x100] sm:$0xff]
    %v5843 = vld [vmem:[#allocation2 + $0x108] sm:$0xff]
    %v5844 = vld [vmem:[#allocation2 + $0x110] sm:$0xff]
    %v5845 = vld [vmem:[#allocation2 + $0x118] sm:$0xff]
    %v5846 = vld [vmem:[#allocation2 + $0x120] sm:$0xff]
    %v5847 = vld [vmem:[#allocation2 + $0x128] sm:$0xff]
    %v5848 = vld [vmem:[#allocation2 + $0x130] sm:$0xff]
    %v5849 = vld [vmem:[#allocation2 + $0x138] sm:$0xff]
    %v5850 = vld [vmem:[#allocation2 + $0x140] sm:$0xff]
    %v5851 = vld [vmem:[#allocation2 + $0x148] sm:$0xff]
    %v5852 = vld [vmem:[#allocation2 + $0x150] sm:$0xff]
    %v5853 = vld [vmem:[#allocation2 + $0x158] sm:$0xff]
    %v5854 = vld [vmem:[#allocation2 + $0x160] sm:$0xff]
    %v5855 = vld [vmem:[#allocation2 + $0x168] sm:$0xff]
    %v5856 = vld [vmem:[#allocation2 + $0x170] sm:$0xff]
    %v5857 = vld [vmem:[#allocation2 + $0x178] sm:$0xff]
    %v5858 = vld [vmem:[#allocation2 + $0x180] sm:$0xff]
    %v5859 = vld [vmem:[#allocation2 + $0x188] sm:$0xff]
    %v5860 = vld [vmem:[#allocation2 + $0x190] sm:$0xff]
    %v5861 = vld [vmem:[#allocation2 + $0x198] sm:$0xff]
    %v5862 = vld [vmem:[#allocation2 + $0x1a0] sm:$0xff]
    %v5863 = vld [vmem:[#allocation2 + $0x1a8] sm:$0xff]
    %v5864 = vld [vmem:[#allocation2 + $0x1b0] sm:$0xff]
    %v5865 = vld [vmem:[#allocation2 + $0x1b8] sm:$0xff]
    %v5866 = vld [vmem:[#allocation2 + $0x1c0] sm:$0xff]
    %v5867 = vld [vmem:[#allocation2 + $0x1c8] sm:$0xff]
    %v5868 = vld [vmem:[#allocation2 + $0x1d0] sm:$0xff]
    %v5869 = vld [vmem:[#allocation2 + $0x1d8] sm:$0xff]
    %v5870 = vld [vmem:[#allocation2 + $0x1e0] sm:$0xff]
    %v5871 = vld [vmem:[#allocation2 + $0x1e8] sm:$0xff]
    %v5872 = vld [vmem:[#allocation2 + $0x1f0] sm:$0xff]
    %v5873 = vld [vmem:[#allocation2 + $0x1f8] sm:$0xff]
    %v5874 = vld [vmem:[%s4] sm:$0xf]
    %v5876 = vperm.slane %v5874, 0
    %v5877 = vperm.slane %v5874, 1
    %v5878 = vperm.slane %v5874, 2
    %v5879 = vperm.slane %v5874, 3
    %v5884 = vmul.f32 %v5810, %v5876
    %v5885 = vmul.f32 %v5811, %v5877
    %v5886 = vmul.f32 %v5812, %v5878
    %v5887 = vmul.f32 %v5813, %v5879
    %v5888 = vmul.f32 %v5814, %v5876
    %v5889 = vmul.f32 %v5815, %v5877
    %v5890 = vmul.f32 %v5816, %v5878
    %v5891 = vmul.f32 %v5817, %v5879
    %v5892 = vmul.f32 %v5818, %v5876
    %v5893 = vmul.f32 %v5819, %v5877
    %v5894 = vmul.f32 %v5820, %v5878
    %v5895 = vmul.f32 %v5821, %v5879
    %v5896 = vmul.f32 %v5822, %v5876
    %v5897 = vmul.f32 %v5823, %v5877
    %v5898 = vmul.f32 %v5824, %v5878
    %v5899 = vmul.f32 %v5825, %v5879
    %v5900 = vmul.f32 %v5826, %v5876
    %v5901 = vmul.f32 %v5827, %v5877
    %v5902 = vmul.f32 %v5828, %v5878
    %v5903 = vmul.f32 %v5829, %v5879
    %v5904 = vmul.f32 %v5830, %v5876
    %v5905 = vmul.f32 %v5831, %v5877
    %v5906 = vmul.f32 %v5832, %v5878
    %v5907 = vmul.f32 %v5833, %v5879
    %v5908 = vmul.f32 %v5834, %v5876
    %v5909 = vmul.f32 %v5835, %v5877
    %v5910 = vmul.f32 %v5836, %v5878
    %v5911 = vmul.f32 %v5837, %v5879
    %v5912 = vmul.f32 %v5838, %v5876
    %v5913 = vmul.f32 %v5839, %v5877
    %v5914 = vmul.f32 %v5840, %v5878
    %v5915 = vmul.f32 %v5841, %v5879
    %v5916 = vmul.f32 %v5842, %v5876
    %v5917 = vmul.f32 %v5843, %v5877
    %v5918 = vmul.f32 %v5844, %v5878
    %v5919 = vmul.f32 %v5845, %v5879
    %v5920 = vmul.f32 %v5846, %v5876
    %v5921 = vmul.f32 %v5847, %v5877
    %v5922 = vmul.f32 %v5848, %v5878
    %v5923 = vmul.f32 %v5849, %v5879
    %v5924 = vmul.f32 %v5850, %v5876
    %v5925 = vmul.f32 %v5851, %v5877
    %v5926 = vmul.f32 %v5852, %v5878
    %v5927 = vmul.f32 %v5853, %v5879
    %v5928 = vmul.f32 %v5854, %v5876
    %v5929 = vmul.f32 %v5855, %v5877
    %v5930 = vmul.f32 %v5856, %v5878
    %v5931 = vmul.f32 %v5857, %v5879
    %v5932 = vmul.f32 %v5858, %v5876
    %v5933 = vmul.f32 %v5859, %v5877
    %v5934 = vmul.f32 %v5860, %v5878
    %v5935 = vmul.f32 %v5861, %v5879
    %v5936 = vmul.f32 %v5862, %v5876
    %v5937 = vmul.f32 %v5863, %v5877
    %v5938 = vmul.f32 %v5864, %v5878
    %v5939 = vmul.f32 %v5865, %v5879
    %v5940 = vmul.f32 %v5866, %v5876
    %v5941 = vmul.f32 %v5867, %v5877
    %v5942 = vmul.f32 %v5868, %v5878
    %v5943 = vmul.f32 %v5869, %v5879
    %v5944 = vmul.f32 %v5870, %v5876
    %v5945 = vmul.f32 %v5871, %v5877
    %v5946 = vmul.f32 %v5872, %v5878
    %v5947 = vmul.f32 %v5873, %v5879
    %v5948 = vadd.f32 %v5884, %v5885
    %v5949 = vadd.f32 %v5948, %v5886
    %v5950 = vsel %vm1469, %v5887, 0.0
    %v5951 = vadd.f32 %v5949, %v5950
    %5952 = vadd.xlane.f32.xlu0 %v5951
    %v5953 = vpop.xlane.xlu0 %5952
    %v5954 = vadd.f32 %v5888, %v5889
    %v5955 = vadd.f32 %v5954, %v5890
    %v5956 = vsel %vm1469, %v5891, 0.0
    %v5957 = vadd.f32 %v5955, %v5956
    %5958 = vadd.xlane.f32.xlu0 %v5957
    %v5959 = vpop.xlane.xlu0 %5958
    %v5960 = vadd.f32 %v5892, %v5893
    %v5961 = vadd.f32 %v5960, %v5894
    %v5962 = vsel %vm1469, %v5895, 0.0
    %v5963 = vadd.f32 %v5961, %v5962
    %5964 = vadd.xlane.f32.xlu0 %v5963
    %v5965 = vpop.xlane.xlu0 %5964
    %v5966 = vadd.f32 %v5896, %v5897
    %v5967 = vadd.f32 %v5966, %v5898
    %v5968 = vsel %vm1469, %v5899, 0.0
    %v5969 = vadd.f32 %v5967, %v5968
    %5970 = vadd.xlane.f32.xlu0 %v5969
    %v5971 = vpop.xlane.xlu0 %5970
    %v5972 = vadd.f32 %v5900, %v5901
    %v5973 = vadd.f32 %v5972, %v5902
    %v5974 = vsel %vm1469, %v5903, 0.0
    %v5975 = vadd.f32 %v5973, %v5974
    %5976 = vadd.xlane.f32.xlu0 %v5975
    %v5977 = vpop.xlane.xlu0 %5976
    %v5978 = vadd.f32 %v5904, %v5905
    %v5979 = vadd.f32 %v5978, %v5906
    %v5980 = vsel %vm1469, %v5907, 0.0
    %v5981 = vadd.f32 %v5979, %v5980
    %5982 = vadd.xlane.f32.xlu0 %v5981
    %v5983 = vpop.xlane.xlu0 %5982
    %v5984 = vadd.f32 %v5908, %v5909
    %v5985 = vadd.f32 %v5984, %v5910
    %v5986 = vsel %vm1469, %v5911, 0.0
    %v5987 = vadd.f32 %v5985, %v5986
    %5988 = vadd.xlane.f32.xlu0 %v5987
    %v5989 = vpop.xlane.xlu0 %5988
    %v5990 = vadd.f32 %v5912, %v5913
    %v5991 = vadd.f32 %v5990, %v5914
    %v5992 = vsel %vm1469, %v5915, 0.0
    %v5993 = vadd.f32 %v5991, %v5992
    %5994 = vadd.xlane.f32.xlu0 %v5993
    %v5995 = vpop.xlane.xlu0 %5994
    %v5996 = vadd.f32 %v5916, %v5917
    %v5997 = vadd.f32 %v5996, %v5918
    %v5998 = vsel %vm1469, %v5919, 0.0
    %v5999 = vadd.f32 %v5997, %v5998
    %6000 = vadd.xlane.f32.xlu0 %v5999
    %v6001 = vpop.xlane.xlu0 %6000
    %v6002 = vadd.f32 %v5920, %v5921
    %v6003 = vadd.f32 %v6002, %v5922
    %v6004 = vsel %vm1469, %v5923, 0.0
    %v6005 = vadd.f32 %v6003, %v6004
    %6006 = vadd.xlane.f32.xlu0 %v6005
    %v6007 = vpop.xlane.xlu0 %6006
    %v6008 = vadd.f32 %v5924, %v5925
    %v6009 = vadd.f32 %v6008, %v5926
    %v6010 = vsel %vm1469, %v5927, 0.0
    %v6011 = vadd.f32 %v6009, %v6010
    %6012 = vadd.xlane.f32.xlu0 %v6011
    %v6013 = vpop.xlane.xlu0 %6012
    %v6014 = vadd.f32 %v5928, %v5929
    %v6015 = vadd.f32 %v6014, %v5930
    %v6016 = vsel %vm1469, %v5931, 0.0
    %v6017 = vadd.f32 %v6015, %v6016
    %6018 = vadd.xlane.f32.xlu0 %v6017
    %v6019 = vpop.xlane.xlu0 %6018
    %v6020 = vadd.f32 %v5932, %v5933
    %v6021 = vadd.f32 %v6020, %v5934
    %v6022 = vsel %vm1469, %v5935, 0.0
    %v6023 = vadd.f32 %v6021, %v6022
    %6024 = vadd.xlane.f32.xlu0 %v6023
    %v6025 = vpop.xlane.xlu0 %6024
    %v6026 = vadd.f32 %v5936, %v5937
    %v6027 = vadd.f32 %v6026, %v5938
    %v6028 = vsel %vm1469, %v5939, 0.0
    %v6029 = vadd.f32 %v6027, %v6028
    %6030 = vadd.xlane.f32.xlu0 %v6029
    %v6031 = vpop.xlane.xlu0 %6030
    %v6032 = vadd.f32 %v5940, %v5941
    %v6033 = vadd.f32 %v6032, %v5942
    %v6034 = vsel %vm1469, %v5943, 0.0
    %v6035 = vadd.f32 %v6033, %v6034
    %6036 = vadd.xlane.f32.xlu0 %v6035
    %v6037 = vpop.xlane.xlu0 %6036
    %v6038 = vadd.f32 %v5944, %v5945
    %v6039 = vadd.f32 %v6038, %v5946
    %v6040 = vsel %vm1469, %v5947, 0.0
    %v6041 = vadd.f32 %v6039, %v6040
    %6042 = vadd.xlane.f32.xlu0 %v6041
    %v6043 = vpop.xlane.xlu0 %6042
    %s6044 = sld [smem:[#allocation3]]
    %v6045 = vstv %s6044
    %v6046 = vadd.f32 %v5953, %v6045
    %v6047 = vadd.f32 %v5959, %v6045
    %v6048 = vadd.f32 %v5965, %v6045
    %v6049 = vadd.f32 %v5971, %v6045
    %v6050 = vadd.f32 %v5977, %v6045
    %v6051 = vadd.f32 %v5983, %v6045
    %v6052 = vadd.f32 %v5989, %v6045
    %v6053 = vadd.f32 %v5995, %v6045
    %v6054 = vadd.f32 %v6001, %v6045
    %v6055 = vadd.f32 %v6007, %v6045
    %v6056 = vadd.f32 %v6013, %v6045
    %v6057 = vadd.f32 %v6019, %v6045
    %v6058 = vadd.f32 %v6025, %v6045
    %v6059 = vadd.f32 %v6031, %v6045
    %v6060 = vadd.f32 %v6037, %v6045
    %v6061 = vadd.f32 %v6043, %v6045
    %v6078 = vlaneseq
    %v6079 = vand.u32 %v6078, 127
    %v6080 = vperm.slane %v6046, %v6079
    %v6081 = vadd.s32 %v6079, 4294967288
    %v6082 = vperm.slane %v6047, %v6081
    %vm6083 = vcmask 130112
    %v6084 = vsel %vm6083, %v6082, %v6080
    %v6085 = vadd.s32 %v6079, 4294967280
    %v6086 = vperm.slane %v6048, %v6085
    %vm6087 = vcmask 195712
    %v6088 = vsel %vm6087, %v6086, %v6084
    %v6089 = vadd.s32 %v6079, 4294967272
    %v6090 = vperm.slane %v6049, %v6089
    %vm6091 = vcmask 261312
    %v6092 = vsel %vm6091, %v6090, %v6088
    %v6093 = vadd.s32 %v6079, 4294967264
    %v6094 = vperm.slane %v6050, %v6093
    %vm6095 = vcmask 326912
    %v6096 = vsel %vm6095, %v6094, %v6092
    %v6097 = vadd.s32 %v6079, 4294967256
    %v6098 = vperm.slane %v6051, %v6097
    %vm6099 = vcmask 392512
    %v6100 = vsel %vm6099, %v6098, %v6096
    %v6101 = vadd.s32 %v6079, 4294967248
    %v6102 = vperm.slane %v6052, %v6101
    %vm6103 = vcmask 458112
    %v6104 = vsel %vm6103, %v6102, %v6100
    %v6105 = vadd.s32 %v6079, 4294967240
    %v6106 = vperm.slane %v6053, %v6105
    %vm6107 = vcmask 523712
    %v6108 = vsel %vm6107, %v6106, %v6104
    %v6109 = vperm.slane %v6054, %v6079
    %v6110 = vperm.slane %v6055, %v6081
    %v6111 = vsel %vm6083, %v6110, %v6109
    %v6112 = vperm.slane %v6056, %v6085
    %v6113 = vsel %vm6087, %v6112, %v6111
    %v6114 = vperm.slane %v6057, %v6089
    %v6115 = vsel %vm6091, %v6114, %v6113
    %v6116 = vperm.slane %v6058, %v6093
    %v6117 = vsel %vm6095, %v6116, %v6115
    %v6118 = vperm.slane %v6059, %v6097
    %v6119 = vsel %vm6099, %v6118, %v6117
    %v6120 = vperm.slane %v6060, %v6101
    %v6121 = vsel %vm6103, %v6120, %v6119
    %v6122 = vperm.slane %v6061, %v6105
    %v6123 = vsel %vm6107, %v6122, %v6121
    %vm6126 = vcmask 516096
    %6127 = vst.msk [vmem:[%s7] sm:$0x1] %vm6126, %v6108
    %6128 = vst.msk [vmem:[%s7 + $0x1] sm:$0x1] %vm6126, %v6123
    // Predicated region
    $region50: #{detector_forward.2} parent=1 // pred_check
      _
    $region51: #{detector_forward.2} parent=1 // pred_check_branch
      %6130 = sbr.rel (0) target = $region53
    $region52: #{detector_forward.2} parent=1 // pred_region
      _
    $region53: #{detector_forward.2} parent=1 // pred_fallthru
      _
    // Predicated region
    $region54: #{detector_forward.2} parent=1 // pred_check
      _
    $region55: #{detector_forward.2} parent=1 // pred_check_branch
      %6132 = sbr.rel (0) target = $region57
    $region56: #{detector_forward.2} parent=1 // pred_region
      _
    $region57: #{detector_forward.2} parent=1 // pred_fallthru
      _
    %6133 = vsyncpa [#allocation5], 1
    %6134 = vsyncpa [#allocation7], 1
    %6135 = vsyncpa [#allocation10], 1

</llo_original>
